<compile_context>
chip_gen: v5e
topology: v5e:2x2
jax: 0.10.0
libtpu: 0.0.40
codegen_flags: <defaults>
</compile_context>

<pallas_src>
import math

import jax
import jax.numpy as jnp
from jax import lax
from jax.experimental import pallas as pl
from jax.experimental.pallas import tpu as pltpu

D_MODEL = 32
NHEAD = 4
HEAD_DIM = D_MODEL // NHEAD
POS_C = 128                      # positional-encoding channels (d_value = d_model + 128)
LN_EPS = 1e-6                    # layernorm2d adds eps to the std (not the variance)
SM_SCALE = 1.0 / math.sqrt(HEAD_DIM)


def _layernorm2d(x, g, b):
    """layernorm2d on a channel-first [C, L] tile: per-pixel stats over channels,
    torch.std's unbiased (N-1) estimator, eps added to the std.
    Uses a [1, L] reciprocal-multiply instead of a [C, L] divide."""
    c = x.shape[0]
    mu = jnp.mean(x, axis=0, keepdims=True)
    xc = x - mu
    std = jnp.sqrt(jnp.sum(xc * xc, axis=0, keepdims=True) * (1.0 / (c - 1)))
    inv = 1.0 / (std + LN_EPS)                      # [1, L] reciprocal
    return g * (xc * inv) + b


def encoder_layer_kernel(x0_ref, x1_ref, pos1_ref,
                         wkv_ref, wvp_ref, wqa_ref, wm_ref,
                         g1_ref, b1_ref, w1b_ref, w2_ref, g2_ref, b2_ref,
                         o_ref,
                         k_scr, v_scr):
    f32 = jnp.float32
    bf16 = jnp.bfloat16
    C = D_MODEL

    # K / V depend only on the source image: compute them once per batch element
    # (first L tile) and keep them resident in bf16 VMEM scratch for the other
    # tiles.  INVARIANT: the L axis is the minor grid axis ("arbitrary"), so for
    # every batch element l == 0 runs before its other L tiles on each core.
    @pl.when(pl.program_id(1) == 0)
    def _():
        x1 = x1_ref[0]                                   # bf16 [C, S]
        pos1 = pos1_ref[0]                               # bf16 [POS_C, S]
        # fused [wk; wv_x1half] projection -> one [2C, C] @ [C, S] matmul
        kv = jnp.dot(wkv_ref[...], x1, preferred_element_type=f32)   # [2C, S] f32
        k_scr[...] = kv[:C, :].astype(bf16)
        # v_proj acts on cat([x1, pos1]); weight pre-split in the wrapper.
        v_scr[...] = (kv[C:, :]
                      + jnp.dot(wvp_ref[...], pos1, preferred_element_type=f32)
                      ).astype(bf16)

    x0 = x0_ref[0]                                       # bf16 [C, Lt] channel-first
    k = k_scr[...]                                       # bf16 [C, S]
    v = v_scr[...]                                       # bf16 [C, S]
    S = k.shape[1]

    # Fused per-tile projection: rows [0:C] are q (softmax scale already folded
    # into the weight in the wrapper), rows [C:3C] are merge_f conv1's x0 half.
    pj = jnp.dot(wqa_ref[...], x0, preferred_element_type=f32)        # [3C, Lt] f32
    qt = jnp.transpose(pj[:C, :]).astype(bf16)                        # [Lt, C] bf16
    h_a = pj[C:, :]                                                   # [2C, Lt] f32

    # Multi-head softmax attention (FullAttention, temp=1) with deferred
    # normalisation.  Heads are 8-row sublane slices of channel-first K/V;
    # per-head outputs stack along sublanes.
    # TODO(synk): optional x_mask / source_mask (None in this setup) not implemented.
    ones_s = jnp.ones((1, S), bf16)
    msgs = []
    for h in range(NHEAD):
        sl = slice(h * HEAD_DIM, (h + 1) * HEAD_DIM)
        s = jnp.dot(qt[:, sl], k[sl, :], preferred_element_type=f32)  # [Lt, S]
        s = s - jnp.max(s, axis=-1, keepdims=True)
        p = jnp.exp(s).astype(bf16)                                   # [Lt, S] bf16
        # unnormalised PV product, lane-oriented: num[d, l] = sum_s v[d,s] p[l,s]
        # (if Mosaic ever materialises a transpose here, store V transposed in
        #  scratch instead and use a plain [Lt,S]@[S,8] matmul)
        num = lax.dot_general(v[sl, :], p, (((1,), (1,)), ((), ())),
                              preferred_element_type=f32)             # [8, Lt]
        # row-sums, also lane-oriented, via a tiny [1,S] matmul (no transpose)
        den = lax.dot_general(ones_s, p, (((1,), (1,)), ((), ())),
                              preferred_element_type=f32)             # [1, Lt]
        msgs.append(num * (1.0 / den))                                # [8, Lt]
    message = jnp.concatenate(msgs, axis=0)                           # [C, Lt] f32

    # merge_head + norm1 (channel-dim layernorm)
    merged = jnp.dot(wm_ref[...], message.astype(bf16), preferred_element_type=f32)
    n1 = _layernorm2d(merged, g1_ref[...], b1_ref[...])

    # merge_f on cat([x0, norm1(msg)]): the x0 half (h_a) was computed in the
    # fused projection above; only the message half remains.
    hmid = jnp.maximum(
        h_a + jnp.dot(w1b_ref[...], n1.astype(bf16), preferred_element_type=f32),
        0.0)                                                          # [2C, Lt]
    m2 = jnp.dot(w2_ref[...], hmid.astype(bf16), preferred_element_type=f32)
    n2 = _layernorm2d(m2, g2_ref[...], b2_ref[...])

    # Residual.  Output stays channel-first so the last (lane) dim is the L tile
    # (multiple of 128) -> unmasked, lane-dense stores.
    o_ref[0] = (x0.astype(f32) + n2).astype(o_ref.dtype)


def encoder_layer(x0, x1, pos0, pos1, params, *, l_tile=256):
    """x0: [N, C, H, W], x1: [N, C, H', W'], pos0/pos1: [N, 128, ...] f32.
    Returns [N, C, H, W] f32."""
    del pos0  # x0_pos is computed but never used in the reference forward
    N, C, H, W = x0.shape
    assert C == D_MODEL
    L = H * W
    S = x1.shape[2] * x1.shape[3]
    assert L % l_tile == 0 and l_tile % 128 == 0
    assert S % 128 == 0

    cdt = jnp.bfloat16  # HBM-side dtype for activations / weights; f32 accumulation in-kernel.
    x0_cf = x0.reshape(N, C, L).astype(cdt)          # channel-first, pure reshape
    x1_cf = x1.reshape(N, C, S).astype(cdt)
    pos1_cf = pos1.reshape(N, POS_C, S).astype(cdt)

    # Fused / split weights (all bf16):
    wkv = jnp.concatenate([params["wk"], params["wv"][:, :C]], axis=0).astype(cdt)   # [2C, C]
    wvp = params["wv"][:, C:].astype(cdt)                                            # [C, POS_C]
    wqa = jnp.concatenate([params["wq"] * SM_SCALE,                                  # scale folded in
                           params["w_mf1"][:, :C]], axis=0).astype(cdt)              # [3C, C]
    w1b = params["w_mf1"][:, C:].astype(cdt)                                         # [2C, C]
    wm = params["wm"].astype(cdt)                                                    # [C, C]
    w2 = params["w_mf2"].astype(cdt)                                                 # [C, 2C]
    g1 = params["g1"].reshape(C, 1).astype(jnp.float32)   # norm params stay f32 (tiny)
    b1 = params["b1"].reshape(C, 1).astype(jnp.float32)
    g2 = params["g2"].reshape(C, 1).astype(jnp.float32)
    b2 = params["b2"].reshape(C, 1).astype(jnp.float32)

    grid = (N, L // l_tile)   # L axis MUST stay minor: K/V scratch is filled at l == 0

    def pix(shape):        # per-batch, per-L-tile block
        return pl.BlockSpec(shape, lambda n, l: (n, 0, l))

    def per_batch(shape):  # per-batch block, resident across all L tiles (no re-DMA)
        # (on v7x one could add pipeline_mode=pl.Buffered(1) to save VMEM headroom)
        return pl.BlockSpec(shape, lambda n, l: (n, 0, 0))

    def const(shape):      # weights: same block for every grid step
        return pl.BlockSpec(shape, lambda n, l: (0, 0))

    out = pl.pallas_call(
        encoder_layer_kernel,
        grid=grid,
        in_specs=[
            pix((1, C, l_tile)),            # x0 tile
            per_batch((1, C, S)),           # x1
            per_batch((1, POS_C, S)),       # pos1
            const((2 * C, C)),              # [wk; wv x1-half]
            const((C, POS_C)),              # wv pos-half
            const((3 * C, C)),              # [wq*scale; merge_f conv1 x0-half]
            const((C, C)),                  # merge_head
            const((C, 1)), const((C, 1)),   # norm1 affine / bias
            const((2 * C, C)),              # merge_f conv1, message half
            const((C, 2 * C)),              # merge_f conv2
            const((C, 1)), const((C, 1)),   # norm2 affine / bias
        ],
        out_specs=pix((1, C, l_tile)),
        out_shape=jax.ShapeDtypeStruct((N, C, L), jnp.float32),
        scratch_shapes=[pltpu.VMEM((C, S), jnp.bfloat16),    # keys   (per-batch resident)
                        pltpu.VMEM((C, S), jnp.bfloat16)],   # values (per-batch resident)
        compiler_params=pltpu.CompilerParams(
            # batch is independent -> "parallel" (2 TensorCores on v7x); the L axis
            # stays "arbitrary" because the K/V scratch carries across its steps.
            dimension_semantics=("parallel", "arbitrary"),
            vmem_limit_bytes=64 * 1024 * 1024),
    )(x0_cf, x1_cf, pos1_cf, wkv, wvp, wqa, wm,
      g1, b1, w1b, w2, g2, b2)

    return out.reshape(N, C, H, W)


def init_params(key):
    C = D_MODEL
    ks = jax.random.split(key, 10)
    w = lambda k, shape, s=0.1: s * jax.random.normal(k, shape, jnp.float32)
    return dict(
        wq=w(ks[0], (C, C)),
        wk=w(ks[1], (C, C)),
        wv=w(ks[2], (C, C + POS_C)),
        wm=w(ks[3], (C, C)),
        w_mf1=w(ks[4], (2 * C, 2 * C)),
        w_mf2=w(ks[5], (C, 2 * C)),
        # layernorm2d affine/bias init to ones/zeros in the module; perturbed here
        # so the affine path is actually exercised by the check.
        g1=1.0 + w(ks[6], (C,)),
        b1=w(ks[7], (C,)),
        g2=1.0 + w(ks[8], (C,)),
        b2=w(ks[9], (C,)),
    )


def reference(x0, x1, pos0, pos1, p):
    """Pure-JAX (f32) mirror of the PyTorch EncoderLayer.forward."""
    del pos0
    N, C, H, W = x0.shape
    L = H * W
    S = x1.shape[2] * x1.shape[3]
    x0f = x0.reshape(N, C, L)
    x1f = x1.reshape(N, C, S)
    x1p = jnp.concatenate([x1f, pos1.reshape(N, POS_C, S)], axis=1)

    q = jnp.einsum('oc,ncl->nol', p["wq"], x0f)
    k = jnp.einsum('oc,ncl->nol', p["wk"], x1f)
    v = jnp.einsum('oc,ncl->nol', p["wv"], x1p)

    qh = q.reshape(N, NHEAD, HEAD_DIM, L)
    kh = k.reshape(N, NHEAD, HEAD_DIM, S)
    vh = v.reshape(N, NHEAD, HEAD_DIM, S)
    att = jax.nn.softmax(jnp.einsum('nhdl,nhds->nhls', qh, kh) * SM_SCALE, axis=-1)
    msg = jnp.einsum('nhls,nhds->nhdl', att, vh).reshape(N, C, L)
    msg = jnp.einsum('oc,ncl->nol', p["wm"], msg)

    def ln2d(x, g, b):
        mu = x.mean(axis=1, keepdims=True)
        std = jnp.sqrt(((x - mu) ** 2).sum(axis=1, keepdims=True) / (C - 1))
        return g[None, :, None] * (x - mu) / (std + LN_EPS) + b[None, :, None]

    n1 = ln2d(msg, p["g1"], p["b1"])
    cat = jnp.concatenate([x0f, n1], axis=1)
    hmid = jnp.maximum(jnp.einsum('oc,ncl->nol', p["w_mf1"], cat), 0.0)
    n2 = ln2d(jnp.einsum('oc,ncl->nol', p["w_mf2"], hmid), p["g2"], p["b2"])
    return (x0f + n2).reshape(N, C, H, W)


if __name__ == "__main__":
    key = jax.random.PRNGKey(0)
    k0, k1, k2, k3, kp = jax.random.split(key, 5)
    N = 2
    H0, W0 = 16, 32                           # L = 512 -> two 256-wide L tiles
    H1, W1 = 16, 16                           # S = 256 (source length != target length)
    x0 = jax.random.normal(k0, (N, D_MODEL, H0, W0), jnp.float32)
    x1 = jax.random.normal(k1, (N, D_MODEL, H1, W1), jnp.float32)
    pos0 = jax.random.normal(k2, (N, POS_C, H0, W0), jnp.float32)
    pos1 = jax.random.normal(k3, (N, POS_C, H1, W1), jnp.float32)
    params = init_params(kp)

    out = encoder_layer(x0, x1, pos0, pos1, params, l_tile=256)
    out = jax.block_until_ready(out)

    # The kernel stores activations/weights in HBM as bf16 and now also feeds
    # bf16 operands to every MXU matmul (f32 accumulation).  Compare against the
    # pure-f32 reference evaluated on the same bf16-rounded inputs, with a
    # tolerance appropriate for bf16 tensor-core math amplified by two layernorms.
    q16 = lambda a: a.astype(jnp.bfloat16).astype(jnp.float32)
    pq = {kk: (q16(vv) if vv.ndim >= 2 else vv) for kk, vv in params.items()}
    ref = reference(q16(x0), q16(x1), pos0, q16(pos1), pq)

    assert out.shape == (N, D_MODEL, H0, W0)
    max_err = float(jnp.max(jnp.abs(out - ref)))
    assert jnp.allclose(out, ref, rtol=1e-2, atol=5e-2), max_err
    print("KERNEL_OK")
</pallas_src>

<mosaic_0001>
module attributes {stable_mosaic.version = 11 : i64} {
  func.func @encoder_layer_kernel(%arg0: i32, %arg1: i32, %arg2: memref<1x32x256xbf16, #tpu.memory_space<vmem>>, %arg3: memref<1x32x256xbf16, #tpu.memory_space<vmem>>, %arg4: memref<1x128x256xbf16, #tpu.memory_space<vmem>>, %arg5: memref<64x32xbf16, #tpu.memory_space<vmem>>, %arg6: memref<32x128xbf16, #tpu.memory_space<vmem>>, %arg7: memref<96x32xbf16, #tpu.memory_space<vmem>>, %arg8: memref<32x32xbf16, #tpu.memory_space<vmem>>, %arg9: memref<32x1xf32, #tpu.memory_space<vmem>>, %arg10: memref<32x1xf32, #tpu.memory_space<vmem>>, %arg11: memref<64x32xbf16, #tpu.memory_space<vmem>>, %arg12: memref<32x64xbf16, #tpu.memory_space<vmem>>, %arg13: memref<32x1xf32, #tpu.memory_space<vmem>>, %arg14: memref<32x1xf32, #tpu.memory_space<vmem>>, %arg15: memref<1x32x256xf32, #tpu.memory_space<vmem>>, %arg16: memref<32x256xbf16, #tpu.memory_space<vmem>>, %arg17: memref<32x256xbf16, #tpu.memory_space<vmem>>) attributes {dimension_semantics = [#tpu.dimension_semantics<parallel>, #tpu.dimension_semantics<arbitrary>], iteration_bounds = array<i64: 2, 2>, scalar_prefetch = 0 : i64, scratch_operands = 2 : i64, tpu.core_type = #tpu.core_type<tc>, window_params = [{transform_indices = @transform_0, window_bounds = array<i64: 1, 32, 256>}, {transform_indices = @transform_1, window_bounds = array<i64: 1, 32, 256>}, {transform_indices = @transform_2, window_bounds = array<i64: 1, 128, 256>}, {pipeline_mode = #tpu.pipeline_mode<synchronous>, transform_indices = @transform_3, window_bounds = array<i64: 64, 32>}, {pipeline_mode = #tpu.pipeline_mode<synchronous>, transform_indices = @transform_4, window_bounds = array<i64: 32, 128>}, {pipeline_mode = #tpu.pipeline_mode<synchronous>, transform_indices = @transform_5, window_bounds = array<i64: 96, 32>}, {pipeline_mode = #tpu.pipeline_mode<synchronous>, transform_indices = @transform_6, window_bounds = array<i64: 32, 32>}, {pipeline_mode = #tpu.pipeline_mode<synchronous>, transform_indices = @transform_7, window_bounds = array<i64: 32, 1>}, {pipeline_mode = #tpu.pipeline_mode<synchronous>, transform_indices = @transform_8, window_bounds = array<i64: 32, 1>}, {pipeline_mode = #tpu.pipeline_mode<synchronous>, transform_indices = @transform_9, window_bounds = array<i64: 64, 32>}, {pipeline_mode = #tpu.pipeline_mode<synchronous>, transform_indices = @transform_10, window_bounds = array<i64: 32, 64>}, {pipeline_mode = #tpu.pipeline_mode<synchronous>, transform_indices = @transform_11, window_bounds = array<i64: 32, 1>}, {pipeline_mode = #tpu.pipeline_mode<synchronous>, transform_indices = @transform_12, window_bounds = array<i64: 32, 1>}, {transform_indices = @transform_13, window_bounds = array<i64: 1, 32, 256>}]} {
    %c0_i32 = arith.constant 0 : i32
    %0 = arith.cmpi eq, %arg1, %c0_i32 : i32
    %1 = arith.extui %0 : i1 to i32
    %c0_i32_0 = arith.constant 0 : i32
    %2 = arith.cmpi ne, %1, %c0_i32_0 : i32
    scf.if %2 {
      %c0_63 = arith.constant 0 : index
      %c0_64 = arith.constant 0 : index
      %c0_65 = arith.constant 0 : index
      %144 = vector.load %arg3[%c0_63, %c0_64, %c0_65] : memref<1x32x256xbf16, #tpu.memory_space<vmem>>, vector<1x32x256xbf16>
      %145 = vector.shape_cast %144 : vector<1x32x256xbf16> to vector<32x256xbf16>
      %c0_66 = arith.constant 0 : index
      %c0_67 = arith.constant 0 : index
      %c0_68 = arith.constant 0 : index
      %146 = vector.load %arg4[%c0_66, %c0_67, %c0_68] : memref<1x128x256xbf16, #tpu.memory_space<vmem>>, vector<1x128x256xbf16>
      %147 = vector.shape_cast %146 : vector<1x128x256xbf16> to vector<128x256xbf16>
      %c0_69 = arith.constant 0 : index
      %c0_70 = arith.constant 0 : index
      %148 = vector.load %arg5[%c0_69, %c0_70] : memref<64x32xbf16, #tpu.memory_space<vmem>>, vector<64x32xbf16>
      %cst_71 = arith.constant dense<0.000000e+00> : vector<64x256xf32>
      %149 = tpu.matmul %148, %145, %cst_71 {dimension_numbers = #tpu.dot_dimension_numbers<[1], [0], [0], [1], [0, 0, 1, 1], [], []>} : vector<64x32xbf16>, vector<32x256xbf16>, vector<64x256xf32> -> vector<64x256xf32>
      %150 = vector.extract_strided_slice %149 {offsets = [0, 0], sizes = [32, 256], strides = [1, 1]} : vector<64x256xf32> to vector<32x256xf32>
      %151 = arith.truncf %150 : vector<32x256xf32> to vector<32x256xbf16>
      %c0_72 = arith.constant 0 : index
      %c0_73 = arith.constant 0 : index
      %152 = vector.load %arg16[%c0_72, %c0_73] : memref<32x256xbf16, #tpu.memory_space<vmem>>, vector<32x256xbf16>
      tpu.vector_store %arg16[%c0_72, %c0_73], %151 {strides = array<i32>} : memref<32x256xbf16, #tpu.memory_space<vmem>>, vector<32x256xbf16>,
      %153 = vector.extract_strided_slice %149 {offsets = [32, 0], sizes = [32, 256], strides = [1, 1]} : vector<64x256xf32> to vector<32x256xf32>
      %c0_74 = arith.constant 0 : index
      %c0_75 = arith.constant 0 : index
      %154 = vector.load %arg6[%c0_74, %c0_75] : memref<32x128xbf16, #tpu.memory_space<vmem>>, vector<32x128xbf16>
      %cst_76 = arith.constant dense<0.000000e+00> : vector<32x256xf32>
      %155 = tpu.matmul %154, %147, %cst_76 {dimension_numbers = #tpu.dot_dimension_numbers<[1], [0], [0], [1], [0, 0, 1, 1], [], []>} : vector<32x128xbf16>, vector<128x256xbf16>, vector<32x256xf32> -> vector<32x256xf32>
      %156 = arith.addf %153, %155 : vector<32x256xf32>
      %157 = arith.truncf %156 : vector<32x256xf32> to vector<32x256xbf16>
      %c0_77 = arith.constant 0 : index
      %c0_78 = arith.constant 0 : index
      %158 = vector.load %arg17[%c0_77, %c0_78] : memref<32x256xbf16, #tpu.memory_space<vmem>>, vector<32x256xbf16>
      tpu.vector_store %arg17[%c0_77, %c0_78], %157 {strides = array<i32>} : memref<32x256xbf16, #tpu.memory_space<vmem>>, vector<32x256xbf16>,
    } else {
    }
    %c0 = arith.constant 0 : index
    %c0_1 = arith.constant 0 : index
    %c0_2 = arith.constant 0 : index
    %3 = vector.load %arg2[%c0, %c0_1, %c0_2] : memref<1x32x256xbf16, #tpu.memory_space<vmem>>, vector<1x32x256xbf16>
    %4 = vector.shape_cast %3 : vector<1x32x256xbf16> to vector<32x256xbf16>
    %c0_3 = arith.constant 0 : index
    %c0_4 = arith.constant 0 : index
    %5 = vector.load %arg16[%c0_3, %c0_4] : memref<32x256xbf16, #tpu.memory_space<vmem>>, vector<32x256xbf16>
    %c0_5 = arith.constant 0 : index
    %c0_6 = arith.constant 0 : index
    %6 = vector.load %arg17[%c0_5, %c0_6] : memref<32x256xbf16, #tpu.memory_space<vmem>>, vector<32x256xbf16>
    %c0_7 = arith.constant 0 : index
    %c0_8 = arith.constant 0 : index
    %7 = vector.load %arg7[%c0_7, %c0_8] : memref<96x32xbf16, #tpu.memory_space<vmem>>, vector<96x32xbf16>
    %cst = arith.constant dense<0.000000e+00> : vector<96x256xf32>
    %8 = tpu.matmul %7, %4, %cst {dimension_numbers = #tpu.dot_dimension_numbers<[1], [0], [0], [1], [0, 0, 1, 1], [], []>} : vector<96x32xbf16>, vector<32x256xbf16>, vector<96x256xf32> -> vector<96x256xf32>
    %9 = vector.extract_strided_slice %8 {offsets = [0, 0], sizes = [32, 256], strides = [1, 1]} : vector<96x256xf32> to vector<32x256xf32>
    %10 = tpu.transpose %9, [1, 0] : vector<32x256xf32> -> vector<256x32xf32>
    %11 = arith.truncf %10 : vector<256x32xf32> to vector<256x32xbf16>
    %12 = vector.extract_strided_slice %8 {offsets = [32, 0], sizes = [64, 256], strides = [1, 1]} : vector<96x256xf32> to vector<64x256xf32>
    %cst_9 = arith.constant 1.000000e+00 : bf16
    %13 = vector.broadcast %cst_9 : bf16 to vector<1x256xbf16>
    %14 = vector.extract_strided_slice %11 {offsets = [0, 0], sizes = [256, 8], strides = [1, 1]} : vector<256x32xbf16> to vector<256x8xbf16>
    %15 = vector.extract_strided_slice %5 {offsets = [0, 0], sizes = [8, 256], strides = [1, 1]} : vector<32x256xbf16> to vector<8x256xbf16>
    %cst_10 = arith.constant dense<0.000000e+00> : vector<256x256xf32>
    %16 = tpu.matmul %14, %15, %cst_10 {dimension_numbers = #tpu.dot_dimension_numbers<[1], [0], [0], [1], [0, 0, 1, 1], [], []>} : vector<256x8xbf16>, vector<8x256xbf16>, vector<256x256xf32> -> vector<256x256xf32>
    %cst_11 = arith.constant dense<0xFF800000> : vector<256xf32>
    %17 = vector.multi_reduction <maximumf>, %16, %cst_11 [1] : vector<256x256xf32> to vector<256xf32>
    %18 = vector.shape_cast %17 : vector<256xf32> to vector<256x1xf32>
    %19 = vector.broadcast %18 : vector<256x1xf32> to vector<256x256xf32>
    %20 = arith.subf %16, %19 : vector<256x256xf32>
    %21 = math.exp %20 : vector<256x256xf32>
    %22 = arith.truncf %21 : vector<256x256xf32> to vector<256x256xbf16>
    %23 = vector.extract_strided_slice %6 {offsets = [0, 0], sizes = [8, 256], strides = [1, 1]} : vector<32x256xbf16> to vector<8x256xbf16>
    %cst_12 = arith.constant dense<0.000000e+00> : vector<8x256xf32>
    %24 = tpu.matmul %23, %22, %cst_12 {dimension_numbers = #tpu.dot_dimension_numbers<[1], [1], [0], [0], [0, 0, 1, 0], [], []>} : vector<8x256xbf16>, vector<256x256xbf16>, vector<8x256xf32> -> vector<8x256xf32>
    %cst_13 = arith.constant dense<0.000000e+00> : vector<1x256xf32>
    %25 = tpu.matmul %13, %22, %cst_13 {dimension_numbers = #tpu.dot_dimension_numbers<[1], [1], [0], [0], [0, 0, 1, 0], [], []>} : vector<1x256xbf16>, vector<256x256xbf16>, vector<1x256xf32> -> vector<1x256xf32>
    %cst_14 = arith.constant 1.000000e+00 : f32
    %26 = vector.broadcast %cst_14 : f32 to vector<1x256xf32>
    %27 = arith.divf %26, %25 : vector<1x256xf32>
    %28 = vector.broadcast %27 : vector<1x256xf32> to vector<8x256xf32>
    %29 = arith.mulf %24, %28 : vector<8x256xf32>
    %30 = vector.extract_strided_slice %11 {offsets = [0, 8], sizes = [256, 8], strides = [1, 1]} : vector<256x32xbf16> to vector<256x8xbf16>
    %31 = vector.extract_strided_slice %5 {offsets = [8, 0], sizes = [8, 256], strides = [1, 1]} : vector<32x256xbf16> to vector<8x256xbf16>
    %cst_15 = arith.constant dense<0.000000e+00> : vector<256x256xf32>
    %32 = tpu.matmul %30, %31, %cst_15 {dimension_numbers = #tpu.dot_dimension_numbers<[1], [0], [0], [1], [0, 0, 1, 1], [], []>} : vector<256x8xbf16>, vector<8x256xbf16>, vector<256x256xf32> -> vector<256x256xf32>
    %cst_16 = arith.constant dense<0xFF800000> : vector<256xf32>
    %33 = vector.multi_reduction <maximumf>, %32, %cst_16 [1] : vector<256x256xf32> to vector<256xf32>
    %34 = vector.shape_cast %33 : vector<256xf32> to vector<256x1xf32>
    %35 = vector.broadcast %34 : vector<256x1xf32> to vector<256x256xf32>
    %36 = arith.subf %32, %35 : vector<256x256xf32>
    %37 = math.exp %36 : vector<256x256xf32>
    %38 = arith.truncf %37 : vector<256x256xf32> to vector<256x256xbf16>
    %39 = vector.extract_strided_slice %6 {offsets = [8, 0], sizes = [8, 256], strides = [1, 1]} : vector<32x256xbf16> to vector<8x256xbf16>
    %cst_17 = arith.constant dense<0.000000e+00> : vector<8x256xf32>
    %40 = tpu.matmul %39, %38, %cst_17 {dimension_numbers = #tpu.dot_dimension_numbers<[1], [1], [0], [0], [0, 0, 1, 0], [], []>} : vector<8x256xbf16>, vector<256x256xbf16>, vector<8x256xf32> -> vector<8x256xf32>
    %cst_18 = arith.constant dense<0.000000e+00> : vector<1x256xf32>
    %41 = tpu.matmul %13, %38, %cst_18 {dimension_numbers = #tpu.dot_dimension_numbers<[1], [1], [0], [0], [0, 0, 1, 0], [], []>} : vector<1x256xbf16>, vector<256x256xbf16>, vector<1x256xf32> -> vector<1x256xf32>
    %cst_19 = arith.constant 1.000000e+00 : f32
    %42 = vector.broadcast %cst_19 : f32 to vector<1x256xf32>
    %43 = arith.divf %42, %41 : vector<1x256xf32>
    %44 = vector.broadcast %43 : vector<1x256xf32> to vector<8x256xf32>
    %45 = arith.mulf %40, %44 : vector<8x256xf32>
    %46 = vector.extract_strided_slice %11 {offsets = [0, 16], sizes = [256, 8], strides = [1, 1]} : vector<256x32xbf16> to vector<256x8xbf16>
    %47 = vector.extract_strided_slice %5 {offsets = [16, 0], sizes = [8, 256], strides = [1, 1]} : vector<32x256xbf16> to vector<8x256xbf16>
    %cst_20 = arith.constant dense<0.000000e+00> : vector<256x256xf32>
    %48 = tpu.matmul %46, %47, %cst_20 {dimension_numbers = #tpu.dot_dimension_numbers<[1], [0], [0], [1], [0, 0, 1, 1], [], []>} : vector<256x8xbf16>, vector<8x256xbf16>, vector<256x256xf32> -> vector<256x256xf32>
    %cst_21 = arith.constant dense<0xFF800000> : vector<256xf32>
    %49 = vector.multi_reduction <maximumf>, %48, %cst_21 [1] : vector<256x256xf32> to vector<256xf32>
    %50 = vector.shape_cast %49 : vector<256xf32> to vector<256x1xf32>
    %51 = vector.broadcast %50 : vector<256x1xf32> to vector<256x256xf32>
    %52 = arith.subf %48, %51 : vector<256x256xf32>
    %53 = math.exp %52 : vector<256x256xf32>
    %54 = arith.truncf %53 : vector<256x256xf32> to vector<256x256xbf16>
    %55 = vector.extract_strided_slice %6 {offsets = [16, 0], sizes = [8, 256], strides = [1, 1]} : vector<32x256xbf16> to vector<8x256xbf16>
    %cst_22 = arith.constant dense<0.000000e+00> : vector<8x256xf32>
    %56 = tpu.matmul %55, %54, %cst_22 {dimension_numbers = #tpu.dot_dimension_numbers<[1], [1], [0], [0], [0, 0, 1, 0], [], []>} : vector<8x256xbf16>, vector<256x256xbf16>, vector<8x256xf32> -> vector<8x256xf32>
    %cst_23 = arith.constant dense<0.000000e+00> : vector<1x256xf32>
    %57 = tpu.matmul %13, %54, %cst_23 {dimension_numbers = #tpu.dot_dimension_numbers<[1], [1], [0], [0], [0, 0, 1, 0], [], []>} : vector<1x256xbf16>, vector<256x256xbf16>, vector<1x256xf32> -> vector<1x256xf32>
    %cst_24 = arith.constant 1.000000e+00 : f32
    %58 = vector.broadcast %cst_24 : f32 to vector<1x256xf32>
    %59 = arith.divf %58, %57 : vector<1x256xf32>
    %60 = vector.broadcast %59 : vector<1x256xf32> to vector<8x256xf32>
    %61 = arith.mulf %56, %60 : vector<8x256xf32>
    %62 = vector.extract_strided_slice %11 {offsets = [0, 24], sizes = [256, 8], strides = [1, 1]} : vector<256x32xbf16> to vector<256x8xbf16>
    %63 = vector.extract_strided_slice %5 {offsets = [24, 0], sizes = [8, 256], strides = [1, 1]} : vector<32x256xbf16> to vector<8x256xbf16>
    %cst_25 = arith.constant dense<0.000000e+00> : vector<256x256xf32>
    %64 = tpu.matmul %62, %63, %cst_25 {dimension_numbers = #tpu.dot_dimension_numbers<[1], [0], [0], [1], [0, 0, 1, 1], [], []>} : vector<256x8xbf16>, vector<8x256xbf16>, vector<256x256xf32> -> vector<256x256xf32>
    %cst_26 = arith.constant dense<0xFF800000> : vector<256xf32>
    %65 = vector.multi_reduction <maximumf>, %64, %cst_26 [1] : vector<256x256xf32> to vector<256xf32>
    %66 = vector.shape_cast %65 : vector<256xf32> to vector<256x1xf32>
    %67 = vector.broadcast %66 : vector<256x1xf32> to vector<256x256xf32>
    %68 = arith.subf %64, %67 : vector<256x256xf32>
    %69 = math.exp %68 : vector<256x256xf32>
    %70 = arith.truncf %69 : vector<256x256xf32> to vector<256x256xbf16>
    %71 = vector.extract_strided_slice %6 {offsets = [24, 0], sizes = [8, 256], strides = [1, 1]} : vector<32x256xbf16> to vector<8x256xbf16>
    %cst_27 = arith.constant dense<0.000000e+00> : vector<8x256xf32>
    %72 = tpu.matmul %71, %70, %cst_27 {dimension_numbers = #tpu.dot_dimension_numbers<[1], [1], [0], [0], [0, 0, 1, 0], [], []>} : vector<8x256xbf16>, vector<256x256xbf16>, vector<8x256xf32> -> vector<8x256xf32>
    %cst_28 = arith.constant dense<0.000000e+00> : vector<1x256xf32>
    %73 = tpu.matmul %13, %70, %cst_28 {dimension_numbers = #tpu.dot_dimension_numbers<[1], [1], [0], [0], [0, 0, 1, 0], [], []>} : vector<1x256xbf16>, vector<256x256xbf16>, vector<1x256xf32> -> vector<1x256xf32>
    %cst_29 = arith.constant 1.000000e+00 : f32
    %74 = vector.broadcast %cst_29 : f32 to vector<1x256xf32>
    %75 = arith.divf %74, %73 : vector<1x256xf32>
    %76 = vector.broadcast %75 : vector<1x256xf32> to vector<8x256xf32>
    %77 = arith.mulf %72, %76 : vector<8x256xf32>
    %78 = tpu.concatenate %29, %45, %61, %77 in 0 : vector<8x256xf32>, vector<8x256xf32>, vector<8x256xf32>, vector<8x256xf32> -> vector<32x256xf32>
    %c0_30 = arith.constant 0 : index
    %c0_31 = arith.constant 0 : index
    %79 = vector.load %arg8[%c0_30, %c0_31] : memref<32x32xbf16, #tpu.memory_space<vmem>>, vector<32x32xbf16>
    %80 = arith.truncf %78 : vector<32x256xf32> to vector<32x256xbf16>
    %cst_32 = arith.constant dense<0.000000e+00> : vector<32x256xf32>
    %81 = tpu.matmul %79, %80, %cst_32 {dimension_numbers = #tpu.dot_dimension_numbers<[1], [0], [0], [1], [0, 0, 1, 1], [], []>} : vector<32x32xbf16>, vector<32x256xbf16>, vector<32x256xf32> -> vector<32x256xf32>
    %c0_33 = arith.constant 0 : index
    %c0_34 = arith.constant 0 : index
    %82 = vector.load %arg9[%c0_33, %c0_34] : memref<32x1xf32, #tpu.memory_space<vmem>>, vector<32x1xf32>
    %c0_35 = arith.constant 0 : index
    %c0_36 = arith.constant 0 : index
    %83 = vector.load %arg10[%c0_35, %c0_36] : memref<32x1xf32, #tpu.memory_space<vmem>>, vector<32x1xf32>
    %cst_37 = arith.constant dense<0.000000e+00> : vector<256xf32>
    %84 = vector.multi_reduction <add>, %81, %cst_37 [0] : vector<32x256xf32> to vector<256xf32>
    %85 = vector.shape_cast %84 : vector<256xf32> to vector<1x256xf32>
    %cst_38 = arith.constant 3.200000e+01 : f32
    %86 = vector.broadcast %cst_38 : f32 to vector<1x256xf32>
    %87 = arith.divf %85, %86 : vector<1x256xf32>
    %88 = vector.broadcast %87 : vector<1x256xf32> to vector<32x256xf32>
    %89 = arith.subf %81, %88 : vector<32x256xf32>
    %90 = arith.mulf %89, %89 : vector<32x256xf32>
    %cst_39 = arith.constant dense<0.000000e+00> : vector<256xf32>
    %91 = vector.multi_reduction <add>, %90, %cst_39 [0] : vector<32x256xf32> to vector<256xf32>
    %92 = vector.shape_cast %91 : vector<256xf32> to vector<1x256xf32>
    %cst_40 = arith.constant 0.0322580636 : f32
    %93 = vector.broadcast %cst_40 : f32 to vector<1x256xf32>
    %94 = arith.mulf %92, %93 : vector<1x256xf32>
    %95 = math.sqrt %94 : vector<1x256xf32>
    %cst_41 = arith.constant 9.99999997E-7 : f32
    %96 = vector.broadcast %cst_41 : f32 to vector<1x256xf32>
    %97 = arith.addf %95, %96 : vector<1x256xf32>
    %cst_42 = arith.constant 1.000000e+00 : f32
    %98 = vector.broadcast %cst_42 : f32 to vector<1x256xf32>
    %99 = arith.divf %98, %97 : vector<1x256xf32>
    %100 = vector.broadcast %99 : vector<1x256xf32> to vector<32x256xf32>
    %101 = arith.mulf %89, %100 : vector<32x256xf32>
    %102 = vector.broadcast %82 : vector<32x1xf32> to vector<32x256xf32>
    %103 = arith.mulf %102, %101 : vector<32x256xf32>
    %104 = vector.broadcast %83 : vector<32x1xf32> to vector<32x256xf32>
    %105 = arith.addf %103, %104 : vector<32x256xf32>
    %c0_43 = arith.constant 0 : index
    %c0_44 = arith.constant 0 : index
    %106 = vector.load %arg11[%c0_43, %c0_44] : memref<64x32xbf16, #tpu.memory_space<vmem>>, vector<64x32xbf16>
    %107 = arith.truncf %105 : vector<32x256xf32> to vector<32x256xbf16>
    %cst_45 = arith.constant dense<0.000000e+00> : vector<64x256xf32>
    %108 = tpu.matmul %106, %107, %cst_45 {dimension_numbers = #tpu.dot_dimension_numbers<[1], [0], [0], [1], [0, 0, 1, 1], [], []>} : vector<64x32xbf16>, vector<32x256xbf16>, vector<64x256xf32> -> vector<64x256xf32>
    %109 = arith.addf %12, %108 : vector<64x256xf32>
    %cst_46 = arith.constant 0.000000e+00 : f32
    %110 = vector.broadcast %cst_46 : f32 to vector<64x256xf32>
    %111 = arith.maximumf %109, %110 : vector<64x256xf32>
    %c0_47 = arith.constant 0 : index
    %c0_48 = arith.constant 0 : index
    %112 = vector.load %arg12[%c0_47, %c0_48] : memref<32x64xbf16, #tpu.memory_space<vmem>>, vector<32x64xbf16>
    %113 = arith.truncf %111 : vector<64x256xf32> to vector<64x256xbf16>
    %cst_49 = arith.constant dense<0.000000e+00> : vector<32x256xf32>
    %114 = tpu.matmul %112, %113, %cst_49 {dimension_numbers = #tpu.dot_dimension_numbers<[1], [0], [0], [1], [0, 0, 1, 1], [], []>} : vector<32x64xbf16>, vector<64x256xbf16>, vector<32x256xf32> -> vector<32x256xf32>
    %c0_50 = arith.constant 0 : index
    %c0_51 = arith.constant 0 : index
    %115 = vector.load %arg13[%c0_50, %c0_51] : memref<32x1xf32, #tpu.memory_space<vmem>>, vector<32x1xf32>
    %c0_52 = arith.constant 0 : index
    %c0_53 = arith.constant 0 : index
    %116 = vector.load %arg14[%c0_52, %c0_53] : memref<32x1xf32, #tpu.memory_space<vmem>>, vector<32x1xf32>
    %cst_54 = arith.constant dense<0.000000e+00> : vector<256xf32>
    %117 = vector.multi_reduction <add>, %114, %cst_54 [0] : vector<32x256xf32> to vector<256xf32>
    %118 = vector.shape_cast %117 : vector<256xf32> to vector<1x256xf32>
    %cst_55 = arith.constant 3.200000e+01 : f32
    %119 = vector.broadcast %cst_55 : f32 to vector<1x256xf32>
    %120 = arith.divf %118, %119 : vector<1x256xf32>
    %121 = vector.broadcast %120 : vector<1x256xf32> to vector<32x256xf32>
    %122 = arith.subf %114, %121 : vector<32x256xf32>
    %123 = arith.mulf %122, %122 : vector<32x256xf32>
    %cst_56 = arith.constant dense<0.000000e+00> : vector<256xf32>
    %124 = vector.multi_reduction <add>, %123, %cst_56 [0] : vector<32x256xf32> to vector<256xf32>
    %125 = vector.shape_cast %124 : vector<256xf32> to vector<1x256xf32>
    %cst_57 = arith.constant 0.0322580636 : f32
    %126 = vector.broadcast %cst_57 : f32 to vector<1x256xf32>
    %127 = arith.mulf %125, %126 : vector<1x256xf32>
    %128 = math.sqrt %127 : vector<1x256xf32>
    %cst_58 = arith.constant 9.99999997E-7 : f32
    %129 = vector.broadcast %cst_58 : f32 to vector<1x256xf32>
    %130 = arith.addf %128, %129 : vector<1x256xf32>
    %cst_59 = arith.constant 1.000000e+00 : f32
    %131 = vector.broadcast %cst_59 : f32 to vector<1x256xf32>
    %132 = arith.divf %131, %130 : vector<1x256xf32>
    %133 = vector.broadcast %132 : vector<1x256xf32> to vector<32x256xf32>
    %134 = arith.mulf %122, %133 : vector<32x256xf32>
    %135 = vector.broadcast %115 : vector<32x1xf32> to vector<32x256xf32>
    %136 = arith.mulf %135, %134 : vector<32x256xf32>
    %137 = vector.broadcast %116 : vector<32x1xf32> to vector<32x256xf32>
    %138 = arith.addf %136, %137 : vector<32x256xf32>
    %139 = arith.extf %4 : vector<32x256xbf16> to vector<32x256xf32>
    %140 = arith.addf %139, %138 : vector<32x256xf32>
    %c0_60 = arith.constant 0 : index
    %c0_61 = arith.constant 0 : index
    %c0_62 = arith.constant 0 : index
    %141 = vector.load %arg15[%c0_60, %c0_61, %c0_62] : memref<1x32x256xf32, #tpu.memory_space<vmem>>, vector<1x32x256xf32>
    %142 = vector.shape_cast %141 : vector<1x32x256xf32> to vector<32x256xf32>
    %143 = vector.shape_cast %140 : vector<32x256xf32> to vector<1x32x256xf32>
    tpu.vector_store %arg15[%c0_60, %c0_61, %c0_62], %143 {strides = array<i32>} : memref<1x32x256xf32, #tpu.memory_space<vmem>>, vector<1x32x256xf32>,
    return
  }
  func.func @transform_0(%arg0: i32, %arg1: i32) -> (i32, i32, i32) {
    %c0_i32 = arith.constant 0 : i32
    %c0_i32_0 = arith.constant 0 : i32
    return %arg0, %c0_i32, %arg1 : i32, i32, i32
  }
  func.func @transform_1(%arg0: i32, %arg1: i32) -> (i32, i32, i32) {
    %c0_i32 = arith.constant 0 : i32
    %c0_i32_0 = arith.constant 0 : i32
    %c0_i32_1 = arith.constant 0 : i32
    return %arg0, %c0_i32, %c0_i32_0 : i32, i32, i32
  }
  func.func @transform_2(%arg0: i32, %arg1: i32) -> (i32, i32, i32) {
    %c0_i32 = arith.constant 0 : i32
    %c0_i32_0 = arith.constant 0 : i32
    %c0_i32_1 = arith.constant 0 : i32
    return %arg0, %c0_i32, %c0_i32_0 : i32, i32, i32
  }
  func.func @transform_3(%arg0: i32, %arg1: i32) -> (i32, i32) {
    %c0_i32 = arith.constant 0 : i32
    %c0_i32_0 = arith.constant 0 : i32
    %c0_i32_1 = arith.constant 0 : i32
    return %c0_i32, %c0_i32_0 : i32, i32
  }
  func.func @transform_4(%arg0: i32, %arg1: i32) -> (i32, i32) {
    %c0_i32 = arith.constant 0 : i32
    %c0_i32_0 = arith.constant 0 : i32
    %c0_i32_1 = arith.constant 0 : i32
    return %c0_i32, %c0_i32_0 : i32, i32
  }
  func.func @transform_5(%arg0: i32, %arg1: i32) -> (i32, i32) {
    %c0_i32 = arith.constant 0 : i32
    %c0_i32_0 = arith.constant 0 : i32
    %c0_i32_1 = arith.constant 0 : i32
    return %c0_i32, %c0_i32_0 : i32, i32
  }
  func.func @transform_6(%arg0: i32, %arg1: i32) -> (i32, i32) {
    %c0_i32 = arith.constant 0 : i32
    %c0_i32_0 = arith.constant 0 : i32
    %c0_i32_1 = arith.constant 0 : i32
    return %c0_i32, %c0_i32_0 : i32, i32
  }
  func.func @transform_7(%arg0: i32, %arg1: i32) -> (i32, i32) {
    %c0_i32 = arith.constant 0 : i32
    %c0_i32_0 = arith.constant 0 : i32
    %c0_i32_1 = arith.constant 0 : i32
    return %c0_i32, %c0_i32_0 : i32, i32
  }
  func.func @transform_8(%arg0: i32, %arg1: i32) -> (i32, i32) {
    %c0_i32 = arith.constant 0 : i32
    %c0_i32_0 = arith.constant 0 : i32
    %c0_i32_1 = arith.constant 0 : i32
    return %c0_i32, %c0_i32_0 : i32, i32
  }
  func.func @transform_9(%arg0: i32, %arg1: i32) -> (i32, i32) {
    %c0_i32 = arith.constant 0 : i32
    %c0_i32_0 = arith.constant 0 : i32
    %c0_i32_1 = arith.constant 0 : i32
    return %c0_i32, %c0_i32_0 : i32, i32
  }
  func.func @transform_10(%arg0: i32, %arg1: i32) -> (i32, i32) {
    %c0_i32 = arith.constant 0 : i32
    %c0_i32_0 = arith.constant 0 : i32
    %c0_i32_1 = arith.constant 0 : i32
    return %c0_i32, %c0_i32_0 : i32, i32
  }
  func.func @transform_11(%arg0: i32, %arg1: i32) -> (i32, i32) {
    %c0_i32 = arith.constant 0 : i32
    %c0_i32_0 = arith.constant 0 : i32
    %c0_i32_1 = arith.constant 0 : i32
    return %c0_i32, %c0_i32_0 : i32, i32
  }
  func.func @transform_12(%arg0: i32, %arg1: i32) -> (i32, i32) {
    %c0_i32 = arith.constant 0 : i32
    %c0_i32_0 = arith.constant 0 : i32
    %c0_i32_1 = arith.constant 0 : i32
    return %c0_i32, %c0_i32_0 : i32, i32
  }
  func.func @transform_13(%arg0: i32, %arg1: i32) -> (i32, i32, i32) {
    %c0_i32 = arith.constant 0 : i32
    %c0_i32_0 = arith.constant 0 : i32
    return %arg0, %c0_i32, %arg1 : i32, i32, i32
  }
}

</mosaic_0001>

<llo_original>
// kernel: tpu_custom_call.1
$region0: #{tpu_custom_call.1}
  #allocation0 [shape = 'u32[]', space=smem, size = 0x4, offset = 0x4, fixed_abs, tag = 'smem constant byte address 0x4 - core index']
  #allocation1 [shape = 'u32[72,128]{1,0:T(1,128)}', space=vmem, size = 0x9000, scoped, tag = 'internal scratch']
  #allocation2 [shape = 'bf16[32,256]{1,0:T(8,128)(2,1)}', space=vmem, size = 0x4000, scoped, tag = 'scratch operand']
  #allocation3 [shape = 'bf16[32,256]{1,0:T(8,128)(2,1)}', space=vmem, size = 0x4000, scoped, tag = 'scratch operand']
  %s0 = inlined_call_operand.hbm [shape: bf16[2,32,512], index: 0, kind: input, shape index: {}]
  %s1 = inlined_call_operand.vmem [shape: bf16[2,32,256], index: 1, kind: input, shape index: {}]
  %s2 = inlined_call_operand.hbm [shape: bf16[2,128,256], index: 2, kind: input, shape index: {}]
  %s3 = inlined_call_operand.vmem [shape: bf16[64,32], index: 3, kind: input, shape index: {}]
  %s4 = inlined_call_operand.vmem [shape: bf16[32,128], index: 4, kind: input, shape index: {}]
  %s5 = inlined_call_operand.vmem [shape: bf16[96,32], index: 5, kind: input, shape index: {}]
  %s6 = inlined_call_operand.vmem [shape: bf16[32,32], index: 6, kind: input, shape index: {}]
  %s7 = inlined_call_operand.vmem [shape: f32[32,1], index: 7, kind: input, shape index: {}]
  %s8 = inlined_call_operand.vmem [shape: f32[32,1], index: 8, kind: input, shape index: {}]
  %s9 = inlined_call_operand.vmem [shape: bf16[64,32], index: 9, kind: input, shape index: {}]
  %s10 = inlined_call_operand.vmem [shape: bf16[32,64], index: 10, kind: input, shape index: {}]
  %s11 = inlined_call_operand.vmem [shape: f32[32,1], index: 11, kind: input, shape index: {}]
  %s12 = inlined_call_operand.vmem [shape: f32[32,1], index: 12, kind: input, shape index: {}]
  %s13 = inlined_call_operand.hbm [shape: f32[2,32,512], index: 13, kind: output, shape index: {}]
  %s14 = sld [smem:[#allocation0]]
  $region97: #{tpu_custom_call.1} parent=0
    _
  %s16 = ssub.s32 1, %s14
  %s17 = scalar_select 0, %s16, %s14
  $region1: #{tpu_custom_call.1} parent=0
    #allocation4 [shape = 'u8[32768]{0}', space=vmem, size = 0x8000, scoped, tag = 'input window, operand 0']
    #allocation5 [shape = 's32[2]{0}', space=sflag, size = 0x8, scoped, tag = 'scoped memory for tpu_custom_call.1']
    #allocation6 [shape = 's32[2]{0}', space=sflag, size = 0x8, scoped, tag = 'scoped memory for tpu_custom_call.1']
    #allocation7 [shape = 'u8[131072]{0}', space=vmem, size = 0x20000, scoped, tag = 'input window, operand 2']
    #allocation8 [shape = 's32[2]{0}', space=sflag, size = 0x8, scoped, tag = 'scoped memory for tpu_custom_call.1']
    #allocation9 [shape = 'u8[65536]{0}', space=vmem, size = 0x10000, scoped, tag = 'output window, operand 0']
    %18 = vsyncpa [#allocation5], 0
    %s19 = scalar_lea.sflag [#allocation5], 1
    %20 = vsyncpa %s19, 0
    %21 = vsyncpa [#allocation8], 0
    %s22 = scalar_lea.sflag [#allocation8], 1
    %23 = vsyncpa %s22, 0
    %24 = vsyncpa [#allocation6], 0
    %s25 = scalar_lea.sflag [#allocation6], 1
    %26 = vsyncpa %s25, 0
    loop: start=0, step=1, limit=6
    $region2: #{tpu_custom_call.1} parent=1 // loop_pre_header
      _
    $region3: #{tpu_custom_call.1} parent=1 // loop_header
      %s28 = sphi 0, %s32
      %p29 = scmp.ge.s32.totalorder %s28, 6
      %s35 = sphi 0, %s47
      %s36 = sphi 0, %s43
      %s37 = sphi 0, %s35
      %s38 = sphi 0, %s36
      %s39 = sphi 0, %s37
      %s40 = sphi 0, %s38
      %s52 = sphi 0, %s54
      %s55 = sphi 0, %s52
      %s56 = sphi 0, %s55
      %s72 = sphi 0, %s56
      %s78 = sphi 0, %s80
      %s81 = sphi 0, %s78
      %s82 = sphi 0, %s81
      %s98 = sphi 0, %s82
      %s104 = sphi 0, %s106
      %s107 = sphi 0, %s104
      %s108 = sphi 0, %s107
      %s124 = sphi 0, %s108
      %s128 = sphi 0, %s128
      %s130 = sphi 0, %s128
      %s131 = sphi 0, %s130
      %s145 = sphi 0, %s131
      %s149 = sphi 0, %s149
      %s151 = sphi 0, %s149
      %s152 = sphi 0, %s151
      %s166 = sphi 0, %s152
      %s170 = sphi 0, %s170
      %s172 = sphi 0, %s170
      %s173 = sphi 0, %s172
      %s187 = sphi 0, %s173
      %s191 = sphi 0, %s191
      %s193 = sphi 0, %s191
      %s194 = sphi 0, %s193
      %s208 = sphi 0, %s194
      %s212 = sphi 0, %s212
      %s214 = sphi 0, %s212
      %s215 = sphi 0, %s214
      %s229 = sphi 0, %s215
      %s233 = sphi 0, %s233
      %s235 = sphi 0, %s233
      %s236 = sphi 0, %s235
      %s250 = sphi 0, %s236
      %s254 = sphi 0, %s254
      %s256 = sphi 0, %s254
      %s257 = sphi 0, %s256
      %s271 = sphi 0, %s257
      %s275 = sphi 0, %s275
      %s277 = sphi 0, %s275
      %s278 = sphi 0, %s277
      %s292 = sphi 0, %s278
      %s296 = sphi 0, %s296
      %s298 = sphi 0, %s296
      %s299 = sphi 0, %s298
      %s313 = sphi 0, %s299
      %s317 = sphi 0, %s317
      %s319 = sphi 0, %s317
      %s320 = sphi 0, %s319
      %s334 = sphi 0, %s320
      %s342 = sphi 0, %s344
      %s345 = sphi 0, %s342
      %s346 = sphi 0, %s345
      %s362 = sphi 0, %s346
    $region4: #{tpu_custom_call.1} parent=1 // loop_header_branch
      %31 = sbr.rel (%p29) target = $region8
    $region5: #{tpu_custom_call.1} parent=1 // loop_body
      %s33 = ssub.s32 %s28, 1
      %s34 = ssub.s32 %s28, 2
      %s41 = sadd.s32 1, %s36
      %p42 = scmp.ge.s32.totalorder %s41, 2
      %s43 = scalar_select %p42, 0, %s41
      %s44 = sadd.s32 1, %s35
      %s45 = scalar_select %p42, %s44, %s35
      %p46 = scmp.ge.s32.totalorder %s45, 2
      %s47 = scalar_select %p46, 0, %s45
      %s48 = ssub.s32 %s35, %s47
      %s49 = ssub.s32 %s36, %s43
      %s50 = sor.u32 %s48, %s49
      %p51 = scmp.eq.s32.totalorder %s50, 0
      %s53 = sadd.s32 %s52, 1
      %s54 = scalar_select %p51, %s52, %s53
      %p57 = pneg %p51
      %p58 = scmp.eq.s32.totalorder %s28, 3
      %p59 = por %p57, %p58
      %p60 = scmp.ne.s32.totalorder %s52, %s55
      %p61 = scmp.eq.s32.totalorder %s28, 0
      %p62 = por %p60, %p61
      %p63 = scmp.ne.s32.totalorder %s52, %s55
      %p64 = scmp.eq.s32.totalorder %s33, 3
      %p65 = por %p63, %p64
      %p66 = scmp.ne.s32.totalorder %s55, %s56
      %p67 = scmp.eq.s32.totalorder %s33, 0
      %p68 = por %p66, %p67
      %p69 = scmp.ne.s32.totalorder %s55, %s56
      %p70 = scmp.eq.s32.totalorder %s34, 3
      %p71 = por %p69, %p70
      %p73 = scmp.ne.s32.totalorder %s56, %s72
      %p74 = scmp.eq.s32.totalorder %s34, 0
      %p75 = por %p73, %p74
      %s76 = ssub.s32 %s35, %s47
      %p77 = scmp.eq.s32.totalorder %s76, 0
      %s79 = sadd.s32 %s78, 1
      %s80 = scalar_select %p77, %s78, %s79
      %p83 = pneg %p77
      %p84 = scmp.eq.s32.totalorder %s28, 3
      %p85 = por %p83, %p84
      %p86 = scmp.ne.s32.totalorder %s78, %s81
      %p87 = scmp.eq.s32.totalorder %s28, 0
      %p88 = por %p86, %p87
      %p89 = scmp.ne.s32.totalorder %s78, %s81
      %p90 = scmp.eq.s32.totalorder %s33, 3
      %p91 = por %p89, %p90
      %p92 = scmp.ne.s32.totalorder %s81, %s82
      %p93 = scmp.eq.s32.totalorder %s33, 0
      %p94 = por %p92, %p93
      %p95 = scmp.ne.s32.totalorder %s81, %s82
      %p96 = scmp.eq.s32.totalorder %s34, 3
      %p97 = por %p95, %p96
      %p99 = scmp.ne.s32.totalorder %s82, %s98
      %p100 = scmp.eq.s32.totalorder %s34, 0
      %p101 = por %p99, %p100
      %s102 = ssub.s32 %s35, %s47
      %p103 = scmp.eq.s32.totalorder %s102, 0
      %s105 = sadd.s32 %s104, 1
      %s106 = scalar_select %p103, %s104, %s105
      %p109 = pneg %p103
      %p110 = scmp.eq.s32.totalorder %s28, 3
      %p111 = por %p109, %p110
      %p112 = scmp.ne.s32.totalorder %s104, %s107
      %p113 = scmp.eq.s32.totalorder %s28, 0
      %p114 = por %p112, %p113
      %p115 = scmp.ne.s32.totalorder %s104, %s107
      %p116 = scmp.eq.s32.totalorder %s33, 3
      %p117 = por %p115, %p116
      %p118 = scmp.ne.s32.totalorder %s107, %s108
      %p119 = scmp.eq.s32.totalorder %s33, 0
      %p120 = por %p118, %p119
      %p121 = scmp.ne.s32.totalorder %s107, %s108
      %p122 = scmp.eq.s32.totalorder %s34, 3
      %p123 = por %p121, %p122
      %p125 = scmp.ne.s32.totalorder %s108, %s124
      %p126 = scmp.eq.s32.totalorder %s34, 0
      %p127 = por %p125, %p126
      %s129 = sadd.s32 %s128, 1
      %p132 = scmp.eq.s32.totalorder %s28, 3
      %p133 = scmp.ne.s32.totalorder %s128, %s130
      %p134 = scmp.eq.s32.totalorder %s28, 0
      %p135 = por %p133, %p134
      %p136 = scmp.ne.s32.totalorder %s128, %s130
      %p137 = scmp.eq.s32.totalorder %s33, 3
      %p138 = por %p136, %p137
      %p139 = scmp.ne.s32.totalorder %s130, %s131
      %p140 = scmp.eq.s32.totalorder %s33, 0
      %p141 = por %p139, %p140
      %p142 = scmp.ne.s32.totalorder %s130, %s131
      %p143 = scmp.eq.s32.totalorder %s34, 3
      %p144 = por %p142, %p143
      %p146 = scmp.ne.s32.totalorder %s131, %s145
      %p147 = scmp.eq.s32.totalorder %s34, 0
      %p148 = por %p146, %p147
      %s150 = sadd.s32 %s149, 1
      %p153 = scmp.eq.s32.totalorder %s28, 3
      %p154 = scmp.ne.s32.totalorder %s149, %s151
      %p155 = scmp.eq.s32.totalorder %s28, 0
      %p156 = por %p154, %p155
      %p157 = scmp.ne.s32.totalorder %s149, %s151
      %p158 = scmp.eq.s32.totalorder %s33, 3
      %p159 = por %p157, %p158
      %p160 = scmp.ne.s32.totalorder %s151, %s152
      %p161 = scmp.eq.s32.totalorder %s33, 0
      %p162 = por %p160, %p161
      %p163 = scmp.ne.s32.totalorder %s151, %s152
      %p164 = scmp.eq.s32.totalorder %s34, 3
      %p165 = por %p163, %p164
      %p167 = scmp.ne.s32.totalorder %s152, %s166
      %p168 = scmp.eq.s32.totalorder %s34, 0
      %p169 = por %p167, %p168
      %s171 = sadd.s32 %s170, 1
      %p174 = scmp.eq.s32.totalorder %s28, 3
      %p175 = scmp.ne.s32.totalorder %s170, %s172
      %p176 = scmp.eq.s32.totalorder %s28, 0
      %p177 = por %p175, %p176
      %p178 = scmp.ne.s32.totalorder %s170, %s172
      %p179 = scmp.eq.s32.totalorder %s33, 3
      %p180 = por %p178, %p179
      %p181 = scmp.ne.s32.totalorder %s172, %s173
      %p182 = scmp.eq.s32.totalorder %s33, 0
      %p183 = por %p181, %p182
      %p184 = scmp.ne.s32.totalorder %s172, %s173
      %p185 = scmp.eq.s32.totalorder %s34, 3
      %p186 = por %p184, %p185
      %p188 = scmp.ne.s32.totalorder %s173, %s187
      %p189 = scmp.eq.s32.totalorder %s34, 0
      %p190 = por %p188, %p189
      %s192 = sadd.s32 %s191, 1
      %p195 = scmp.eq.s32.totalorder %s28, 3
      %p196 = scmp.ne.s32.totalorder %s191, %s193
      %p197 = scmp.eq.s32.totalorder %s28, 0
      %p198 = por %p196, %p197
      %p199 = scmp.ne.s32.totalorder %s191, %s193
      %p200 = scmp.eq.s32.totalorder %s33, 3
      %p201 = por %p199, %p200
      %p202 = scmp.ne.s32.totalorder %s193, %s194
      %p203 = scmp.eq.s32.totalorder %s33, 0
      %p204 = por %p202, %p203
      %p205 = scmp.ne.s32.totalorder %s193, %s194
      %p206 = scmp.eq.s32.totalorder %s34, 3
      %p207 = por %p205, %p206
      %p209 = scmp.ne.s32.totalorder %s194, %s208
      %p210 = scmp.eq.s32.totalorder %s34, 0
      %p211 = por %p209, %p210
      %s213 = sadd.s32 %s212, 1
      %p216 = scmp.eq.s32.totalorder %s28, 3
      %p217 = scmp.ne.s32.totalorder %s212, %s214
      %p218 = scmp.eq.s32.totalorder %s28, 0
      %p219 = por %p217, %p218
      %p220 = scmp.ne.s32.totalorder %s212, %s214
      %p221 = scmp.eq.s32.totalorder %s33, 3
      %p222 = por %p220, %p221
      %p223 = scmp.ne.s32.totalorder %s214, %s215
      %p224 = scmp.eq.s32.totalorder %s33, 0
      %p225 = por %p223, %p224
      %p226 = scmp.ne.s32.totalorder %s214, %s215
      %p227 = scmp.eq.s32.totalorder %s34, 3
      %p228 = por %p226, %p227
      %p230 = scmp.ne.s32.totalorder %s215, %s229
      %p231 = scmp.eq.s32.totalorder %s34, 0
      %p232 = por %p230, %p231
      %s234 = sadd.s32 %s233, 1
      %p237 = scmp.eq.s32.totalorder %s28, 3
      %p238 = scmp.ne.s32.totalorder %s233, %s235
      %p239 = scmp.eq.s32.totalorder %s28, 0
      %p240 = por %p238, %p239
      %p241 = scmp.ne.s32.totalorder %s233, %s235
      %p242 = scmp.eq.s32.totalorder %s33, 3
      %p243 = por %p241, %p242
      %p244 = scmp.ne.s32.totalorder %s235, %s236
      %p245 = scmp.eq.s32.totalorder %s33, 0
      %p246 = por %p244, %p245
      %p247 = scmp.ne.s32.totalorder %s235, %s236
      %p248 = scmp.eq.s32.totalorder %s34, 3
      %p249 = por %p247, %p248
      %p251 = scmp.ne.s32.totalorder %s236, %s250
      %p252 = scmp.eq.s32.totalorder %s34, 0
      %p253 = por %p251, %p252
      %s255 = sadd.s32 %s254, 1
      %p258 = scmp.eq.s32.totalorder %s28, 3
      %p259 = scmp.ne.s32.totalorder %s254, %s256
      %p260 = scmp.eq.s32.totalorder %s28, 0
      %p261 = por %p259, %p260
      %p262 = scmp.ne.s32.totalorder %s254, %s256
      %p263 = scmp.eq.s32.totalorder %s33, 3
      %p264 = por %p262, %p263
      %p265 = scmp.ne.s32.totalorder %s256, %s257
      %p266 = scmp.eq.s32.totalorder %s33, 0
      %p267 = por %p265, %p266
      %p268 = scmp.ne.s32.totalorder %s256, %s257
      %p269 = scmp.eq.s32.totalorder %s34, 3
      %p270 = por %p268, %p269
      %p272 = scmp.ne.s32.totalorder %s257, %s271
      %p273 = scmp.eq.s32.totalorder %s34, 0
      %p274 = por %p272, %p273
      %s276 = sadd.s32 %s275, 1
      %p279 = scmp.eq.s32.totalorder %s28, 3
      %p280 = scmp.ne.s32.totalorder %s275, %s277
      %p281 = scmp.eq.s32.totalorder %s28, 0
      %p282 = por %p280, %p281
      %p283 = scmp.ne.s32.totalorder %s275, %s277
      %p284 = scmp.eq.s32.totalorder %s33, 3
      %p285 = por %p283, %p284
      %p286 = scmp.ne.s32.totalorder %s277, %s278
      %p287 = scmp.eq.s32.totalorder %s33, 0
      %p288 = por %p286, %p287
      %p289 = scmp.ne.s32.totalorder %s277, %s278
      %p290 = scmp.eq.s32.totalorder %s34, 3
      %p291 = por %p289, %p290
      %p293 = scmp.ne.s32.totalorder %s278, %s292
      %p294 = scmp.eq.s32.totalorder %s34, 0
      %p295 = por %p293, %p294
      %s297 = sadd.s32 %s296, 1
      %p300 = scmp.eq.s32.totalorder %s28, 3
      %p301 = scmp.ne.s32.totalorder %s296, %s298
      %p302 = scmp.eq.s32.totalorder %s28, 0
      %p303 = por %p301, %p302
      %p304 = scmp.ne.s32.totalorder %s296, %s298
      %p305 = scmp.eq.s32.totalorder %s33, 3
      %p306 = por %p304, %p305
      %p307 = scmp.ne.s32.totalorder %s298, %s299
      %p308 = scmp.eq.s32.totalorder %s33, 0
      %p309 = por %p307, %p308
      %p310 = scmp.ne.s32.totalorder %s298, %s299
      %p311 = scmp.eq.s32.totalorder %s34, 3
      %p312 = por %p310, %p311
      %p314 = scmp.ne.s32.totalorder %s299, %s313
      %p315 = scmp.eq.s32.totalorder %s34, 0
      %p316 = por %p314, %p315
      %s318 = sadd.s32 %s317, 1
      %p321 = scmp.eq.s32.totalorder %s28, 3
      %p322 = scmp.ne.s32.totalorder %s317, %s319
      %p323 = scmp.eq.s32.totalorder %s28, 0
      %p324 = por %p322, %p323
      %p325 = scmp.ne.s32.totalorder %s317, %s319
      %p326 = scmp.eq.s32.totalorder %s33, 3
      %p327 = por %p325, %p326
      %p328 = scmp.ne.s32.totalorder %s319, %s320
      %p329 = scmp.eq.s32.totalorder %s33, 0
      %p330 = por %p328, %p329
      %p331 = scmp.ne.s32.totalorder %s319, %s320
      %p332 = scmp.eq.s32.totalorder %s34, 3
      %p333 = por %p331, %p332
      %p335 = scmp.ne.s32.totalorder %s320, %s334
      %p336 = scmp.eq.s32.totalorder %s34, 0
      %p337 = por %p335, %p336
      %s338 = ssub.s32 %s35, %s47
      %s339 = ssub.s32 %s36, %s43
      %s340 = sor.u32 %s338, %s339
      %p341 = scmp.eq.s32.totalorder %s340, 0
      %s343 = sadd.s32 %s342, 1
      %s344 = scalar_select %p341, %s342, %s343
      %p347 = pneg %p341
      %p348 = scmp.eq.s32.totalorder %s28, 3
      %p349 = por %p347, %p348
      %p350 = scmp.ne.s32.totalorder %s342, %s345
      %p351 = scmp.eq.s32.totalorder %s28, 0
      %p352 = por %p350, %p351
      %p353 = scmp.ne.s32.totalorder %s342, %s345
      %p354 = scmp.eq.s32.totalorder %s33, 3
      %p355 = por %p353, %p354
      %p356 = scmp.ne.s32.totalorder %s345, %s346
      %p357 = scmp.eq.s32.totalorder %s33, 0
      %p358 = por %p356, %p357
      %p359 = scmp.ne.s32.totalorder %s345, %s346
      %p360 = scmp.eq.s32.totalorder %s34, 3
      %p361 = por %p359, %p360
      %p363 = scmp.ne.s32.totalorder %s346, %s362
      %p364 = scmp.eq.s32.totalorder %s34, 0
      %p365 = por %p363, %p364
      %p366 = scmp.le.s32.totalorder 1, %s28
      %p367 = scmp.lt.s32.totalorder %s28, 5
      %p368 = pnand %p366, %p367
      %p369 = pneg %p368
      // Predicated region
      $region9: #{tpu_custom_call.1} parent=5 // pred_check
        _
      $region10: #{tpu_custom_call.1} parent=5 // pred_check_branch
        %371 = sbr.rel (%p368) target = $region12
      $region11: #{tpu_custom_call.1} parent=5 // pred_region
        %s372 = ssub.s32 %s28, 1
        // Predicated region
        $region13: #{tpu_custom_call.1} parent=11 // pred_check
          %p373 = pneg %p141
        $region14: #{tpu_custom_call.1} parent=11 // pred_check_branch
          %375 = sbr.rel (%p373) target = $region16
        $region15: #{tpu_custom_call.1} parent=11 // pred_region
          _
        $region16: #{tpu_custom_call.1} parent=11 // pred_fallthru
          _
        // Predicated region
        $region17: #{tpu_custom_call.1} parent=11 // pred_check
          %p376 = pneg %p162
        $region18: #{tpu_custom_call.1} parent=11 // pred_check_branch
          %378 = sbr.rel (%p376) target = $region20
        $region19: #{tpu_custom_call.1} parent=11 // pred_region
          _
        $region20: #{tpu_custom_call.1} parent=11 // pred_fallthru
          _
        // Predicated region
        $region21: #{tpu_custom_call.1} parent=11 // pred_check
          %p379 = pneg %p183
        $region22: #{tpu_custom_call.1} parent=11 // pred_check_branch
          %381 = sbr.rel (%p379) target = $region24
        $region23: #{tpu_custom_call.1} parent=11 // pred_region
          _
        $region24: #{tpu_custom_call.1} parent=11 // pred_fallthru
          _
        // Predicated region
        $region25: #{tpu_custom_call.1} parent=11 // pred_check
          %p382 = pneg %p204
        $region26: #{tpu_custom_call.1} parent=11 // pred_check_branch
          %384 = sbr.rel (%p382) target = $region28
        $region27: #{tpu_custom_call.1} parent=11 // pred_region
          _
        $region28: #{tpu_custom_call.1} parent=11 // pred_fallthru
          _
        // Predicated region
        $region29: #{tpu_custom_call.1} parent=11 // pred_check
          %p385 = pneg %p225
        $region30: #{tpu_custom_call.1} parent=11 // pred_check_branch
          %387 = sbr.rel (%p385) target = $region32
        $region31: #{tpu_custom_call.1} parent=11 // pred_region
          _
        $region32: #{tpu_custom_call.1} parent=11 // pred_fallthru
          _
        // Predicated region
        $region33: #{tpu_custom_call.1} parent=11 // pred_check
          %p388 = pneg %p246
        $region34: #{tpu_custom_call.1} parent=11 // pred_check_branch
          %390 = sbr.rel (%p388) target = $region36
        $region35: #{tpu_custom_call.1} parent=11 // pred_region
          _
        $region36: #{tpu_custom_call.1} parent=11 // pred_fallthru
          _
        // Predicated region
        $region37: #{tpu_custom_call.1} parent=11 // pred_check
          %p391 = pneg %p267
        $region38: #{tpu_custom_call.1} parent=11 // pred_check_branch
          %393 = sbr.rel (%p391) target = $region40
        $region39: #{tpu_custom_call.1} parent=11 // pred_region
          _
        $region40: #{tpu_custom_call.1} parent=11 // pred_fallthru
          _
        // Predicated region
        $region41: #{tpu_custom_call.1} parent=11 // pred_check
          %p394 = pneg %p288
        $region42: #{tpu_custom_call.1} parent=11 // pred_check_branch
          %396 = sbr.rel (%p394) target = $region44
        $region43: #{tpu_custom_call.1} parent=11 // pred_region
          _
        $region44: #{tpu_custom_call.1} parent=11 // pred_fallthru
          _
        // Predicated region
        $region45: #{tpu_custom_call.1} parent=11 // pred_check
          %p397 = pneg %p309
        $region46: #{tpu_custom_call.1} parent=11 // pred_check_branch
          %399 = sbr.rel (%p397) target = $region48
        $region47: #{tpu_custom_call.1} parent=11 // pred_region
          _
        $region48: #{tpu_custom_call.1} parent=11 // pred_fallthru
          _
        // Predicated region
        $region49: #{tpu_custom_call.1} parent=11 // pred_check
          %p400 = pneg %p330
        $region50: #{tpu_custom_call.1} parent=11 // pred_check_branch
          %402 = sbr.rel (%p400) target = $region52
        $region51: #{tpu_custom_call.1} parent=11 // pred_region
          _
        $region52: #{tpu_custom_call.1} parent=11 // pred_fallthru
          _
      $region12: #{tpu_custom_call.1} parent=5 // pred_fallthru
        _
      %p403 = scmp.lt.s32.totalorder %s28, 4
      // Predicated region
      $region53: #{tpu_custom_call.1} parent=5 // pred_check
        %p404 = pneg %p403
      $region54: #{tpu_custom_call.1} parent=5 // pred_check_branch
        %406 = sbr.rel (%p404) target = $region56
      $region55: #{tpu_custom_call.1} parent=5 // pred_region
        // Predicated region
        $region57: #{tpu_custom_call.1} parent=55 // pred_check
          %p407 = pneg %p62
        $region58: #{tpu_custom_call.1} parent=55 // pred_check_branch
          %409 = sbr.rel (%p407) target = $region60
        $region59: #{tpu_custom_call.1} parent=55 // pred_region
          %s410 = sand.u32 %s52, 1
          %s411 = scalar_lea.sflag [#allocation5], %s410
          %s412 = sand.u32 %s52, 1
          %s413 = smul.addr %s412, 32
          %s414 = scalar_lea.vmem [#allocation4], %s413
          %s415 = smul.u32 2, %s36
          %417 = vsyncadd %s411, 0
          %s418 = smul.addr %s35, 16
          %s419 = sadd.s32 %s415, %s418
          %s420 = smul.addr %s419, 4
          %s421 = scalar_lea.hbm %s0, %s420
          %s422 = sshll.u32 %s421, 4
          %s423 = int_to_ptr.hbm [resolvable:$true] %s422
          %s424 = sshll.u32 %s414, 4
          %s425 = int_to_ptr.vmem [resolvable:$true] %s424
          %430 = dma.hbm_to_vmem [thread:$0]  %s423, 512, %s425, %s411, 256, 128, 8
        $region60: #{tpu_custom_call.1} parent=55 // pred_fallthru
          _
        // Predicated region
        $region61: #{tpu_custom_call.1} parent=55 // pred_check
          %p431 = pneg %p88
        $region62: #{tpu_custom_call.1} parent=55 // pred_check_branch
          %433 = sbr.rel (%p431) target = $region64
        $region63: #{tpu_custom_call.1} parent=55 // pred_region
          %p434 = scmp.lt.s32.totalorder %s35, 1
          %s435 = scalar_select %p434, %s35, 1
          %s436 = smul.addr %s435, 8
          %s437 = smul.addr %s436, 4
          %s438 = scalar_lea.vmem %s1, %s437
        $region64: #{tpu_custom_call.1} parent=55 // pred_fallthru
          _
        // Predicated region
        $region65: #{tpu_custom_call.1} parent=55 // pred_check
          %p439 = pneg %p114
        $region66: #{tpu_custom_call.1} parent=55 // pred_check_branch
          %441 = sbr.rel (%p439) target = $region68
        $region67: #{tpu_custom_call.1} parent=55 // pred_region
          %s442 = sand.u32 %s104, 1
          %s443 = scalar_lea.sflag [#allocation8], %s442
          %s444 = sand.u32 %s104, 1
          %s445 = smul.addr %s444, 128
          %s446 = scalar_lea.vmem [#allocation7], %s445
          %448 = vsyncadd %s443, 0
          %s449 = smul.addr %s35, 32
          %s450 = smul.addr %s449, 4
          %s451 = scalar_lea.hbm %s2, %s450
          %s452 = sshll.u32 %s451, 4
          %s453 = int_to_ptr.hbm [resolvable:$true] %s452
          %s454 = sshll.u32 %s446, 4
          %s455 = int_to_ptr.vmem [resolvable:$true] %s454
          %460 = dma.hbm_to_vmem [thread:$0]  %s453, 2048, %s455, %s443, 128, 128, 8
        $region68: #{tpu_custom_call.1} parent=55 // pred_fallthru
          _
      $region56: #{tpu_custom_call.1} parent=5 // pred_fallthru
        _
      %p461 = scmp.le.s32.totalorder 1, %s28
      %p462 = scmp.lt.s32.totalorder %s28, 5
      %p463 = pnand %p461, %p462
      %p464 = pneg %p463
      // Predicated region
      $region69: #{tpu_custom_call.1} parent=5 // pred_check
        _
      $region70: #{tpu_custom_call.1} parent=5 // pred_check_branch
        %466 = sbr.rel (%p463) target = $region72
      $region71: #{tpu_custom_call.1} parent=5 // pred_region
        %s467 = ssub.s32 %s28, 1
        %s468 = sand.u32 %s55, 1
        %s469 = scalar_lea.sflag [#allocation5], %s468
        %s470 = sand.u32 %s55, 1
        %s471 = smul.addr %s470, 32
        %s472 = scalar_lea.vmem [#allocation4], %s471
        // Predicated region
        $region73: #{tpu_custom_call.1} parent=71 // pred_check
          %p473 = pneg %p68
        $region74: #{tpu_custom_call.1} parent=71 // pred_check_branch
          %475 = sbr.rel (%p473) target = $region76
        $region75: #{tpu_custom_call.1} parent=71 // pred_region
          %477 = dma.done %s469, 512
        $region76: #{tpu_custom_call.1} parent=71 // pred_fallthru
          _
        %s478 = sand.u32 %s107, 1
        %s479 = scalar_lea.sflag [#allocation8], %s478
        %s480 = sand.u32 %s107, 1
        %s481 = smul.addr %s480, 128
        %s482 = scalar_lea.vmem [#allocation7], %s481
        // Predicated region
        $region77: #{tpu_custom_call.1} parent=71 // pred_check
          %p483 = pneg %p120
        $region78: #{tpu_custom_call.1} parent=71 // pred_check_branch
          %485 = sbr.rel (%p483) target = $region80
        $region79: #{tpu_custom_call.1} parent=71 // pred_region
          %487 = dma.done %s479, 2048
        $region80: #{tpu_custom_call.1} parent=71 // pred_fallthru
          _
        %s488 = sand.u32 %s55, 1
        %s489 = scalar_lea.sflag [#allocation5], %s488
        %s490 = sand.u32 %s55, 1
        %s491 = smul.addr %s490, 32
        %s492 = scalar_lea.vmem [#allocation4], %s491
        %p493 = pneg %p68
        %p494 = pneg %p65
        %p495 = scmp.lt.s32.totalorder %s37, 1
        %s496 = scalar_select %p495, %s37, 1
        %s497 = smul.addr %s496, 8
        %s498 = smul.addr %s497, 4
        %s499 = scalar_lea.vmem %s1, %s498
        %p500 = pneg %p94
        %p501 = pneg %p91
        %s502 = sand.u32 %s107, 1
        %s503 = scalar_lea.sflag [#allocation8], %s502
        %s504 = sand.u32 %s107, 1
        %s505 = smul.addr %s504, 128
        %s506 = scalar_lea.vmem [#allocation7], %s505
        %p507 = pneg %p120
        %p508 = pneg %p117
        %p509 = pneg %p141
        %p510 = pneg %p138
        %p511 = pneg %p162
        %p512 = pneg %p159
        %p513 = pneg %p183
        %p514 = pneg %p180
        %p515 = pneg %p204
        %p516 = pneg %p201
        %p517 = pneg %p225
        %p518 = pneg %p222
        %p519 = pneg %p246
        %p520 = pneg %p243
        %p521 = pneg %p267
        %p522 = pneg %p264
        %p523 = pneg %p288
        %p524 = pneg %p285
        %p525 = pneg %p309
        %p526 = pneg %p306
        %p527 = pneg %p330
        %p528 = pneg %p327
        %p529 = pneg %p358
        %p530 = pneg %p355
        %s531 = sand.u32 %s345, 1
        %s532 = scalar_lea.sflag [#allocation6], %s531
        %s533 = sand.u32 %s345, 1
        %s534 = smul.addr %s533, 64
        %s535 = scalar_lea.vmem [#allocation9], %s534
        %s536 = smul.u32 2, %s38
        %p537 = scmp.lt.s32.totalorder %s37, 1
        %s538 = scalar_select %p537, %s37, 1
        %s539 = smul.addr %s538, 8
        %s540 = smul.addr %s539, 4
        %s541 = scalar_lea.vmem %s1, %s540
        %s542 = smul.u32 2, %s38
        %p545 = scmp.eq.s32.totalorder %s38, 0
        // Predicated region
        $region81: #{tpu_custom_call.1} parent=71 // pred_check
          %p546 = pneg %p545
        $region82: #{tpu_custom_call.1} parent=71 // pred_check_branch
          %548 = sbr.rel (%p546) target = $region84
        $region83: #{tpu_custom_call.1} parent=71 // pred_region
          %v549 = vld [vmem:[%s541] sm:$0xff]
          %v550 = vld [vmem:[%s541 + $0x8] sm:$0xff]
          %v551 = vld [vmem:[%s541 + $0x10] sm:$0xff]
          %v552 = vld [vmem:[%s541 + $0x18] sm:$0xff]
          %v553 = vld [vmem:[%s482] sm:$0xff]
          %v554 = vld [vmem:[%s482 + $0x8] sm:$0xff]
          %v555 = vld [vmem:[%s482 + $0x10] sm:$0xff]
          %v556 = vld [vmem:[%s482 + $0x18] sm:$0xff]
          %v557 = vld [vmem:[%s482 + $0x20] sm:$0xff]
          %v558 = vld [vmem:[%s482 + $0x28] sm:$0xff]
          %v559 = vld [vmem:[%s482 + $0x30] sm:$0xff]
          %v560 = vld [vmem:[%s482 + $0x38] sm:$0xff]
          %v561 = vld [vmem:[%s482 + $0x40] sm:$0xff]
          %v562 = vld [vmem:[%s482 + $0x48] sm:$0xff]
          %v563 = vld [vmem:[%s482 + $0x50] sm:$0xff]
          %v564 = vld [vmem:[%s482 + $0x58] sm:$0xff]
          %v565 = vld [vmem:[%s482 + $0x60] sm:$0xff]
          %v566 = vld [vmem:[%s482 + $0x68] sm:$0xff]
          %v567 = vld [vmem:[%s482 + $0x70] sm:$0xff]
          %v568 = vld [vmem:[%s482 + $0x78] sm:$0xff]
          %v569 = vld [vmem:[%s3] sm:$0xf]
          %v570 = vld [vmem:[%s3 + $0x4] sm:$0xf]
          %v571 = vld [vmem:[%s3 + $0x8] sm:$0xf]
          %v572 = vld [vmem:[%s3 + $0xc] sm:$0xf]
          %v573 = vld [vmem:[%s3 + $0x10] sm:$0xf]
          %v574 = vld [vmem:[%s3 + $0x14] sm:$0xf]
          %v575 = vld [vmem:[%s3 + $0x18] sm:$0xf]
          %v576 = vld [vmem:[%s3 + $0x1c] sm:$0xf]
          %v585 = vunpack.c.l.b16 %v569
          %v586 = vunpack.c.l.b16 %v570
          %v587 = vunpack.c.l.b16 %v571
          %v588 = vunpack.c.l.b16 %v572
          %v589 = vunpack.c.l.b16 %v573
          %v590 = vunpack.c.l.b16 %v574
          %v591 = vunpack.c.l.b16 %v575
          %v592 = vunpack.c.l.b16 %v576
          %v593 = vpack.c.b16 %v586, %v585
          %v594 = vpack.c.b16 %v588, %v587
          %v595 = vpack.c.b16 %v590, %v589
          %v596 = vpack.c.b16 %v592, %v591
          %v601 = vunpack.c.l.b16 %v549
          %v602 = vunpack.c.h.b16 %v549
          %v603 = vunpack.c.l.b16 %v550
          %v604 = vunpack.c.h.b16 %v550
          %v605 = vunpack.c.l.b16 %v551
          %v606 = vunpack.c.h.b16 %v551
          %v607 = vunpack.c.l.b16 %v552
          %v608 = vunpack.c.h.b16 %v552
          %v609 = vpack.c.b16 %v603, %v601
          %v610 = vpack.c.b16 %v604, %v602
          %v611 = vpack.c.b16 %v607, %v605
          %v612 = vpack.c.b16 %v608, %v606
          %vm617 = vcmask 261120
          %v619 = vsel %vm617, %v593, 0
          %v622 = vsel %vm617, %v594, 0
          %v625 = vsel %vm617, %v595, 0
          %v628 = vsel %vm617, %v596, 0
          %630 = vmatpush.bf16.msra.mxu0 0
          %631 = vmatpush.bf16.msra.mxu0 0
          %632 = vmatpush.bf16.msra.mxu0 0
          %633 = vmatpush.bf16.msra.mxu0 0
          %634 = vmatpush.bf16.msra.mxu0 0
          %635 = vmatpush.bf16.msra.mxu0 0
          %636 = vmatpush.bf16.msra.mxu0 %v611
          %637 = vmatpush.bf16.msra.mxu0 %v609
          %638 = vmatmul.bf16.gmra.mxu0 %v619
          %v639 = vpop.f32.mrf.mxu0
          %v640 = vadd.f32 0.0, %v639
          %v641 = vpop.f32.mrf.mxu0
          %v642 = vadd.f32 0.0, %v641
          %643 = vmatmul.bf16.gmra.mxu0 %v622
          %v644 = vpop.f32.mrf.mxu0
          %v645 = vadd.f32 0.0, %v644
          %v646 = vpop.f32.mrf.mxu0
          %v647 = vadd.f32 0.0, %v646
          %648 = vmatmul.bf16.gmra.mxu0 %v625
          %v649 = vpop.f32.mrf.mxu0
          %v650 = vadd.f32 0.0, %v649
          %v651 = vpop.f32.mrf.mxu0
          %v652 = vadd.f32 0.0, %v651
          %653 = vmatmul.bf16.gmra.mxu0 %v628
          %v654 = vpop.f32.mrf.mxu0
          %v655 = vadd.f32 0.0, %v654
          %v656 = vpop.f32.mrf.mxu0
          %v657 = vadd.f32 0.0, %v656
          %658 = vdwg.mxu0
          %659 = vmatpush.bf16.msra.mxu0 0
          %660 = vmatpush.bf16.msra.mxu0 0
          %661 = vmatpush.bf16.msra.mxu0 0
          %662 = vmatpush.bf16.msra.mxu0 0
          %663 = vmatpush.bf16.msra.mxu0 0
          %664 = vmatpush.bf16.msra.mxu0 0
          %665 = vmatpush.bf16.msra.mxu0 %v612
          %666 = vmatpush.bf16.msra.mxu0 %v610
          %667 = vmatmul.bf16.gmra.mxu0 %v619
          %v668 = vpop.f32.mrf.mxu0
          %v669 = vadd.f32 0.0, %v668
          %v670 = vpop.f32.mrf.mxu0
          %v671 = vadd.f32 0.0, %v670
          %672 = vmatmul.bf16.gmra.mxu0 %v622
          %v673 = vpop.f32.mrf.mxu0
          %v674 = vadd.f32 0.0, %v673
          %v675 = vpop.f32.mrf.mxu0
          %v676 = vadd.f32 0.0, %v675
          %677 = vmatmul.bf16.gmra.mxu0 %v625
          %v678 = vpop.f32.mrf.mxu0
          %v679 = vadd.f32 0.0, %v678
          %v680 = vpop.f32.mrf.mxu0
          %v681 = vadd.f32 0.0, %v680
          %682 = vmatmul.bf16.gmra.mxu0 %v628
          %v683 = vpop.f32.mrf.mxu0
          %v684 = vadd.f32 0.0, %v683
          %v685 = vpop.f32.mrf.mxu0
          %v686 = vadd.f32 0.0, %v685
          %687 = vdwg.mxu0
          %v688 = vpack.c.bf16 %v669, %v640
          %v689 = vpack.c.bf16 %v671, %v642
          %v690 = vpack.c.bf16 %v674, %v645
          %v691 = vpack.c.bf16 %v676, %v647
          %692 = vst [vmem:[#allocation2] sm:$0xff] %v688
          %693 = vst [vmem:[#allocation2 + $0x8] sm:$0xff] %v689
          %694 = vst [vmem:[#allocation2 + $0x10] sm:$0xff] %v690
          %695 = vst [vmem:[#allocation2 + $0x18] sm:$0xff] %v691
          %v696 = vld [vmem:[%s4] sm:$0xf]
          %v697 = vld [vmem:[%s4 + $0x4] sm:$0xf]
          %v698 = vld [vmem:[%s4 + $0x8] sm:$0xf]
          %v699 = vld [vmem:[%s4 + $0xc] sm:$0xf]
          %v704 = vunpack.c.l.b16 %v696
          %v705 = vunpack.c.l.b16 %v697
          %v706 = vunpack.c.l.b16 %v698
          %v707 = vunpack.c.l.b16 %v699
          %v708 = vpack.c.b16 %v705, %v704
          %v709 = vpack.c.b16 %v707, %v706
          %v728 = vunpack.c.l.b16 %v553
          %v729 = vunpack.c.h.b16 %v553
          %v730 = vunpack.c.l.b16 %v554
          %v731 = vunpack.c.h.b16 %v554
          %v732 = vunpack.c.l.b16 %v555
          %v733 = vunpack.c.h.b16 %v555
          %v734 = vunpack.c.l.b16 %v556
          %v735 = vunpack.c.h.b16 %v556
          %v736 = vunpack.c.l.b16 %v557
          %v737 = vunpack.c.h.b16 %v557
          %v738 = vunpack.c.l.b16 %v558
          %v739 = vunpack.c.h.b16 %v558
          %v740 = vunpack.c.l.b16 %v559
          %v741 = vunpack.c.h.b16 %v559
          %v742 = vunpack.c.l.b16 %v560
          %v743 = vunpack.c.h.b16 %v560
          %v744 = vunpack.c.l.b16 %v561
          %v745 = vunpack.c.h.b16 %v561
          %v746 = vunpack.c.l.b16 %v562
          %v747 = vunpack.c.h.b16 %v562
          %v748 = vunpack.c.l.b16 %v563
          %v749 = vunpack.c.h.b16 %v563
          %v750 = vunpack.c.l.b16 %v564
          %v751 = vunpack.c.h.b16 %v564
          %v752 = vunpack.c.l.b16 %v565
          %v753 = vunpack.c.h.b16 %v565
          %v754 = vunpack.c.l.b16 %v566
          %v755 = vunpack.c.h.b16 %v566
          %v756 = vunpack.c.l.b16 %v567
          %v757 = vunpack.c.h.b16 %v567
          %v758 = vunpack.c.l.b16 %v568
          %v759 = vunpack.c.h.b16 %v568
          %v760 = vpack.c.b16 %v730, %v728
          %v761 = vpack.c.b16 %v731, %v729
          %v762 = vpack.c.b16 %v734, %v732
          %v763 = vpack.c.b16 %v735, %v733
          %v764 = vpack.c.b16 %v738, %v736
          %v765 = vpack.c.b16 %v739, %v737
          %v766 = vpack.c.b16 %v742, %v740
          %v767 = vpack.c.b16 %v743, %v741
          %v768 = vpack.c.b16 %v746, %v744
          %v769 = vpack.c.b16 %v747, %v745
          %v770 = vpack.c.b16 %v750, %v748
          %v771 = vpack.c.b16 %v751, %v749
          %v772 = vpack.c.b16 %v754, %v752
          %v773 = vpack.c.b16 %v755, %v753
          %v774 = vpack.c.b16 %v758, %v756
          %v775 = vpack.c.b16 %v759, %v757
          %792 = vmatpush.bf16.msra.mxu0 %v774
          %793 = vmatpush.bf16.msra.mxu0 %v772
          %794 = vmatpush.bf16.msra.mxu0 %v770
          %795 = vmatpush.bf16.msra.mxu0 %v768
          %796 = vmatpush.bf16.msra.mxu0 %v766
          %797 = vmatpush.bf16.msra.mxu0 %v764
          %798 = vmatpush.bf16.msra.mxu0 %v762
          %799 = vmatpush.bf16.msra.mxu0 %v760
          %800 = vmatmul.bf16.gmra.mxu0 %v708
          %v801 = vpop.f32.mrf.mxu0
          %v802 = vadd.f32 0.0, %v801
          %v803 = vpop.f32.mrf.mxu0
          %v804 = vadd.f32 0.0, %v803
          %805 = vmatmul.bf16.gmra.mxu0 %v709
          %v806 = vpop.f32.mrf.mxu0
          %v807 = vadd.f32 0.0, %v806
          %v808 = vpop.f32.mrf.mxu0
          %v809 = vadd.f32 0.0, %v808
          %810 = vdwg.mxu0
          %811 = vmatpush.bf16.msra.mxu0 %v775
          %812 = vmatpush.bf16.msra.mxu0 %v773
          %813 = vmatpush.bf16.msra.mxu0 %v771
          %814 = vmatpush.bf16.msra.mxu0 %v769
          %815 = vmatpush.bf16.msra.mxu0 %v767
          %816 = vmatpush.bf16.msra.mxu0 %v765
          %817 = vmatpush.bf16.msra.mxu0 %v763
          %818 = vmatpush.bf16.msra.mxu0 %v761
          %819 = vmatmul.bf16.gmra.mxu0 %v708
          %v820 = vpop.f32.mrf.mxu0
          %v821 = vadd.f32 0.0, %v820
          %v822 = vpop.f32.mrf.mxu0
          %v823 = vadd.f32 0.0, %v822
          %824 = vmatmul.bf16.gmra.mxu0 %v709
          %v825 = vpop.f32.mrf.mxu0
          %v826 = vadd.f32 0.0, %v825
          %v827 = vpop.f32.mrf.mxu0
          %v828 = vadd.f32 0.0, %v827
          %829 = vdwg.mxu0
          %v830 = vadd.f32 %v650, %v802
          %v831 = vadd.f32 %v679, %v821
          %v832 = vadd.f32 %v652, %v804
          %v833 = vadd.f32 %v681, %v823
          %v834 = vadd.f32 %v655, %v807
          %v835 = vadd.f32 %v684, %v826
          %v836 = vadd.f32 %v657, %v809
          %v837 = vadd.f32 %v686, %v828
          %v838 = vpack.c.bf16 %v831, %v830
          %v839 = vpack.c.bf16 %v833, %v832
          %v840 = vpack.c.bf16 %v835, %v834
          %v841 = vpack.c.bf16 %v837, %v836
          %842 = vst [vmem:[#allocation3] sm:$0xff] %v838
          %843 = vst [vmem:[#allocation3 + $0x8] sm:$0xff] %v839
          %844 = vst [vmem:[#allocation3 + $0x10] sm:$0xff] %v840
          %845 = vst [vmem:[#allocation3 + $0x18] sm:$0xff] %v841
        $region84: #{tpu_custom_call.1} parent=71 // pred_fallthru
          _
        %v846 = vld [vmem:[%s472] sm:$0xff]
        %v847 = vld [vmem:[%s472 + $0x8] sm:$0xff]
        %v848 = vld [vmem:[%s472 + $0x10] sm:$0xff]
        %v849 = vld [vmem:[%s472 + $0x18] sm:$0xff]
        %v850 = vld [vmem:[#allocation2] sm:$0xff]
        %v851 = vld [vmem:[#allocation2 + $0x8] sm:$0xff]
        %v852 = vld [vmem:[#allocation2 + $0x10] sm:$0xff]
        %v853 = vld [vmem:[#allocation2 + $0x18] sm:$0xff]
        %v854 = vld [vmem:[#allocation3] sm:$0xff]
        %v855 = vld [vmem:[#allocation3 + $0x8] sm:$0xff]
        %v856 = vld [vmem:[#allocation3 + $0x10] sm:$0xff]
        %v857 = vld [vmem:[#allocation3 + $0x18] sm:$0xff]
        %v858 = vld [vmem:[%s5] sm:$0xf]
        %v859 = vld [vmem:[%s5 + $0x4] sm:$0xf]
        %v860 = vld [vmem:[%s5 + $0x8] sm:$0xf]
        %v861 = vld [vmem:[%s5 + $0xc] sm:$0xf]
        %v862 = vld [vmem:[%s5 + $0x10] sm:$0xf]
        %v863 = vld [vmem:[%s5 + $0x14] sm:$0xf]
        %v864 = vld [vmem:[%s5 + $0x18] sm:$0xf]
        %v865 = vld [vmem:[%s5 + $0x1c] sm:$0xf]
        %v866 = vld [vmem:[%s5 + $0x20] sm:$0xf]
        %v867 = vld [vmem:[%s5 + $0x24] sm:$0xf]
        %v868 = vld [vmem:[%s5 + $0x28] sm:$0xf]
        %v869 = vld [vmem:[%s5 + $0x2c] sm:$0xf]
        %v882 = vunpack.c.l.b16 %v858
        %v883 = vunpack.c.l.b16 %v859
        %v884 = vunpack.c.l.b16 %v860
        %v885 = vunpack.c.l.b16 %v861
        %v886 = vunpack.c.l.b16 %v862
        %v887 = vunpack.c.l.b16 %v863
        %v888 = vunpack.c.l.b16 %v864
        %v889 = vunpack.c.l.b16 %v865
        %v890 = vunpack.c.l.b16 %v866
        %v891 = vunpack.c.l.b16 %v867
        %v892 = vunpack.c.l.b16 %v868
        %v893 = vunpack.c.l.b16 %v869
        %v894 = vpack.c.b16 %v883, %v882
        %v895 = vpack.c.b16 %v885, %v884
        %v896 = vpack.c.b16 %v887, %v886
        %v897 = vpack.c.b16 %v889, %v888
        %v898 = vpack.c.b16 %v891, %v890
        %v899 = vpack.c.b16 %v893, %v892
        %v904 = vunpack.c.l.b16 %v846
        %v905 = vunpack.c.h.b16 %v846
        %v906 = vunpack.c.l.b16 %v847
        %v907 = vunpack.c.h.b16 %v847
        %v908 = vunpack.c.l.b16 %v848
        %v909 = vunpack.c.h.b16 %v848
        %v910 = vunpack.c.l.b16 %v849
        %v911 = vunpack.c.h.b16 %v849
        %v912 = vpack.c.b16 %v906, %v904
        %v913 = vpack.c.b16 %v907, %v905
        %v914 = vpack.c.b16 %v910, %v908
        %v915 = vpack.c.b16 %v911, %v909
        %vm920 = vcmask 261120
        %v922 = vsel %vm920, %v894, 0
        %v925 = vsel %vm920, %v895, 0
        %v928 = vsel %vm920, %v896, 0
        %v931 = vsel %vm920, %v897, 0
        %v934 = vsel %vm920, %v898, 0
        %v937 = vsel %vm920, %v899, 0
        %939 = vmatpush.bf16.msra.mxu0 0
        %940 = vmatpush.bf16.msra.mxu0 0
        %941 = vmatpush.bf16.msra.mxu0 0
        %942 = vmatpush.bf16.msra.mxu0 0
        %943 = vmatpush.bf16.msra.mxu0 0
        %944 = vmatpush.bf16.msra.mxu0 0
        %945 = vmatpush.bf16.msra.mxu0 %v914
        %946 = vmatpush.bf16.msra.mxu0 %v912
        %947 = vmatmul.bf16.gmra.mxu0 %v922
        %v948 = vpop.f32.mrf.mxu0
        %v949 = vadd.f32 0.0, %v948
        %v950 = vpop.f32.mrf.mxu0
        %v951 = vadd.f32 0.0, %v950
        %952 = vmatmul.bf16.gmra.mxu0 %v925
        %v953 = vpop.f32.mrf.mxu0
        %v954 = vadd.f32 0.0, %v953
        %v955 = vpop.f32.mrf.mxu0
        %v956 = vadd.f32 0.0, %v955
        %957 = vmatmul.bf16.gmra.mxu0 %v928
        %v958 = vpop.f32.mrf.mxu0
        %v959 = vadd.f32 0.0, %v958
        %v960 = vpop.f32.mrf.mxu0
        %v961 = vadd.f32 0.0, %v960
        %962 = vmatmul.bf16.gmra.mxu0 %v931
        %v963 = vpop.f32.mrf.mxu0
        %v964 = vadd.f32 0.0, %v963
        %v965 = vpop.f32.mrf.mxu0
        %v966 = vadd.f32 0.0, %v965
        %967 = vmatmul.bf16.gmra.mxu0 %v934
        %v968 = vpop.f32.mrf.mxu0
        %v969 = vadd.f32 0.0, %v968
        %v970 = vpop.f32.mrf.mxu0
        %v971 = vadd.f32 0.0, %v970
        %972 = vmatmul.bf16.gmra.mxu0 %v937
        %v973 = vpop.f32.mrf.mxu0
        %v974 = vadd.f32 0.0, %v973
        %v975 = vpop.f32.mrf.mxu0
        %v976 = vadd.f32 0.0, %v975
        %977 = vdwg.mxu0
        %978 = vmatpush.bf16.msra.mxu0 0
        %979 = vmatpush.bf16.msra.mxu0 0
        %980 = vmatpush.bf16.msra.mxu0 0
        %981 = vmatpush.bf16.msra.mxu0 0
        %982 = vmatpush.bf16.msra.mxu0 0
        %983 = vmatpush.bf16.msra.mxu0 0
        %984 = vmatpush.bf16.msra.mxu0 %v915
        %985 = vmatpush.bf16.msra.mxu0 %v913
        %986 = vmatmul.bf16.gmra.mxu0 %v922
        %v987 = vpop.f32.mrf.mxu0
        %v988 = vadd.f32 0.0, %v987
        %v989 = vpop.f32.mrf.mxu0
        %v990 = vadd.f32 0.0, %v989
        %991 = vmatmul.bf16.gmra.mxu0 %v925
        %v992 = vpop.f32.mrf.mxu0
        %v993 = vadd.f32 0.0, %v992
        %v994 = vpop.f32.mrf.mxu0
        %v995 = vadd.f32 0.0, %v994
        %996 = vmatmul.bf16.gmra.mxu0 %v928
        %v997 = vpop.f32.mrf.mxu0
        %v998 = vadd.f32 0.0, %v997
        %v999 = vpop.f32.mrf.mxu0
        %v1000 = vadd.f32 0.0, %v999
        %1001 = vmatmul.bf16.gmra.mxu0 %v931
        %v1002 = vpop.f32.mrf.mxu0
        %v1003 = vadd.f32 0.0, %v1002
        %v1004 = vpop.f32.mrf.mxu0
        %v1005 = vadd.f32 0.0, %v1004
        %1006 = vmatmul.bf16.gmra.mxu0 %v934
        %v1007 = vpop.f32.mrf.mxu0
        %v1008 = vadd.f32 0.0, %v1007
        %v1009 = vpop.f32.mrf.mxu0
        %v1010 = vadd.f32 0.0, %v1009
        %1011 = vmatmul.bf16.gmra.mxu0 %v937
        %v1012 = vpop.f32.mrf.mxu0
        %v1013 = vadd.f32 0.0, %v1012
        %v1014 = vpop.f32.mrf.mxu0
        %v1015 = vadd.f32 0.0, %v1014
        %1016 = vdwg.mxu0
        %1017 = vxpose.xlu0.b32.start [1/16] %v949, 128
        %1018 = vxpose.xlu0.b32.cont [2/16] %v951, 128
        %1019 = vxpose.xlu0.b32.cont [3/16] %v954, 128
        %1020 = vxpose.xlu0.b32.cont [4/16] %v956, 128
        %1021 = vxpose.xlu0.b32.cont [5/16] 0.0, 128
        %1022 = vxpose.xlu0.b32.cont [6/16] 0.0, 128
        %1023 = vxpose.xlu0.b32.cont [7/16] 0.0, 128
        %1024 = vxpose.xlu0.b32.cont [8/16] 0.0, 128
        %1025 = vxpose.xlu0.b32.cont [9/16] 0.0, 128
        %1026 = vxpose.xlu0.b32.cont [10/16] 0.0, 128
        %1027 = vxpose.xlu0.b32.cont [11/16] 0.0, 128
        %1028 = vxpose.xlu0.b32.cont [12/16] 0.0, 128
        %1029 = vxpose.xlu0.b32.cont [13/16] 0.0, 128
        %1030 = vxpose.xlu0.b32.cont [14/16] 0.0, 128
        %1031 = vxpose.xlu0.b32.cont [15/16] 0.0, 128
        %1032 = vxpose.xlu0.b32.end [16/16] 0.0, 128
        %v1033 = vpop.trf.xlu0
        %v1034 = vpop.trf.xlu0
        %v1035 = vpop.trf.xlu0
        %v1036 = vpop.trf.xlu0
        %v1037 = vpop.trf.xlu0
        %v1038 = vpop.trf.xlu0
        %v1039 = vpop.trf.xlu0
        %v1040 = vpop.trf.xlu0
        %v1041 = vpop.trf.xlu0
        %v1042 = vpop.trf.xlu0
        %v1043 = vpop.trf.xlu0
        %v1044 = vpop.trf.xlu0
        %v1045 = vpop.trf.xlu0
        %v1046 = vpop.trf.xlu0
        %v1047 = vpop.trf.xlu0
        %v1048 = vpop.trf.xlu0
        %1049 = vxpose.xlu0.b32.start [1/16] %v988, 128
        %1050 = vxpose.xlu0.b32.cont [2/16] %v990, 128
        %1051 = vxpose.xlu0.b32.cont [3/16] %v993, 128
        %1052 = vxpose.xlu0.b32.cont [4/16] %v995, 128
        %1053 = vxpose.xlu0.b32.cont [5/16] 0.0, 128
        %1054 = vxpose.xlu0.b32.cont [6/16] 0.0, 128
        %1055 = vxpose.xlu0.b32.cont [7/16] 0.0, 128
        %1056 = vxpose.xlu0.b32.cont [8/16] 0.0, 128
        %1057 = vxpose.xlu0.b32.cont [9/16] 0.0, 128
        %1058 = vxpose.xlu0.b32.cont [10/16] 0.0, 128
        %1059 = vxpose.xlu0.b32.cont [11/16] 0.0, 128
        %1060 = vxpose.xlu0.b32.cont [12/16] 0.0, 128
        %1061 = vxpose.xlu0.b32.cont [13/16] 0.0, 128
        %1062 = vxpose.xlu0.b32.cont [14/16] 0.0, 128
        %1063 = vxpose.xlu0.b32.cont [15/16] 0.0, 128
        %1064 = vxpose.xlu0.b32.end [16/16] 0.0, 128
        %v1065 = vpop.trf.xlu0
        %v1066 = vpop.trf.xlu0
        %v1067 = vpop.trf.xlu0
        %v1068 = vpop.trf.xlu0
        %v1069 = vpop.trf.xlu0
        %v1070 = vpop.trf.xlu0
        %v1071 = vpop.trf.xlu0
        %v1072 = vpop.trf.xlu0
        %v1073 = vpop.trf.xlu0
        %v1074 = vpop.trf.xlu0
        %v1075 = vpop.trf.xlu0
        %v1076 = vpop.trf.xlu0
        %v1077 = vpop.trf.xlu0
        %v1078 = vpop.trf.xlu0
        %v1079 = vpop.trf.xlu0
        %v1080 = vpop.trf.xlu0
        %v1081 = vpack.c.bf16 %v1033, %v1033
        %v1082 = vpack.c.bf16 %v1034, %v1034
        %v1083 = vpack.c.bf16 %v1035, %v1035
        %v1084 = vpack.c.bf16 %v1036, %v1036
        %v1085 = vpack.c.bf16 %v1037, %v1037
        %v1086 = vpack.c.bf16 %v1038, %v1038
        %v1087 = vpack.c.bf16 %v1039, %v1039
        %v1088 = vpack.c.bf16 %v1040, %v1040
        %v1089 = vpack.c.bf16 %v1041, %v1041
        %v1090 = vpack.c.bf16 %v1042, %v1042
        %v1091 = vpack.c.bf16 %v1043, %v1043
        %v1092 = vpack.c.bf16 %v1044, %v1044
        %v1093 = vpack.c.bf16 %v1045, %v1045
        %v1094 = vpack.c.bf16 %v1046, %v1046
        %v1095 = vpack.c.bf16 %v1047, %v1047
        %v1096 = vpack.c.bf16 %v1048, %v1048
        %v1097 = vpack.c.bf16 %v1065, %v1065
        %v1098 = vpack.c.bf16 %v1066, %v1066
        %v1099 = vpack.c.bf16 %v1067, %v1067
        %v1100 = vpack.c.bf16 %v1068, %v1068
        %v1101 = vpack.c.bf16 %v1069, %v1069
        %v1102 = vpack.c.bf16 %v1070, %v1070
        %v1103 = vpack.c.bf16 %v1071, %v1071
        %v1104 = vpack.c.bf16 %v1072, %v1072
        %v1105 = vpack.c.bf16 %v1073, %v1073
        %v1106 = vpack.c.bf16 %v1074, %v1074
        %v1107 = vpack.c.bf16 %v1075, %v1075
        %v1108 = vpack.c.bf16 %v1076, %v1076
        %v1109 = vpack.c.bf16 %v1077, %v1077
        %v1110 = vpack.c.bf16 %v1078, %v1078
        %v1111 = vpack.c.bf16 %v1079, %v1079
        %v1112 = vpack.c.bf16 %v1080, %v1080
        %v1145 = vunpack.c.l.b16 %v1081
        %v1146 = vunpack.c.l.b16 %v1082
        %v1147 = vunpack.c.l.b16 %v1083
        %v1148 = vunpack.c.l.b16 %v1084
        %v1149 = vunpack.c.l.b16 %v1085
        %v1150 = vunpack.c.l.b16 %v1086
        %v1151 = vunpack.c.l.b16 %v1087
        %v1152 = vunpack.c.l.b16 %v1088
        %v1153 = vunpack.c.l.b16 %v1089
        %v1154 = vunpack.c.l.b16 %v1090
        %v1155 = vunpack.c.l.b16 %v1091
        %v1156 = vunpack.c.l.b16 %v1092
        %v1157 = vunpack.c.l.b16 %v1093
        %v1158 = vunpack.c.l.b16 %v1094
        %v1159 = vunpack.c.l.b16 %v1095
        %v1160 = vunpack.c.l.b16 %v1096
        %v1161 = vunpack.c.l.b16 %v1097
        %v1162 = vunpack.c.l.b16 %v1098
        %v1163 = vunpack.c.l.b16 %v1099
        %v1164 = vunpack.c.l.b16 %v1100
        %v1165 = vunpack.c.l.b16 %v1101
        %v1166 = vunpack.c.l.b16 %v1102
        %v1167 = vunpack.c.l.b16 %v1103
        %v1168 = vunpack.c.l.b16 %v1104
        %v1169 = vunpack.c.l.b16 %v1105
        %v1170 = vunpack.c.l.b16 %v1106
        %v1171 = vunpack.c.l.b16 %v1107
        %v1172 = vunpack.c.l.b16 %v1108
        %v1173 = vunpack.c.l.b16 %v1109
        %v1174 = vunpack.c.l.b16 %v1110
        %v1175 = vunpack.c.l.b16 %v1111
        %v1176 = vunpack.c.l.b16 %v1112
        %v1177 = vpack.c.b16 %v1146, %v1145
        %v1178 = vpack.c.b16 %v1148, %v1147
        %v1179 = vpack.c.b16 %v1150, %v1149
        %v1180 = vpack.c.b16 %v1152, %v1151
        %v1181 = vpack.c.b16 %v1154, %v1153
        %v1182 = vpack.c.b16 %v1156, %v1155
        %v1183 = vpack.c.b16 %v1158, %v1157
        %v1184 = vpack.c.b16 %v1160, %v1159
        %v1185 = vpack.c.b16 %v1162, %v1161
        %v1186 = vpack.c.b16 %v1164, %v1163
        %v1187 = vpack.c.b16 %v1166, %v1165
        %v1188 = vpack.c.b16 %v1168, %v1167
        %v1189 = vpack.c.b16 %v1170, %v1169
        %v1190 = vpack.c.b16 %v1172, %v1171
        %v1191 = vpack.c.b16 %v1174, %v1173
        %v1192 = vpack.c.b16 %v1176, %v1175
        %v1194 = vunpack.c.l.b16 %v850
        %v1195 = vunpack.c.h.b16 %v850
        %v1196 = vpack.c.b16 %v1194, %v1194
        %v1197 = vpack.c.b16 %v1195, %v1195
        %vm1198 = vcmask 64512
        %v1200 = vsel %vm1198, %v1177, 0
        %v1203 = vsel %vm1198, %v1178, 0
        %v1206 = vsel %vm1198, %v1179, 0
        %v1209 = vsel %vm1198, %v1180, 0
        %v1212 = vsel %vm1198, %v1181, 0
        %v1215 = vsel %vm1198, %v1182, 0
        %v1218 = vsel %vm1198, %v1183, 0
        %v1221 = vsel %vm1198, %v1184, 0
        %v1224 = vsel %vm1198, %v1185, 0
        %v1227 = vsel %vm1198, %v1186, 0
        %v1230 = vsel %vm1198, %v1187, 0
        %v1233 = vsel %vm1198, %v1188, 0
        %v1236 = vsel %vm1198, %v1189, 0
        %v1239 = vsel %vm1198, %v1190, 0
        %v1242 = vsel %vm1198, %v1191, 0
        %v1245 = vsel %vm1198, %v1192, 0
        %vm1247 = vcmask 1043456
        %v1249 = vsel %vm1247, %v1196, 0
        %v1252 = vsel %vm1247, %v1197, 0
        %1254 = vmatpush.bf16.msra.mxu0 0
        %1255 = vmatpush.bf16.msra.mxu0 0
        %1256 = vmatpush.bf16.msra.mxu0 0
        %1257 = vmatpush.bf16.msra.mxu0 0
        %1258 = vmatpush.bf16.msra.mxu0 0
        %1259 = vmatpush.bf16.msra.mxu0 0
        %1260 = vmatpush.bf16.msra.mxu0 0
        %1261 = vmatpush.bf16.msra.mxu0 %v1249
        %1262 = vmatmul.bf16.gmra.mxu0 %v1200
        %v1263 = vpop.f32.mrf.mxu0
        %v1264 = vadd.f32 0.0, %v1263
        %v1265 = vpop.f32.mrf.mxu0
        %v1266 = vadd.f32 0.0, %v1265
        %1267 = vmatmul.bf16.gmra.mxu0 %v1203
        %v1268 = vpop.f32.mrf.mxu0
        %v1269 = vadd.f32 0.0, %v1268
        %v1270 = vpop.f32.mrf.mxu0
        %v1271 = vadd.f32 0.0, %v1270
        %1272 = vmatmul.bf16.gmra.mxu0 %v1206
        %v1273 = vpop.f32.mrf.mxu0
        %v1274 = vadd.f32 0.0, %v1273
        %v1275 = vpop.f32.mrf.mxu0
        %v1276 = vadd.f32 0.0, %v1275
        %1277 = vmatmul.bf16.gmra.mxu0 %v1209
        %v1278 = vpop.f32.mrf.mxu0
        %v1279 = vadd.f32 0.0, %v1278
        %v1280 = vpop.f32.mrf.mxu0
        %v1281 = vadd.f32 0.0, %v1280
        %1282 = vmatmul.bf16.gmra.mxu0 %v1212
        %v1283 = vpop.f32.mrf.mxu0
        %v1284 = vadd.f32 0.0, %v1283
        %v1285 = vpop.f32.mrf.mxu0
        %v1286 = vadd.f32 0.0, %v1285
        %1287 = vmatmul.bf16.gmra.mxu0 %v1215
        %v1288 = vpop.f32.mrf.mxu0
        %v1289 = vadd.f32 0.0, %v1288
        %v1290 = vpop.f32.mrf.mxu0
        %v1291 = vadd.f32 0.0, %v1290
        %1292 = vmatmul.bf16.gmra.mxu0 %v1218
        %v1293 = vpop.f32.mrf.mxu0
        %v1294 = vadd.f32 0.0, %v1293
        %v1295 = vpop.f32.mrf.mxu0
        %v1296 = vadd.f32 0.0, %v1295
        %1297 = vmatmul.bf16.gmra.mxu0 %v1221
        %v1298 = vpop.f32.mrf.mxu0
        %v1299 = vadd.f32 0.0, %v1298
        %v1300 = vpop.f32.mrf.mxu0
        %v1301 = vadd.f32 0.0, %v1300
        %1302 = vmatmul.bf16.gmra.mxu0 %v1224
        %v1303 = vpop.f32.mrf.mxu0
        %v1304 = vadd.f32 0.0, %v1303
        %v1305 = vpop.f32.mrf.mxu0
        %v1306 = vadd.f32 0.0, %v1305
        %1307 = vmatmul.bf16.gmra.mxu0 %v1227
        %v1308 = vpop.f32.mrf.mxu0
        %v1309 = vadd.f32 0.0, %v1308
        %v1310 = vpop.f32.mrf.mxu0
        %v1311 = vadd.f32 0.0, %v1310
        %1312 = vmatmul.bf16.gmra.mxu0 %v1230
        %v1313 = vpop.f32.mrf.mxu0
        %v1314 = vadd.f32 0.0, %v1313
        %v1315 = vpop.f32.mrf.mxu0
        %v1316 = vadd.f32 0.0, %v1315
        %1317 = vmatmul.bf16.gmra.mxu0 %v1233
        %v1318 = vpop.f32.mrf.mxu0
        %v1319 = vadd.f32 0.0, %v1318
        %v1320 = vpop.f32.mrf.mxu0
        %v1321 = vadd.f32 0.0, %v1320
        %1322 = vmatmul.bf16.gmra.mxu0 %v1236
        %v1323 = vpop.f32.mrf.mxu0
        %v1324 = vadd.f32 0.0, %v1323
        %v1325 = vpop.f32.mrf.mxu0
        %v1326 = vadd.f32 0.0, %v1325
        %1327 = vmatmul.bf16.gmra.mxu0 %v1239
        %v1328 = vpop.f32.mrf.mxu0
        %v1329 = vadd.f32 0.0, %v1328
        %v1330 = vpop.f32.mrf.mxu0
        %v1331 = vadd.f32 0.0, %v1330
        %1332 = vmatmul.bf16.gmra.mxu0 %v1242
        %v1333 = vpop.f32.mrf.mxu0
        %v1334 = vadd.f32 0.0, %v1333
        %v1335 = vpop.f32.mrf.mxu0
        %v1336 = vadd.f32 0.0, %v1335
        %1337 = vmatmul.bf16.gmra.mxu0 %v1245
        %v1338 = vpop.f32.mrf.mxu0
        %v1339 = vadd.f32 0.0, %v1338
        %v1340 = vpop.f32.mrf.mxu0
        %v1341 = vadd.f32 0.0, %v1340
        %1342 = vdwg.mxu0
        %1343 = vmatpush.bf16.msra.mxu0 0
        %1344 = vmatpush.bf16.msra.mxu0 0
        %1345 = vmatpush.bf16.msra.mxu0 0
        %1346 = vmatpush.bf16.msra.mxu0 0
        %1347 = vmatpush.bf16.msra.mxu0 0
        %1348 = vmatpush.bf16.msra.mxu0 0
        %1349 = vmatpush.bf16.msra.mxu0 0
        %1350 = vmatpush.bf16.msra.mxu0 %v1252
        %1351 = vmatmul.bf16.gmra.mxu0 %v1200
        %v1352 = vpop.f32.mrf.mxu0
        %v1353 = vadd.f32 0.0, %v1352
        %v1354 = vpop.f32.mrf.mxu0
        %v1355 = vadd.f32 0.0, %v1354
        %1356 = vmatmul.bf16.gmra.mxu0 %v1203
        %v1357 = vpop.f32.mrf.mxu0
        %v1358 = vadd.f32 0.0, %v1357
        %v1359 = vpop.f32.mrf.mxu0
        %v1360 = vadd.f32 0.0, %v1359
        %1361 = vmatmul.bf16.gmra.mxu0 %v1206
        %v1362 = vpop.f32.mrf.mxu0
        %v1363 = vadd.f32 0.0, %v1362
        %v1364 = vpop.f32.mrf.mxu0
        %v1365 = vadd.f32 0.0, %v1364
        %1366 = vmatmul.bf16.gmra.mxu0 %v1209
        %v1367 = vpop.f32.mrf.mxu0
        %v1368 = vadd.f32 0.0, %v1367
        %v1369 = vpop.f32.mrf.mxu0
        %v1370 = vadd.f32 0.0, %v1369
        %1371 = vmatmul.bf16.gmra.mxu0 %v1212
        %v1372 = vpop.f32.mrf.mxu0
        %v1373 = vadd.f32 0.0, %v1372
        %v1374 = vpop.f32.mrf.mxu0
        %v1375 = vadd.f32 0.0, %v1374
        %1376 = vmatmul.bf16.gmra.mxu0 %v1215
        %v1377 = vpop.f32.mrf.mxu0
        %v1378 = vadd.f32 0.0, %v1377
        %v1379 = vpop.f32.mrf.mxu0
        %v1380 = vadd.f32 0.0, %v1379
        %1381 = vmatmul.bf16.gmra.mxu0 %v1218
        %v1382 = vpop.f32.mrf.mxu0
        %v1383 = vadd.f32 0.0, %v1382
        %v1384 = vpop.f32.mrf.mxu0
        %v1385 = vadd.f32 0.0, %v1384
        %1386 = vmatmul.bf16.gmra.mxu0 %v1221
        %v1387 = vpop.f32.mrf.mxu0
        %v1388 = vadd.f32 0.0, %v1387
        %v1389 = vpop.f32.mrf.mxu0
        %v1390 = vadd.f32 0.0, %v1389
        %1391 = vmatmul.bf16.gmra.mxu0 %v1224
        %v1392 = vpop.f32.mrf.mxu0
        %v1393 = vadd.f32 0.0, %v1392
        %v1394 = vpop.f32.mrf.mxu0
        %v1395 = vadd.f32 0.0, %v1394
        %1396 = vmatmul.bf16.gmra.mxu0 %v1227
        %v1397 = vpop.f32.mrf.mxu0
        %v1398 = vadd.f32 0.0, %v1397
        %v1399 = vpop.f32.mrf.mxu0
        %v1400 = vadd.f32 0.0, %v1399
        %1401 = vmatmul.bf16.gmra.mxu0 %v1230
        %v1402 = vpop.f32.mrf.mxu0
        %v1403 = vadd.f32 0.0, %v1402
        %v1404 = vpop.f32.mrf.mxu0
        %v1405 = vadd.f32 0.0, %v1404
        %1406 = vmatmul.bf16.gmra.mxu0 %v1233
        %v1407 = vpop.f32.mrf.mxu0
        %v1408 = vadd.f32 0.0, %v1407
        %v1409 = vpop.f32.mrf.mxu0
        %v1410 = vadd.f32 0.0, %v1409
        %1411 = vmatmul.bf16.gmra.mxu0 %v1236
        %v1412 = vpop.f32.mrf.mxu0
        %v1413 = vadd.f32 0.0, %v1412
        %v1414 = vpop.f32.mrf.mxu0
        %v1415 = vadd.f32 0.0, %v1414
        %1416 = vmatmul.bf16.gmra.mxu0 %v1239
        %v1417 = vpop.f32.mrf.mxu0
        %v1418 = vadd.f32 0.0, %v1417
        %v1419 = vpop.f32.mrf.mxu0
        %v1420 = vadd.f32 0.0, %v1419
        %1421 = vmatmul.bf16.gmra.mxu0 %v1242
        %v1422 = vpop.f32.mrf.mxu0
        %v1423 = vadd.f32 0.0, %v1422
        %v1424 = vpop.f32.mrf.mxu0
        %v1425 = vadd.f32 0.0, %v1424
        %1426 = vmatmul.bf16.gmra.mxu0 %v1245
        %v1427 = vpop.f32.mrf.mxu0
        %v1428 = vadd.f32 0.0, %v1427
        %v1429 = vpop.f32.mrf.mxu0
        %v1430 = vadd.f32 0.0, %v1429
        %1431 = vdwg.mxu0
        %v1432 = vmax.f32 %v1264, %v1353
        %1433 = vmax.xlane.f32.xlu0 %v1432
        %v1434 = vpop.xlane.xlu0 %1433
        %v1435 = vmax.f32 %v1266, %v1355
        %1436 = vmax.xlane.f32.xlu0 %v1435
        %v1437 = vpop.xlane.xlu0 %1436
        %v1438 = vmax.f32 %v1269, %v1358
        %1439 = vmax.xlane.f32.xlu0 %v1438
        %v1440 = vpop.xlane.xlu0 %1439
        %v1441 = vmax.f32 %v1271, %v1360
        %1442 = vmax.xlane.f32.xlu0 %v1441
        %v1443 = vpop.xlane.xlu0 %1442
        %v1444 = vmax.f32 %v1274, %v1363
        %1445 = vmax.xlane.f32.xlu0 %v1444
        %v1446 = vpop.xlane.xlu0 %1445
        %v1447 = vmax.f32 %v1276, %v1365
        %1448 = vmax.xlane.f32.xlu0 %v1447
        %v1449 = vpop.xlane.xlu0 %1448
        %v1450 = vmax.f32 %v1279, %v1368
        %1451 = vmax.xlane.f32.xlu0 %v1450
        %v1452 = vpop.xlane.xlu0 %1451
        %v1453 = vmax.f32 %v1281, %v1370
        %1454 = vmax.xlane.f32.xlu0 %v1453
        %v1455 = vpop.xlane.xlu0 %1454
        %v1456 = vmax.f32 %v1284, %v1373
        %1457 = vmax.xlane.f32.xlu0 %v1456
        %v1458 = vpop.xlane.xlu0 %1457
        %v1459 = vmax.f32 %v1286, %v1375
        %1460 = vmax.xlane.f32.xlu0 %v1459
        %v1461 = vpop.xlane.xlu0 %1460
        %v1462 = vmax.f32 %v1289, %v1378
        %1463 = vmax.xlane.f32.xlu0 %v1462
        %v1464 = vpop.xlane.xlu0 %1463
        %v1465 = vmax.f32 %v1291, %v1380
        %1466 = vmax.xlane.f32.xlu0 %v1465
        %v1467 = vpop.xlane.xlu0 %1466
        %v1468 = vmax.f32 %v1294, %v1383
        %1469 = vmax.xlane.f32.xlu0 %v1468
        %v1470 = vpop.xlane.xlu0 %1469
        %v1471 = vmax.f32 %v1296, %v1385
        %1472 = vmax.xlane.f32.xlu0 %v1471
        %v1473 = vpop.xlane.xlu0 %1472
        %v1474 = vmax.f32 %v1299, %v1388
        %1475 = vmax.xlane.f32.xlu0 %v1474
        %v1476 = vpop.xlane.xlu0 %1475
        %v1477 = vmax.f32 %v1301, %v1390
        %1478 = vmax.xlane.f32.xlu0 %v1477
        %v1479 = vpop.xlane.xlu0 %1478
        %v1480 = vmax.f32 %v1304, %v1393
        %1481 = vmax.xlane.f32.xlu0 %v1480
        %v1482 = vpop.xlane.xlu0 %1481
        %v1483 = vmax.f32 %v1306, %v1395
        %1484 = vmax.xlane.f32.xlu0 %v1483
        %v1485 = vpop.xlane.xlu0 %1484
        %v1486 = vmax.f32 %v1309, %v1398
        %1487 = vmax.xlane.f32.xlu0 %v1486
        %v1488 = vpop.xlane.xlu0 %1487
        %v1489 = vmax.f32 %v1311, %v1400
        %1490 = vmax.xlane.f32.xlu0 %v1489
        %v1491 = vpop.xlane.xlu0 %1490
        %v1492 = vmax.f32 %v1314, %v1403
        %1493 = vmax.xlane.f32.xlu0 %v1492
        %v1494 = vpop.xlane.xlu0 %1493
        %v1495 = vmax.f32 %v1316, %v1405
        %1496 = vmax.xlane.f32.xlu0 %v1495
        %v1497 = vpop.xlane.xlu0 %1496
        %v1498 = vmax.f32 %v1319, %v1408
        %1499 = vmax.xlane.f32.xlu0 %v1498
        %v1500 = vpop.xlane.xlu0 %1499
        %v1501 = vmax.f32 %v1321, %v1410
        %1502 = vmax.xlane.f32.xlu0 %v1501
        %v1503 = vpop.xlane.xlu0 %1502
        %v1504 = vmax.f32 %v1324, %v1413
        %1505 = vmax.xlane.f32.xlu0 %v1504
        %v1506 = vpop.xlane.xlu0 %1505
        %v1507 = vmax.f32 %v1326, %v1415
        %1508 = vmax.xlane.f32.xlu0 %v1507
        %v1509 = vpop.xlane.xlu0 %1508
        %v1510 = vmax.f32 %v1329, %v1418
        %1511 = vmax.xlane.f32.xlu0 %v1510
        %v1512 = vpop.xlane.xlu0 %1511
        %v1513 = vmax.f32 %v1331, %v1420
        %1514 = vmax.xlane.f32.xlu0 %v1513
        %v1515 = vpop.xlane.xlu0 %1514
        %v1516 = vmax.f32 %v1334, %v1423
        %1517 = vmax.xlane.f32.xlu0 %v1516
        %v1518 = vpop.xlane.xlu0 %1517
        %v1519 = vmax.f32 %v1336, %v1425
        %1520 = vmax.xlane.f32.xlu0 %v1519
        %v1521 = vpop.xlane.xlu0 %1520
        %v1522 = vmax.f32 %v1339, %v1428
        %1523 = vmax.xlane.f32.xlu0 %v1522
        %v1524 = vpop.xlane.xlu0 %1523
        %v1525 = vmax.f32 %v1341, %v1430
        %1526 = vmax.xlane.f32.xlu0 %v1525
        %v1527 = vpop.xlane.xlu0 %1526
        %v1528 = vsub.f32 %v1264, %v1434
        %v1529 = vsub.f32 %v1353, %v1434
        %v1530 = vsub.f32 %v1266, %v1437
        %v1531 = vsub.f32 %v1355, %v1437
        %v1532 = vsub.f32 %v1269, %v1440
        %v1533 = vsub.f32 %v1358, %v1440
        %v1534 = vsub.f32 %v1271, %v1443
        %v1535 = vsub.f32 %v1360, %v1443
        %v1536 = vsub.f32 %v1274, %v1446
        %v1537 = vsub.f32 %v1363, %v1446
        %v1538 = vsub.f32 %v1276, %v1449
        %v1539 = vsub.f32 %v1365, %v1449
        %v1540 = vsub.f32 %v1279, %v1452
        %v1541 = vsub.f32 %v1368, %v1452
        %v1542 = vsub.f32 %v1281, %v1455
        %v1543 = vsub.f32 %v1370, %v1455
        %v1544 = vsub.f32 %v1284, %v1458
        %v1545 = vsub.f32 %v1373, %v1458
        %v1546 = vsub.f32 %v1286, %v1461
        %v1547 = vsub.f32 %v1375, %v1461
        %v1548 = vsub.f32 %v1289, %v1464
        %v1549 = vsub.f32 %v1378, %v1464
        %v1550 = vsub.f32 %v1291, %v1467
        %v1551 = vsub.f32 %v1380, %v1467
        %v1552 = vsub.f32 %v1294, %v1470
        %v1553 = vsub.f32 %v1383, %v1470
        %v1554 = vsub.f32 %v1296, %v1473
        %v1555 = vsub.f32 %v1385, %v1473
        %v1556 = vsub.f32 %v1299, %v1476
        %v1557 = vsub.f32 %v1388, %v1476
        %v1558 = vsub.f32 %v1301, %v1479
        %v1559 = vsub.f32 %v1390, %v1479
        %v1560 = vsub.f32 %v1304, %v1482
        %v1561 = vsub.f32 %v1393, %v1482
        %v1562 = vsub.f32 %v1306, %v1485
        %v1563 = vsub.f32 %v1395, %v1485
        %v1564 = vsub.f32 %v1309, %v1488
        %v1565 = vsub.f32 %v1398, %v1488
        %v1566 = vsub.f32 %v1311, %v1491
        %v1567 = vsub.f32 %v1400, %v1491
        %v1568 = vsub.f32 %v1314, %v1494
        %v1569 = vsub.f32 %v1403, %v1494
        %v1570 = vsub.f32 %v1316, %v1497
        %v1571 = vsub.f32 %v1405, %v1497
        %v1572 = vsub.f32 %v1319, %v1500
        %v1573 = vsub.f32 %v1408, %v1500
        %v1574 = vsub.f32 %v1321, %v1503
        %v1575 = vsub.f32 %v1410, %v1503
        %v1576 = vsub.f32 %v1324, %v1506
        %v1577 = vsub.f32 %v1413, %v1506
        %v1578 = vsub.f32 %v1326, %v1509
        %v1579 = vsub.f32 %v1415, %v1509
        %v1580 = vsub.f32 %v1329, %v1512
        %v1581 = vsub.f32 %v1418, %v1512
        %v1582 = vsub.f32 %v1331, %v1515
        %v1583 = vsub.f32 %v1420, %v1515
        %v1584 = vsub.f32 %v1334, %v1518
        %v1585 = vsub.f32 %v1423, %v1518
        %v1586 = vsub.f32 %v1336, %v1521
        %v1587 = vsub.f32 %v1425, %v1521
        %v1588 = vsub.f32 %v1339, %v1524
        %v1589 = vsub.f32 %v1428, %v1524
        %v1590 = vsub.f32 %v1341, %v1527
        %v1591 = vsub.f32 %v1430, %v1527
        %v1592 = vmul.f32 %v1528, 1.442695
        %v1593 = vpow.pop %v1592
        %v1594 = vmul.f32 %v1529, 1.442695
        %v1595 = vpow.pop %v1594
        %v1596 = vmul.f32 %v1530, 1.442695
        %v1597 = vpow.pop %v1596
        %v1598 = vmul.f32 %v1531, 1.442695
        %v1599 = vpow.pop %v1598
        %v1600 = vmul.f32 %v1532, 1.442695
        %v1601 = vpow.pop %v1600
        %v1602 = vmul.f32 %v1533, 1.442695
        %v1603 = vpow.pop %v1602
        %v1604 = vmul.f32 %v1534, 1.442695
        %v1605 = vpow.pop %v1604
        %v1606 = vmul.f32 %v1535, 1.442695
        %v1607 = vpow.pop %v1606
        %v1608 = vmul.f32 %v1536, 1.442695
        %v1609 = vpow.pop %v1608
        %v1610 = vmul.f32 %v1537, 1.442695
        %v1611 = vpow.pop %v1610
        %v1612 = vmul.f32 %v1538, 1.442695
        %v1613 = vpow.pop %v1612
        %v1614 = vmul.f32 %v1539, 1.442695
        %v1615 = vpow.pop %v1614
        %v1616 = vmul.f32 %v1540, 1.442695
        %v1617 = vpow.pop %v1616
        %v1618 = vmul.f32 %v1541, 1.442695
        %v1619 = vpow.pop %v1618
        %v1620 = vmul.f32 %v1542, 1.442695
        %v1621 = vpow.pop %v1620
        %v1622 = vmul.f32 %v1543, 1.442695
        %v1623 = vpow.pop %v1622
        %v1624 = vmul.f32 %v1544, 1.442695
        %v1625 = vpow.pop %v1624
        %v1626 = vmul.f32 %v1545, 1.442695
        %v1627 = vpow.pop %v1626
        %v1628 = vmul.f32 %v1546, 1.442695
        %v1629 = vpow.pop %v1628
        %v1630 = vmul.f32 %v1547, 1.442695
        %v1631 = vpow.pop %v1630
        %v1632 = vmul.f32 %v1548, 1.442695
        %v1633 = vpow.pop %v1632
        %v1634 = vmul.f32 %v1549, 1.442695
        %v1635 = vpow.pop %v1634
        %v1636 = vmul.f32 %v1550, 1.442695
        %v1637 = vpow.pop %v1636
        %v1638 = vmul.f32 %v1551, 1.442695
        %v1639 = vpow.pop %v1638
        %v1640 = vmul.f32 %v1552, 1.442695
        %v1641 = vpow.pop %v1640
        %v1642 = vmul.f32 %v1553, 1.442695
        %v1643 = vpow.pop %v1642
        %v1644 = vmul.f32 %v1554, 1.442695
        %v1645 = vpow.pop %v1644
        %v1646 = vmul.f32 %v1555, 1.442695
        %v1647 = vpow.pop %v1646
        %v1648 = vmul.f32 %v1556, 1.442695
        %v1649 = vpow.pop %v1648
        %v1650 = vmul.f32 %v1557, 1.442695
        %v1651 = vpow.pop %v1650
        %v1652 = vmul.f32 %v1558, 1.442695
        %v1653 = vpow.pop %v1652
        %v1654 = vmul.f32 %v1559, 1.442695
        %v1655 = vpow.pop %v1654
        %v1656 = vmul.f32 %v1560, 1.442695
        %v1657 = vpow.pop %v1656
        %v1658 = vmul.f32 %v1561, 1.442695
        %v1659 = vpow.pop %v1658
        %v1660 = vmul.f32 %v1562, 1.442695
        %v1661 = vpow.pop %v1660
        %v1662 = vmul.f32 %v1563, 1.442695
        %v1663 = vpow.pop %v1662
        %v1664 = vmul.f32 %v1564, 1.442695
        %v1665 = vpow.pop %v1664
        %v1666 = vmul.f32 %v1565, 1.442695
        %v1667 = vpow.pop %v1666
        %v1668 = vmul.f32 %v1566, 1.442695
        %v1669 = vpow.pop %v1668
        %v1670 = vmul.f32 %v1567, 1.442695
        %v1671 = vpow.pop %v1670
        %v1672 = vmul.f32 %v1568, 1.442695
        %v1673 = vpow.pop %v1672
        %v1674 = vmul.f32 %v1569, 1.442695
        %v1675 = vpow.pop %v1674
        %v1676 = vmul.f32 %v1570, 1.442695
        %v1677 = vpow.pop %v1676
        %v1678 = vmul.f32 %v1571, 1.442695
        %v1679 = vpow.pop %v1678
        %v1680 = vmul.f32 %v1572, 1.442695
        %v1681 = vpow.pop %v1680
        %v1682 = vmul.f32 %v1573, 1.442695
        %v1683 = vpow.pop %v1682
        %v1684 = vmul.f32 %v1574, 1.442695
        %v1685 = vpow.pop %v1684
        %v1686 = vmul.f32 %v1575, 1.442695
        %v1687 = vpow.pop %v1686
        %v1688 = vmul.f32 %v1576, 1.442695
        %v1689 = vpow.pop %v1688
        %v1690 = vmul.f32 %v1577, 1.442695
        %v1691 = vpow.pop %v1690
        %v1692 = vmul.f32 %v1578, 1.442695
        %v1693 = vpow.pop %v1692
        %v1694 = vmul.f32 %v1579, 1.442695
        %v1695 = vpow.pop %v1694
        %v1696 = vmul.f32 %v1580, 1.442695
        %v1697 = vpow.pop %v1696
        %v1698 = vmul.f32 %v1581, 1.442695
        %v1699 = vpow.pop %v1698
        %v1700 = vmul.f32 %v1582, 1.442695
        %v1701 = vpow.pop %v1700
        %v1702 = vmul.f32 %v1583, 1.442695
        %v1703 = vpow.pop %v1702
        %v1704 = vmul.f32 %v1584, 1.442695
        %v1705 = vpow.pop %v1704
        %v1706 = vmul.f32 %v1585, 1.442695
        %v1707 = vpow.pop %v1706
        %v1708 = vmul.f32 %v1586, 1.442695
        %v1709 = vpow.pop %v1708
        %v1710 = vmul.f32 %v1587, 1.442695
        %v1711 = vpow.pop %v1710
        %v1712 = vmul.f32 %v1588, 1.442695
        %v1713 = vpow.pop %v1712
        %v1714 = vmul.f32 %v1589, 1.442695
        %v1715 = vpow.pop %v1714
        %v1716 = vmul.f32 %v1590, 1.442695
        %v1717 = vpow.pop %v1716
        %v1718 = vmul.f32 %v1591, 1.442695
        %v1719 = vpow.pop %v1718
        %v1720 = vpack.c.bf16 %v1597, %v1593
        %v1721 = vpack.c.bf16 %v1599, %v1595
        %v1722 = vpack.c.bf16 %v1605, %v1601
        %v1723 = vpack.c.bf16 %v1607, %v1603
        %v1724 = vpack.c.bf16 %v1613, %v1609
        %v1725 = vpack.c.bf16 %v1615, %v1611
        %v1726 = vpack.c.bf16 %v1621, %v1617
        %v1727 = vpack.c.bf16 %v1623, %v1619
        %v1728 = vpack.c.bf16 %v1629, %v1625
        %v1729 = vpack.c.bf16 %v1631, %v1627
        %v1730 = vpack.c.bf16 %v1637, %v1633
        %v1731 = vpack.c.bf16 %v1639, %v1635
        %v1732 = vpack.c.bf16 %v1645, %v1641
        %v1733 = vpack.c.bf16 %v1647, %v1643
        %v1734 = vpack.c.bf16 %v1653, %v1649
        %v1735 = vpack.c.bf16 %v1655, %v1651
        %v1736 = vpack.c.bf16 %v1661, %v1657
        %v1737 = vpack.c.bf16 %v1663, %v1659
        %v1738 = vpack.c.bf16 %v1669, %v1665
        %v1739 = vpack.c.bf16 %v1671, %v1667
        %v1740 = vpack.c.bf16 %v1677, %v1673
        %v1741 = vpack.c.bf16 %v1679, %v1675
        %v1742 = vpack.c.bf16 %v1685, %v1681
        %v1743 = vpack.c.bf16 %v1687, %v1683
        %v1744 = vpack.c.bf16 %v1693, %v1689
        %v1745 = vpack.c.bf16 %v1695, %v1691
        %v1746 = vpack.c.bf16 %v1701, %v1697
        %v1747 = vpack.c.bf16 %v1703, %v1699
        %v1748 = vpack.c.bf16 %v1709, %v1705
        %v1749 = vpack.c.bf16 %v1711, %v1707
        %v1750 = vpack.c.bf16 %v1717, %v1713
        %v1751 = vpack.c.bf16 %v1719, %v1715
        %v1753 = vunpack.c.l.b16 %v854
        %v1754 = vunpack.c.h.b16 %v854
        %v1755 = vpack.c.b16 %v1753, %v1753
        %v1756 = vpack.c.b16 %v1754, %v1754
        %1759 = vmatpush.bf16.xpose.msra.mxu0 %v1734
        %1760 = vmatpush.bf16.xpose.msra.mxu0 %v1732
        %1761 = vmatpush.bf16.xpose.msra.mxu0 %v1730
        %1762 = vmatpush.bf16.xpose.msra.mxu0 %v1728
        %1763 = vmatpush.bf16.xpose.msra.mxu0 %v1726
        %1764 = vmatpush.bf16.xpose.msra.mxu0 %v1724
        %1765 = vmatpush.bf16.xpose.msra.mxu0 %v1722
        %1766 = vmatpush.bf16.xpose.msra.mxu0 %v1720
        %1767 = vmatmul.bf16.gmra.mxu0 %v1755
        %v1768 = vpop.f32.mrf.mxu0
        %v1769 = vadd.f32 0.0, %v1768
        %v1770 = vpop.f32.mrf.mxu0
        %1771 = vdwg.mxu0
        %1772 = vmatpush.bf16.xpose.msra.mxu0 %v1735
        %1773 = vmatpush.bf16.xpose.msra.mxu0 %v1733
        %1774 = vmatpush.bf16.xpose.msra.mxu0 %v1731
        %1775 = vmatpush.bf16.xpose.msra.mxu0 %v1729
        %1776 = vmatpush.bf16.xpose.msra.mxu0 %v1727
        %1777 = vmatpush.bf16.xpose.msra.mxu0 %v1725
        %1778 = vmatpush.bf16.xpose.msra.mxu0 %v1723
        %1779 = vmatpush.bf16.xpose.msra.mxu0 %v1721
        %1780 = vmatmul.bf16.gmra.mxu0 %v1756
        %v1781 = vpop.f32.mrf.mxu0
        %v1782 = vadd.f32 %v1769, %v1781
        %v1783 = vpop.f32.mrf.mxu0
        %1784 = vdwg.mxu0
        %1785 = vmatpush.bf16.xpose.msra.mxu0 %v1750
        %1786 = vmatpush.bf16.xpose.msra.mxu0 %v1748
        %1787 = vmatpush.bf16.xpose.msra.mxu0 %v1746
        %1788 = vmatpush.bf16.xpose.msra.mxu0 %v1744
        %1789 = vmatpush.bf16.xpose.msra.mxu0 %v1742
        %1790 = vmatpush.bf16.xpose.msra.mxu0 %v1740
        %1791 = vmatpush.bf16.xpose.msra.mxu0 %v1738
        %1792 = vmatpush.bf16.xpose.msra.mxu0 %v1736
        %1793 = vmatmul.bf16.gmra.mxu0 %v1755
        %v1794 = vpop.f32.mrf.mxu0
        %v1795 = vadd.f32 0.0, %v1794
        %v1796 = vpop.f32.mrf.mxu0
        %1797 = vdwg.mxu0
        %1798 = vmatpush.bf16.xpose.msra.mxu0 %v1751
        %1799 = vmatpush.bf16.xpose.msra.mxu0 %v1749
        %1800 = vmatpush.bf16.xpose.msra.mxu0 %v1747
        %1801 = vmatpush.bf16.xpose.msra.mxu0 %v1745
        %1802 = vmatpush.bf16.xpose.msra.mxu0 %v1743
        %1803 = vmatpush.bf16.xpose.msra.mxu0 %v1741
        %1804 = vmatpush.bf16.xpose.msra.mxu0 %v1739
        %1805 = vmatpush.bf16.xpose.msra.mxu0 %v1737
        %1806 = vmatmul.bf16.gmra.mxu0 %v1756
        %v1807 = vpop.f32.mrf.mxu0
        %v1808 = vadd.f32 %v1795, %v1807
        %v1809 = vpop.f32.mrf.mxu0
        %1810 = vdwg.mxu0
        %1811 = vmatpush.bf16.xpose.msra.mxu0 %v1734
        %1812 = vmatpush.bf16.xpose.msra.mxu0 %v1732
        %1813 = vmatpush.bf16.xpose.msra.mxu0 %v1730
        %1814 = vmatpush.bf16.xpose.msra.mxu0 %v1728
        %1815 = vmatpush.bf16.xpose.msra.mxu0 %v1726
        %1816 = vmatpush.bf16.xpose.msra.mxu0 %v1724
        %1817 = vmatpush.bf16.xpose.msra.mxu0 %v1722
        %1818 = vmatpush.bf16.xpose.msra.mxu0 %v1720
        %1819 = vmatmul.bf16.gmra.mxu0 1065369472
        %v1820 = vpop.f32.mrf.mxu0
        %v1821 = vadd.f32 0.0, %v1820
        %v1822 = vpop.f32.mrf.mxu0
        %1823 = vdwg.mxu0
        %1824 = vmatpush.bf16.xpose.msra.mxu0 %v1735
        %1825 = vmatpush.bf16.xpose.msra.mxu0 %v1733
        %1826 = vmatpush.bf16.xpose.msra.mxu0 %v1731
        %1827 = vmatpush.bf16.xpose.msra.mxu0 %v1729
        %1828 = vmatpush.bf16.xpose.msra.mxu0 %v1727
        %1829 = vmatpush.bf16.xpose.msra.mxu0 %v1725
        %1830 = vmatpush.bf16.xpose.msra.mxu0 %v1723
        %1831 = vmatpush.bf16.xpose.msra.mxu0 %v1721
        %1832 = vmatmul.bf16.gmra.mxu0 1065369472
        %v1833 = vpop.f32.mrf.mxu0
        %v1834 = vadd.f32 %v1821, %v1833
        %v1835 = vpop.f32.mrf.mxu0
        %1836 = vdwg.mxu0
        %1837 = vmatpush.bf16.xpose.msra.mxu0 %v1750
        %1838 = vmatpush.bf16.xpose.msra.mxu0 %v1748
        %1839 = vmatpush.bf16.xpose.msra.mxu0 %v1746
        %1840 = vmatpush.bf16.xpose.msra.mxu0 %v1744
        %1841 = vmatpush.bf16.xpose.msra.mxu0 %v1742
        %1842 = vmatpush.bf16.xpose.msra.mxu0 %v1740
        %1843 = vmatpush.bf16.xpose.msra.mxu0 %v1738
        %1844 = vmatpush.bf16.xpose.msra.mxu0 %v1736
        %1845 = vmatmul.bf16.gmra.mxu0 1065369472
        %v1846 = vpop.f32.mrf.mxu0
        %v1847 = vadd.f32 0.0, %v1846
        %v1848 = vpop.f32.mrf.mxu0
        %1849 = vdwg.mxu0
        %1850 = vmatpush.bf16.xpose.msra.mxu0 %v1751
        %1851 = vmatpush.bf16.xpose.msra.mxu0 %v1749
        %1852 = vmatpush.bf16.xpose.msra.mxu0 %v1747
        %1853 = vmatpush.bf16.xpose.msra.mxu0 %v1745
        %1854 = vmatpush.bf16.xpose.msra.mxu0 %v1743
        %1855 = vmatpush.bf16.xpose.msra.mxu0 %v1741
        %1856 = vmatpush.bf16.xpose.msra.mxu0 %v1739
        %1857 = vmatpush.bf16.xpose.msra.mxu0 %v1737
        %1858 = vmatmul.bf16.gmra.mxu0 1065369472
        %v1859 = vpop.f32.mrf.mxu0
        %v1860 = vadd.f32 %v1847, %v1859
        %v1861 = vpop.f32.mrf.mxu0
        %1862 = vdwg.mxu0
        %v1863 = vrcp.pop %v1834
        %v1864 = vmul.f32 %v1834, %v1863
        %v1865 = vsub.f32 1.0, %v1864
        %v1866 = vmul.f32 %v1863, %v1865
        %v1867 = vadd.f32 %v1863, %v1866
        %vm1868 = vweird.f32 %v1834
        %vm1869 = vweird.f32 %v1863
        %vm1870 = vmor %vm1868, %vm1869
        %v1871 = vsel %vm1870, %v1863, %v1867
        %v1872 = vand.u32 2147483647, %v1834
        %vm1873 = vcmp.eq.f32.partialorder %v1872, 8.507059e+37
        %v1874 = vand.u32 %v1834, 2147483648
        %v1875 = vor.u32 1.1754944e-38, %v1874
        %v1876 = vsel %vm1873, %v1875, %v1871
        %v1877 = vmul.f32 1.0, %v1876
        %v1878 = vrcp.pop %v1860
        %v1879 = vmul.f32 %v1860, %v1878
        %v1880 = vsub.f32 1.0, %v1879
        %v1881 = vmul.f32 %v1878, %v1880
        %v1882 = vadd.f32 %v1878, %v1881
        %vm1883 = vweird.f32 %v1860
        %vm1884 = vweird.f32 %v1878
        %vm1885 = vmor %vm1883, %vm1884
        %v1886 = vsel %vm1885, %v1878, %v1882
        %v1887 = vand.u32 2147483647, %v1860
        %vm1888 = vcmp.eq.f32.partialorder %v1887, 8.507059e+37
        %v1889 = vand.u32 %v1860, 2147483648
        %v1890 = vor.u32 1.1754944e-38, %v1889
        %v1891 = vsel %vm1888, %v1890, %v1886
        %v1892 = vmul.f32 1.0, %v1891
        %v1893 = vperm.slane %v1877, 0
        %v1894 = vperm.slane %v1892, 0
        %v1895 = vmul.f32 %v1782, %v1893
        %v1896 = vmul.f32 %v1808, %v1894
        %1897 = vrot.lane.b32.xlu0 %v1177, 120
        %v1898 = vpop.permute.xlu0 %1897
        %1899 = vrot.lane.b32.xlu0 %v1178, 120
        %v1900 = vpop.permute.xlu0 %1899
        %1901 = vrot.lane.b32.xlu0 %v1179, 120
        %v1902 = vpop.permute.xlu0 %1901
        %1903 = vrot.lane.b32.xlu0 %v1180, 120
        %v1904 = vpop.permute.xlu0 %1903
        %1905 = vrot.lane.b32.xlu0 %v1181, 120
        %v1906 = vpop.permute.xlu0 %1905
        %1907 = vrot.lane.b32.xlu0 %v1182, 120
        %v1908 = vpop.permute.xlu0 %1907
        %1909 = vrot.lane.b32.xlu0 %v1183, 120
        %v1910 = vpop.permute.xlu0 %1909
        %1911 = vrot.lane.b32.xlu0 %v1184, 120
        %v1912 = vpop.permute.xlu0 %1911
        %1913 = vrot.lane.b32.xlu0 %v1185, 120
        %v1914 = vpop.permute.xlu0 %1913
        %1915 = vrot.lane.b32.xlu0 %v1186, 120
        %v1916 = vpop.permute.xlu0 %1915
        %1917 = vrot.lane.b32.xlu0 %v1187, 120
        %v1918 = vpop.permute.xlu0 %1917
        %1919 = vrot.lane.b32.xlu0 %v1188, 120
        %v1920 = vpop.permute.xlu0 %1919
        %1921 = vrot.lane.b32.xlu0 %v1189, 120
        %v1922 = vpop.permute.xlu0 %1921
        %1923 = vrot.lane.b32.xlu0 %v1190, 120
        %v1924 = vpop.permute.xlu0 %1923
        %1925 = vrot.lane.b32.xlu0 %v1191, 120
        %v1926 = vpop.permute.xlu0 %1925
        %1927 = vrot.lane.b32.xlu0 %v1192, 120
        %v1928 = vpop.permute.xlu0 %1927
        %v1930 = vunpack.c.l.b16 %v851
        %v1931 = vunpack.c.h.b16 %v851
        %v1932 = vpack.c.b16 %v1930, %v1930
        %v1933 = vpack.c.b16 %v1931, %v1931
        %v1935 = vsel %vm1198, %v1898, 0
        %v1938 = vsel %vm1198, %v1900, 0
        %v1941 = vsel %vm1198, %v1902, 0
        %v1944 = vsel %vm1198, %v1904, 0
        %v1947 = vsel %vm1198, %v1906, 0
        %v1950 = vsel %vm1198, %v1908, 0
        %v1953 = vsel %vm1198, %v1910, 0
        %v1956 = vsel %vm1198, %v1912, 0
        %v1959 = vsel %vm1198, %v1914, 0
        %v1962 = vsel %vm1198, %v1916, 0
        %v1965 = vsel %vm1198, %v1918, 0
        %v1968 = vsel %vm1198, %v1920, 0
        %v1971 = vsel %vm1198, %v1922, 0
        %v1974 = vsel %vm1198, %v1924, 0
        %v1977 = vsel %vm1198, %v1926, 0
        %v1980 = vsel %vm1198, %v1928, 0
        %v1983 = vsel %vm1247, %v1932, 0
        %v1986 = vsel %vm1247, %v1933, 0
        %1988 = vmatpush.bf16.msra.mxu0 0
        %1989 = vmatpush.bf16.msra.mxu0 0
        %1990 = vmatpush.bf16.msra.mxu0 0
        %1991 = vmatpush.bf16.msra.mxu0 0
        %1992 = vmatpush.bf16.msra.mxu0 0
        %1993 = vmatpush.bf16.msra.mxu0 0
        %1994 = vmatpush.bf16.msra.mxu0 0
        %1995 = vmatpush.bf16.msra.mxu0 %v1983
        %1996 = vmatmul.bf16.gmra.mxu0 %v1935
        %v1997 = vpop.f32.mrf.mxu0
        %v1998 = vadd.f32 0.0, %v1997
        %v1999 = vpop.f32.mrf.mxu0
        %v2000 = vadd.f32 0.0, %v1999
        %2001 = vmatmul.bf16.gmra.mxu0 %v1938
        %v2002 = vpop.f32.mrf.mxu0
        %v2003 = vadd.f32 0.0, %v2002
        %v2004 = vpop.f32.mrf.mxu0
        %v2005 = vadd.f32 0.0, %v2004
        %2006 = vmatmul.bf16.gmra.mxu0 %v1941
        %v2007 = vpop.f32.mrf.mxu0
        %v2008 = vadd.f32 0.0, %v2007
        %v2009 = vpop.f32.mrf.mxu0
        %v2010 = vadd.f32 0.0, %v2009
        %2011 = vmatmul.bf16.gmra.mxu0 %v1944
        %v2012 = vpop.f32.mrf.mxu0
        %v2013 = vadd.f32 0.0, %v2012
        %v2014 = vpop.f32.mrf.mxu0
        %v2015 = vadd.f32 0.0, %v2014
        %2016 = vmatmul.bf16.gmra.mxu0 %v1947
        %v2017 = vpop.f32.mrf.mxu0
        %v2018 = vadd.f32 0.0, %v2017
        %v2019 = vpop.f32.mrf.mxu0
        %v2020 = vadd.f32 0.0, %v2019
        %2021 = vmatmul.bf16.gmra.mxu0 %v1950
        %v2022 = vpop.f32.mrf.mxu0
        %v2023 = vadd.f32 0.0, %v2022
        %v2024 = vpop.f32.mrf.mxu0
        %v2025 = vadd.f32 0.0, %v2024
        %2026 = vmatmul.bf16.gmra.mxu0 %v1953
        %v2027 = vpop.f32.mrf.mxu0
        %v2028 = vadd.f32 0.0, %v2027
        %v2029 = vpop.f32.mrf.mxu0
        %v2030 = vadd.f32 0.0, %v2029
        %2031 = vmatmul.bf16.gmra.mxu0 %v1956
        %v2032 = vpop.f32.mrf.mxu0
        %v2033 = vadd.f32 0.0, %v2032
        %v2034 = vpop.f32.mrf.mxu0
        %v2035 = vadd.f32 0.0, %v2034
        %2036 = vmatmul.bf16.gmra.mxu0 %v1959
        %v2037 = vpop.f32.mrf.mxu0
        %v2038 = vadd.f32 0.0, %v2037
        %v2039 = vpop.f32.mrf.mxu0
        %v2040 = vadd.f32 0.0, %v2039
        %2041 = vmatmul.bf16.gmra.mxu0 %v1962
        %v2042 = vpop.f32.mrf.mxu0
        %v2043 = vadd.f32 0.0, %v2042
        %v2044 = vpop.f32.mrf.mxu0
        %v2045 = vadd.f32 0.0, %v2044
        %2046 = vmatmul.bf16.gmra.mxu0 %v1965
        %v2047 = vpop.f32.mrf.mxu0
        %v2048 = vadd.f32 0.0, %v2047
        %v2049 = vpop.f32.mrf.mxu0
        %v2050 = vadd.f32 0.0, %v2049
        %2051 = vmatmul.bf16.gmra.mxu0 %v1968
        %v2052 = vpop.f32.mrf.mxu0
        %v2053 = vadd.f32 0.0, %v2052
        %v2054 = vpop.f32.mrf.mxu0
        %v2055 = vadd.f32 0.0, %v2054
        %2056 = vmatmul.bf16.gmra.mxu0 %v1971
        %v2057 = vpop.f32.mrf.mxu0
        %v2058 = vadd.f32 0.0, %v2057
        %v2059 = vpop.f32.mrf.mxu0
        %v2060 = vadd.f32 0.0, %v2059
        %2061 = vmatmul.bf16.gmra.mxu0 %v1974
        %v2062 = vpop.f32.mrf.mxu0
        %v2063 = vadd.f32 0.0, %v2062
        %v2064 = vpop.f32.mrf.mxu0
        %v2065 = vadd.f32 0.0, %v2064
        %2066 = vmatmul.bf16.gmra.mxu0 %v1977
        %v2067 = vpop.f32.mrf.mxu0
        %v2068 = vadd.f32 0.0, %v2067
        %v2069 = vpop.f32.mrf.mxu0
        %v2070 = vadd.f32 0.0, %v2069
        %2071 = vmatmul.bf16.gmra.mxu0 %v1980
        %v2072 = vpop.f32.mrf.mxu0
        %v2073 = vadd.f32 0.0, %v2072
        %v2074 = vpop.f32.mrf.mxu0
        %v2075 = vadd.f32 0.0, %v2074
        %2076 = vdwg.mxu0
        %2077 = vmatpush.bf16.msra.mxu0 0
        %2078 = vmatpush.bf16.msra.mxu0 0
        %2079 = vmatpush.bf16.msra.mxu0 0
        %2080 = vmatpush.bf16.msra.mxu0 0
        %2081 = vmatpush.bf16.msra.mxu0 0
        %2082 = vmatpush.bf16.msra.mxu0 0
        %2083 = vmatpush.bf16.msra.mxu0 0
        %2084 = vmatpush.bf16.msra.mxu0 %v1986
        %2085 = vmatmul.bf16.gmra.mxu0 %v1935
        %v2086 = vpop.f32.mrf.mxu0
        %v2087 = vadd.f32 0.0, %v2086
        %v2088 = vpop.f32.mrf.mxu0
        %v2089 = vadd.f32 0.0, %v2088
        %2090 = vmatmul.bf16.gmra.mxu0 %v1938
        %v2091 = vpop.f32.mrf.mxu0
        %v2092 = vadd.f32 0.0, %v2091
        %v2093 = vpop.f32.mrf.mxu0
        %v2094 = vadd.f32 0.0, %v2093
        %2095 = vmatmul.bf16.gmra.mxu0 %v1941
        %v2096 = vpop.f32.mrf.mxu0
        %v2097 = vadd.f32 0.0, %v2096
        %v2098 = vpop.f32.mrf.mxu0
        %v2099 = vadd.f32 0.0, %v2098
        %2100 = vmatmul.bf16.gmra.mxu0 %v1944
        %v2101 = vpop.f32.mrf.mxu0
        %v2102 = vadd.f32 0.0, %v2101
        %v2103 = vpop.f32.mrf.mxu0
        %v2104 = vadd.f32 0.0, %v2103
        %2105 = vmatmul.bf16.gmra.mxu0 %v1947
        %v2106 = vpop.f32.mrf.mxu0
        %v2107 = vadd.f32 0.0, %v2106
        %v2108 = vpop.f32.mrf.mxu0
        %v2109 = vadd.f32 0.0, %v2108
        %2110 = vmatmul.bf16.gmra.mxu0 %v1950
        %v2111 = vpop.f32.mrf.mxu0
        %v2112 = vadd.f32 0.0, %v2111
        %v2113 = vpop.f32.mrf.mxu0
        %v2114 = vadd.f32 0.0, %v2113
        %2115 = vmatmul.bf16.gmra.mxu0 %v1953
        %v2116 = vpop.f32.mrf.mxu0
        %v2117 = vadd.f32 0.0, %v2116
        %v2118 = vpop.f32.mrf.mxu0
        %v2119 = vadd.f32 0.0, %v2118
        %2120 = vmatmul.bf16.gmra.mxu0 %v1956
        %v2121 = vpop.f32.mrf.mxu0
        %v2122 = vadd.f32 0.0, %v2121
        %v2123 = vpop.f32.mrf.mxu0
        %v2124 = vadd.f32 0.0, %v2123
        %2125 = vmatmul.bf16.gmra.mxu0 %v1959
        %v2126 = vpop.f32.mrf.mxu0
        %v2127 = vadd.f32 0.0, %v2126
        %v2128 = vpop.f32.mrf.mxu0
        %v2129 = vadd.f32 0.0, %v2128
        %2130 = vmatmul.bf16.gmra.mxu0 %v1962
        %v2131 = vpop.f32.mrf.mxu0
        %v2132 = vadd.f32 0.0, %v2131
        %v2133 = vpop.f32.mrf.mxu0
        %v2134 = vadd.f32 0.0, %v2133
        %2135 = vmatmul.bf16.gmra.mxu0 %v1965
        %v2136 = vpop.f32.mrf.mxu0
        %v2137 = vadd.f32 0.0, %v2136
        %v2138 = vpop.f32.mrf.mxu0
        %v2139 = vadd.f32 0.0, %v2138
        %2140 = vmatmul.bf16.gmra.mxu0 %v1968
        %v2141 = vpop.f32.mrf.mxu0
        %v2142 = vadd.f32 0.0, %v2141
        %v2143 = vpop.f32.mrf.mxu0
        %v2144 = vadd.f32 0.0, %v2143
        %2145 = vmatmul.bf16.gmra.mxu0 %v1971
        %v2146 = vpop.f32.mrf.mxu0
        %v2147 = vadd.f32 0.0, %v2146
        %v2148 = vpop.f32.mrf.mxu0
        %v2149 = vadd.f32 0.0, %v2148
        %2150 = vmatmul.bf16.gmra.mxu0 %v1974
        %v2151 = vpop.f32.mrf.mxu0
        %v2152 = vadd.f32 0.0, %v2151
        %v2153 = vpop.f32.mrf.mxu0
        %v2154 = vadd.f32 0.0, %v2153
        %2155 = vmatmul.bf16.gmra.mxu0 %v1977
        %v2156 = vpop.f32.mrf.mxu0
        %v2157 = vadd.f32 0.0, %v2156
        %v2158 = vpop.f32.mrf.mxu0
        %v2159 = vadd.f32 0.0, %v2158
        %2160 = vmatmul.bf16.gmra.mxu0 %v1980
        %v2161 = vpop.f32.mrf.mxu0
        %v2162 = vadd.f32 0.0, %v2161
        %v2163 = vpop.f32.mrf.mxu0
        %v2164 = vadd.f32 0.0, %v2163
        %2165 = vdwg.mxu0
        %v2166 = vmax.f32 %v1998, %v2087
        %2167 = vmax.xlane.f32.xlu0 %v2166
        %v2168 = vpop.xlane.xlu0 %2167
        %v2169 = vmax.f32 %v2000, %v2089
        %2170 = vmax.xlane.f32.xlu0 %v2169
        %v2171 = vpop.xlane.xlu0 %2170
        %v2172 = vmax.f32 %v2003, %v2092
        %2173 = vmax.xlane.f32.xlu0 %v2172
        %v2174 = vpop.xlane.xlu0 %2173
        %v2175 = vmax.f32 %v2005, %v2094
        %2176 = vmax.xlane.f32.xlu0 %v2175
        %v2177 = vpop.xlane.xlu0 %2176
        %v2178 = vmax.f32 %v2008, %v2097
        %2179 = vmax.xlane.f32.xlu0 %v2178
        %v2180 = vpop.xlane.xlu0 %2179
        %v2181 = vmax.f32 %v2010, %v2099
        %2182 = vmax.xlane.f32.xlu0 %v2181
        %v2183 = vpop.xlane.xlu0 %2182
        %v2184 = vmax.f32 %v2013, %v2102
        %2185 = vmax.xlane.f32.xlu0 %v2184
        %v2186 = vpop.xlane.xlu0 %2185
        %v2187 = vmax.f32 %v2015, %v2104
        %2188 = vmax.xlane.f32.xlu0 %v2187
        %v2189 = vpop.xlane.xlu0 %2188
        %v2190 = vmax.f32 %v2018, %v2107
        %2191 = vmax.xlane.f32.xlu0 %v2190
        %v2192 = vpop.xlane.xlu0 %2191
        %v2193 = vmax.f32 %v2020, %v2109
        %2194 = vmax.xlane.f32.xlu0 %v2193
        %v2195 = vpop.xlane.xlu0 %2194
        %v2196 = vmax.f32 %v2023, %v2112
        %2197 = vmax.xlane.f32.xlu0 %v2196
        %v2198 = vpop.xlane.xlu0 %2197
        %v2199 = vmax.f32 %v2025, %v2114
        %2200 = vmax.xlane.f32.xlu0 %v2199
        %v2201 = vpop.xlane.xlu0 %2200
        %v2202 = vmax.f32 %v2028, %v2117
        %2203 = vmax.xlane.f32.xlu0 %v2202
        %v2204 = vpop.xlane.xlu0 %2203
        %v2205 = vmax.f32 %v2030, %v2119
        %2206 = vmax.xlane.f32.xlu0 %v2205
        %v2207 = vpop.xlane.xlu0 %2206
        %v2208 = vmax.f32 %v2033, %v2122
        %2209 = vmax.xlane.f32.xlu0 %v2208
        %v2210 = vpop.xlane.xlu0 %2209
        %v2211 = vmax.f32 %v2035, %v2124
        %2212 = vmax.xlane.f32.xlu0 %v2211
        %v2213 = vpop.xlane.xlu0 %2212
        %v2214 = vmax.f32 %v2038, %v2127
        %2215 = vmax.xlane.f32.xlu0 %v2214
        %v2216 = vpop.xlane.xlu0 %2215
        %v2217 = vmax.f32 %v2040, %v2129
        %2218 = vmax.xlane.f32.xlu0 %v2217
        %v2219 = vpop.xlane.xlu0 %2218
        %v2220 = vmax.f32 %v2043, %v2132
        %2221 = vmax.xlane.f32.xlu0 %v2220
        %v2222 = vpop.xlane.xlu0 %2221
        %v2223 = vmax.f32 %v2045, %v2134
        %2224 = vmax.xlane.f32.xlu0 %v2223
        %v2225 = vpop.xlane.xlu0 %2224
        %v2226 = vmax.f32 %v2048, %v2137
        %2227 = vmax.xlane.f32.xlu0 %v2226
        %v2228 = vpop.xlane.xlu0 %2227
        %v2229 = vmax.f32 %v2050, %v2139
        %2230 = vmax.xlane.f32.xlu0 %v2229
        %v2231 = vpop.xlane.xlu0 %2230
        %v2232 = vmax.f32 %v2053, %v2142
        %2233 = vmax.xlane.f32.xlu0 %v2232
        %v2234 = vpop.xlane.xlu0 %2233
        %v2235 = vmax.f32 %v2055, %v2144
        %2236 = vmax.xlane.f32.xlu0 %v2235
        %v2237 = vpop.xlane.xlu0 %2236
        %v2238 = vmax.f32 %v2058, %v2147
        %2239 = vmax.xlane.f32.xlu0 %v2238
        %v2240 = vpop.xlane.xlu0 %2239
        %v2241 = vmax.f32 %v2060, %v2149
        %2242 = vmax.xlane.f32.xlu0 %v2241
        %v2243 = vpop.xlane.xlu0 %2242
        %v2244 = vmax.f32 %v2063, %v2152
        %2245 = vmax.xlane.f32.xlu0 %v2244
        %v2246 = vpop.xlane.xlu0 %2245
        %v2247 = vmax.f32 %v2065, %v2154
        %2248 = vmax.xlane.f32.xlu0 %v2247
        %v2249 = vpop.xlane.xlu0 %2248
        %v2250 = vmax.f32 %v2068, %v2157
        %2251 = vmax.xlane.f32.xlu0 %v2250
        %v2252 = vpop.xlane.xlu0 %2251
        %v2253 = vmax.f32 %v2070, %v2159
        %2254 = vmax.xlane.f32.xlu0 %v2253
        %v2255 = vpop.xlane.xlu0 %2254
        %v2256 = vmax.f32 %v2073, %v2162
        %2257 = vmax.xlane.f32.xlu0 %v2256
        %v2258 = vpop.xlane.xlu0 %2257
        %v2259 = vmax.f32 %v2075, %v2164
        %2260 = vmax.xlane.f32.xlu0 %v2259
        %v2261 = vpop.xlane.xlu0 %2260
        %v2262 = vsub.f32 %v1998, %v2168
        %v2263 = vsub.f32 %v2087, %v2168
        %v2264 = vsub.f32 %v2000, %v2171
        %v2265 = vsub.f32 %v2089, %v2171
        %v2266 = vsub.f32 %v2003, %v2174
        %v2267 = vsub.f32 %v2092, %v2174
        %v2268 = vsub.f32 %v2005, %v2177
        %v2269 = vsub.f32 %v2094, %v2177
        %v2270 = vsub.f32 %v2008, %v2180
        %v2271 = vsub.f32 %v2097, %v2180
        %v2272 = vsub.f32 %v2010, %v2183
        %v2273 = vsub.f32 %v2099, %v2183
        %v2274 = vsub.f32 %v2013, %v2186
        %v2275 = vsub.f32 %v2102, %v2186
        %v2276 = vsub.f32 %v2015, %v2189
        %v2277 = vsub.f32 %v2104, %v2189
        %v2278 = vsub.f32 %v2018, %v2192
        %v2279 = vsub.f32 %v2107, %v2192
        %v2280 = vsub.f32 %v2020, %v2195
        %v2281 = vsub.f32 %v2109, %v2195
        %v2282 = vsub.f32 %v2023, %v2198
        %v2283 = vsub.f32 %v2112, %v2198
        %v2284 = vsub.f32 %v2025, %v2201
        %v2285 = vsub.f32 %v2114, %v2201
        %v2286 = vsub.f32 %v2028, %v2204
        %v2287 = vsub.f32 %v2117, %v2204
        %v2288 = vsub.f32 %v2030, %v2207
        %v2289 = vsub.f32 %v2119, %v2207
        %v2290 = vsub.f32 %v2033, %v2210
        %v2291 = vsub.f32 %v2122, %v2210
        %v2292 = vsub.f32 %v2035, %v2213
        %v2293 = vsub.f32 %v2124, %v2213
        %v2294 = vsub.f32 %v2038, %v2216
        %v2295 = vsub.f32 %v2127, %v2216
        %v2296 = vsub.f32 %v2040, %v2219
        %v2297 = vsub.f32 %v2129, %v2219
        %v2298 = vsub.f32 %v2043, %v2222
        %v2299 = vsub.f32 %v2132, %v2222
        %v2300 = vsub.f32 %v2045, %v2225
        %v2301 = vsub.f32 %v2134, %v2225
        %v2302 = vsub.f32 %v2048, %v2228
        %v2303 = vsub.f32 %v2137, %v2228
        %v2304 = vsub.f32 %v2050, %v2231
        %v2305 = vsub.f32 %v2139, %v2231
        %v2306 = vsub.f32 %v2053, %v2234
        %v2307 = vsub.f32 %v2142, %v2234
        %v2308 = vsub.f32 %v2055, %v2237
        %v2309 = vsub.f32 %v2144, %v2237
        %v2310 = vsub.f32 %v2058, %v2240
        %v2311 = vsub.f32 %v2147, %v2240
        %v2312 = vsub.f32 %v2060, %v2243
        %v2313 = vsub.f32 %v2149, %v2243
        %v2314 = vsub.f32 %v2063, %v2246
        %v2315 = vsub.f32 %v2152, %v2246
        %v2316 = vsub.f32 %v2065, %v2249
        %v2317 = vsub.f32 %v2154, %v2249
        %v2318 = vsub.f32 %v2068, %v2252
        %v2319 = vsub.f32 %v2157, %v2252
        %v2320 = vsub.f32 %v2070, %v2255
        %v2321 = vsub.f32 %v2159, %v2255
        %v2322 = vsub.f32 %v2073, %v2258
        %v2323 = vsub.f32 %v2162, %v2258
        %v2324 = vsub.f32 %v2075, %v2261
        %v2325 = vsub.f32 %v2164, %v2261
        %v2326 = vmul.f32 %v2262, 1.442695
        %v2327 = vpow.pop %v2326
        %v2328 = vmul.f32 %v2263, 1.442695
        %v2329 = vpow.pop %v2328
        %v2330 = vmul.f32 %v2264, 1.442695
        %v2331 = vpow.pop %v2330
        %v2332 = vmul.f32 %v2265, 1.442695
        %v2333 = vpow.pop %v2332
        %v2334 = vmul.f32 %v2266, 1.442695
        %v2335 = vpow.pop %v2334
        %v2336 = vmul.f32 %v2267, 1.442695
        %v2337 = vpow.pop %v2336
        %v2338 = vmul.f32 %v2268, 1.442695
        %v2339 = vpow.pop %v2338
        %v2340 = vmul.f32 %v2269, 1.442695
        %v2341 = vpow.pop %v2340
        %v2342 = vmul.f32 %v2270, 1.442695
        %v2343 = vpow.pop %v2342
        %v2344 = vmul.f32 %v2271, 1.442695
        %v2345 = vpow.pop %v2344
        %v2346 = vmul.f32 %v2272, 1.442695
        %v2347 = vpow.pop %v2346
        %v2348 = vmul.f32 %v2273, 1.442695
        %v2349 = vpow.pop %v2348
        %v2350 = vmul.f32 %v2274, 1.442695
        %v2351 = vpow.pop %v2350
        %v2352 = vmul.f32 %v2275, 1.442695
        %v2353 = vpow.pop %v2352
        %v2354 = vmul.f32 %v2276, 1.442695
        %v2355 = vpow.pop %v2354
        %v2356 = vmul.f32 %v2277, 1.442695
        %v2357 = vpow.pop %v2356
        %v2358 = vmul.f32 %v2278, 1.442695
        %v2359 = vpow.pop %v2358
        %v2360 = vmul.f32 %v2279, 1.442695
        %v2361 = vpow.pop %v2360
        %v2362 = vmul.f32 %v2280, 1.442695
        %v2363 = vpow.pop %v2362
        %v2364 = vmul.f32 %v2281, 1.442695
        %v2365 = vpow.pop %v2364
        %v2366 = vmul.f32 %v2282, 1.442695
        %v2367 = vpow.pop %v2366
        %v2368 = vmul.f32 %v2283, 1.442695
        %v2369 = vpow.pop %v2368
        %v2370 = vmul.f32 %v2284, 1.442695
        %v2371 = vpow.pop %v2370
        %v2372 = vmul.f32 %v2285, 1.442695
        %v2373 = vpow.pop %v2372
        %v2374 = vmul.f32 %v2286, 1.442695
        %v2375 = vpow.pop %v2374
        %v2376 = vmul.f32 %v2287, 1.442695
        %v2377 = vpow.pop %v2376
        %v2378 = vmul.f32 %v2288, 1.442695
        %v2379 = vpow.pop %v2378
        %v2380 = vmul.f32 %v2289, 1.442695
        %v2381 = vpow.pop %v2380
        %v2382 = vmul.f32 %v2290, 1.442695
        %v2383 = vpow.pop %v2382
        %v2384 = vmul.f32 %v2291, 1.442695
        %v2385 = vpow.pop %v2384
        %v2386 = vmul.f32 %v2292, 1.442695
        %v2387 = vpow.pop %v2386
        %v2388 = vmul.f32 %v2293, 1.442695
        %v2389 = vpow.pop %v2388
        %v2390 = vmul.f32 %v2294, 1.442695
        %v2391 = vpow.pop %v2390
        %v2392 = vmul.f32 %v2295, 1.442695
        %v2393 = vpow.pop %v2392
        %v2394 = vmul.f32 %v2296, 1.442695
        %v2395 = vpow.pop %v2394
        %v2396 = vmul.f32 %v2297, 1.442695
        %v2397 = vpow.pop %v2396
        %v2398 = vmul.f32 %v2298, 1.442695
        %v2399 = vpow.pop %v2398
        %v2400 = vmul.f32 %v2299, 1.442695
        %v2401 = vpow.pop %v2400
        %v2402 = vmul.f32 %v2300, 1.442695
        %v2403 = vpow.pop %v2402
        %v2404 = vmul.f32 %v2301, 1.442695
        %v2405 = vpow.pop %v2404
        %v2406 = vmul.f32 %v2302, 1.442695
        %v2407 = vpow.pop %v2406
        %v2408 = vmul.f32 %v2303, 1.442695
        %v2409 = vpow.pop %v2408
        %v2410 = vmul.f32 %v2304, 1.442695
        %v2411 = vpow.pop %v2410
        %v2412 = vmul.f32 %v2305, 1.442695
        %v2413 = vpow.pop %v2412
        %v2414 = vmul.f32 %v2306, 1.442695
        %v2415 = vpow.pop %v2414
        %v2416 = vmul.f32 %v2307, 1.442695
        %v2417 = vpow.pop %v2416
        %v2418 = vmul.f32 %v2308, 1.442695
        %v2419 = vpow.pop %v2418
        %v2420 = vmul.f32 %v2309, 1.442695
        %v2421 = vpow.pop %v2420
        %v2422 = vmul.f32 %v2310, 1.442695
        %v2423 = vpow.pop %v2422
        %v2424 = vmul.f32 %v2311, 1.442695
        %v2425 = vpow.pop %v2424
        %v2426 = vmul.f32 %v2312, 1.442695
        %v2427 = vpow.pop %v2426
        %v2428 = vmul.f32 %v2313, 1.442695
        %v2429 = vpow.pop %v2428
        %v2430 = vmul.f32 %v2314, 1.442695
        %v2431 = vpow.pop %v2430
        %v2432 = vmul.f32 %v2315, 1.442695
        %v2433 = vpow.pop %v2432
        %v2434 = vmul.f32 %v2316, 1.442695
        %v2435 = vpow.pop %v2434
        %v2436 = vmul.f32 %v2317, 1.442695
        %v2437 = vpow.pop %v2436
        %v2438 = vmul.f32 %v2318, 1.442695
        %v2439 = vpow.pop %v2438
        %v2440 = vmul.f32 %v2319, 1.442695
        %v2441 = vpow.pop %v2440
        %v2442 = vmul.f32 %v2320, 1.442695
        %v2443 = vpow.pop %v2442
        %v2444 = vmul.f32 %v2321, 1.442695
        %v2445 = vpow.pop %v2444
        %v2446 = vmul.f32 %v2322, 1.442695
        %v2447 = vpow.pop %v2446
        %v2448 = vmul.f32 %v2323, 1.442695
        %v2449 = vpow.pop %v2448
        %v2450 = vmul.f32 %v2324, 1.442695
        %v2451 = vpow.pop %v2450
        %v2452 = vmul.f32 %v2325, 1.442695
        %v2453 = vpow.pop %v2452
        %v2454 = vpack.c.bf16 %v2331, %v2327
        %v2455 = vpack.c.bf16 %v2333, %v2329
        %v2456 = vpack.c.bf16 %v2339, %v2335
        %v2457 = vpack.c.bf16 %v2341, %v2337
        %v2458 = vpack.c.bf16 %v2347, %v2343
        %v2459 = vpack.c.bf16 %v2349, %v2345
        %v2460 = vpack.c.bf16 %v2355, %v2351
        %v2461 = vpack.c.bf16 %v2357, %v2353
        %v2462 = vpack.c.bf16 %v2363, %v2359
        %v2463 = vpack.c.bf16 %v2365, %v2361
        %v2464 = vpack.c.bf16 %v2371, %v2367
        %v2465 = vpack.c.bf16 %v2373, %v2369
        %v2466 = vpack.c.bf16 %v2379, %v2375
        %v2467 = vpack.c.bf16 %v2381, %v2377
        %v2468 = vpack.c.bf16 %v2387, %v2383
        %v2469 = vpack.c.bf16 %v2389, %v2385
        %v2470 = vpack.c.bf16 %v2395, %v2391
        %v2471 = vpack.c.bf16 %v2397, %v2393
        %v2472 = vpack.c.bf16 %v2403, %v2399
        %v2473 = vpack.c.bf16 %v2405, %v2401
        %v2474 = vpack.c.bf16 %v2411, %v2407
        %v2475 = vpack.c.bf16 %v2413, %v2409
        %v2476 = vpack.c.bf16 %v2419, %v2415
        %v2477 = vpack.c.bf16 %v2421, %v2417
        %v2478 = vpack.c.bf16 %v2427, %v2423
        %v2479 = vpack.c.bf16 %v2429, %v2425
        %v2480 = vpack.c.bf16 %v2435, %v2431
        %v2481 = vpack.c.bf16 %v2437, %v2433
        %v2482 = vpack.c.bf16 %v2443, %v2439
        %v2483 = vpack.c.bf16 %v2445, %v2441
        %v2484 = vpack.c.bf16 %v2451, %v2447
        %v2485 = vpack.c.bf16 %v2453, %v2449
        %v2487 = vunpack.c.l.b16 %v855
        %v2488 = vunpack.c.h.b16 %v855
        %v2489 = vpack.c.b16 %v2487, %v2487
        %v2490 = vpack.c.b16 %v2488, %v2488
        %2493 = vmatpush.bf16.xpose.msra.mxu0 %v2468
        %2494 = vmatpush.bf16.xpose.msra.mxu0 %v2466
        %2495 = vmatpush.bf16.xpose.msra.mxu0 %v2464
        %2496 = vmatpush.bf16.xpose.msra.mxu0 %v2462
        %2497 = vmatpush.bf16.xpose.msra.mxu0 %v2460
        %2498 = vmatpush.bf16.xpose.msra.mxu0 %v2458
        %2499 = vmatpush.bf16.xpose.msra.mxu0 %v2456
        %2500 = vmatpush.bf16.xpose.msra.mxu0 %v2454
        %2501 = vmatmul.bf16.gmra.mxu0 %v2489
        %v2502 = vpop.f32.mrf.mxu0
        %v2503 = vadd.f32 0.0, %v2502
        %v2504 = vpop.f32.mrf.mxu0
        %2505 = vdwg.mxu0
        %2506 = vmatpush.bf16.xpose.msra.mxu0 %v2469
        %2507 = vmatpush.bf16.xpose.msra.mxu0 %v2467
        %2508 = vmatpush.bf16.xpose.msra.mxu0 %v2465
        %2509 = vmatpush.bf16.xpose.msra.mxu0 %v2463
        %2510 = vmatpush.bf16.xpose.msra.mxu0 %v2461
        %2511 = vmatpush.bf16.xpose.msra.mxu0 %v2459
        %2512 = vmatpush.bf16.xpose.msra.mxu0 %v2457
        %2513 = vmatpush.bf16.xpose.msra.mxu0 %v2455
        %2514 = vmatmul.bf16.gmra.mxu0 %v2490
        %v2515 = vpop.f32.mrf.mxu0
        %v2516 = vadd.f32 %v2503, %v2515
        %v2517 = vpop.f32.mrf.mxu0
        %2518 = vdwg.mxu0
        %2519 = vmatpush.bf16.xpose.msra.mxu0 %v2484
        %2520 = vmatpush.bf16.xpose.msra.mxu0 %v2482
        %2521 = vmatpush.bf16.xpose.msra.mxu0 %v2480
        %2522 = vmatpush.bf16.xpose.msra.mxu0 %v2478
        %2523 = vmatpush.bf16.xpose.msra.mxu0 %v2476
        %2524 = vmatpush.bf16.xpose.msra.mxu0 %v2474
        %2525 = vmatpush.bf16.xpose.msra.mxu0 %v2472
        %2526 = vmatpush.bf16.xpose.msra.mxu0 %v2470
        %2527 = vmatmul.bf16.gmra.mxu0 %v2489
        %v2528 = vpop.f32.mrf.mxu0
        %v2529 = vadd.f32 0.0, %v2528
        %v2530 = vpop.f32.mrf.mxu0
        %2531 = vdwg.mxu0
        %2532 = vmatpush.bf16.xpose.msra.mxu0 %v2485
        %2533 = vmatpush.bf16.xpose.msra.mxu0 %v2483
        %2534 = vmatpush.bf16.xpose.msra.mxu0 %v2481
        %2535 = vmatpush.bf16.xpose.msra.mxu0 %v2479
        %2536 = vmatpush.bf16.xpose.msra.mxu0 %v2477
        %2537 = vmatpush.bf16.xpose.msra.mxu0 %v2475
        %2538 = vmatpush.bf16.xpose.msra.mxu0 %v2473
        %2539 = vmatpush.bf16.xpose.msra.mxu0 %v2471
        %2540 = vmatmul.bf16.gmra.mxu0 %v2490
        %v2541 = vpop.f32.mrf.mxu0
        %v2542 = vadd.f32 %v2529, %v2541
        %v2543 = vpop.f32.mrf.mxu0
        %2544 = vdwg.mxu0
        %2545 = vmatpush.bf16.xpose.msra.mxu0 %v2468
        %2546 = vmatpush.bf16.xpose.msra.mxu0 %v2466
        %2547 = vmatpush.bf16.xpose.msra.mxu0 %v2464
        %2548 = vmatpush.bf16.xpose.msra.mxu0 %v2462
        %2549 = vmatpush.bf16.xpose.msra.mxu0 %v2460
        %2550 = vmatpush.bf16.xpose.msra.mxu0 %v2458
        %2551 = vmatpush.bf16.xpose.msra.mxu0 %v2456
        %2552 = vmatpush.bf16.xpose.msra.mxu0 %v2454
        %2553 = vmatmul.bf16.gmra.mxu0 1065369472
        %v2554 = vpop.f32.mrf.mxu0
        %v2555 = vadd.f32 0.0, %v2554
        %v2556 = vpop.f32.mrf.mxu0
        %2557 = vdwg.mxu0
        %2558 = vmatpush.bf16.xpose.msra.mxu0 %v2469
        %2559 = vmatpush.bf16.xpose.msra.mxu0 %v2467
        %2560 = vmatpush.bf16.xpose.msra.mxu0 %v2465
        %2561 = vmatpush.bf16.xpose.msra.mxu0 %v2463
        %2562 = vmatpush.bf16.xpose.msra.mxu0 %v2461
        %2563 = vmatpush.bf16.xpose.msra.mxu0 %v2459
        %2564 = vmatpush.bf16.xpose.msra.mxu0 %v2457
        %2565 = vmatpush.bf16.xpose.msra.mxu0 %v2455
        %2566 = vmatmul.bf16.gmra.mxu0 1065369472
        %v2567 = vpop.f32.mrf.mxu0
        %v2568 = vadd.f32 %v2555, %v2567
        %v2569 = vpop.f32.mrf.mxu0
        %2570 = vdwg.mxu0
        %2571 = vmatpush.bf16.xpose.msra.mxu0 %v2484
        %2572 = vmatpush.bf16.xpose.msra.mxu0 %v2482
        %2573 = vmatpush.bf16.xpose.msra.mxu0 %v2480
        %2574 = vmatpush.bf16.xpose.msra.mxu0 %v2478
        %2575 = vmatpush.bf16.xpose.msra.mxu0 %v2476
        %2576 = vmatpush.bf16.xpose.msra.mxu0 %v2474
        %2577 = vmatpush.bf16.xpose.msra.mxu0 %v2472
        %2578 = vmatpush.bf16.xpose.msra.mxu0 %v2470
        %2579 = vmatmul.bf16.gmra.mxu0 1065369472
        %v2580 = vpop.f32.mrf.mxu0
        %v2581 = vadd.f32 0.0, %v2580
        %v2582 = vpop.f32.mrf.mxu0
        %2583 = vdwg.mxu0
        %2584 = vmatpush.bf16.xpose.msra.mxu0 %v2485
        %2585 = vmatpush.bf16.xpose.msra.mxu0 %v2483
        %2586 = vmatpush.bf16.xpose.msra.mxu0 %v2481
        %2587 = vmatpush.bf16.xpose.msra.mxu0 %v2479
        %2588 = vmatpush.bf16.xpose.msra.mxu0 %v2477
        %2589 = vmatpush.bf16.xpose.msra.mxu0 %v2475
        %2590 = vmatpush.bf16.xpose.msra.mxu0 %v2473
        %2591 = vmatpush.bf16.xpose.msra.mxu0 %v2471
        %2592 = vmatmul.bf16.gmra.mxu0 1065369472
        %v2593 = vpop.f32.mrf.mxu0
        %v2594 = vadd.f32 %v2581, %v2593
        %v2595 = vpop.f32.mrf.mxu0
        %2596 = vdwg.mxu0
        %v2597 = vrcp.pop %v2568
        %v2598 = vmul.f32 %v2568, %v2597
        %v2599 = vsub.f32 1.0, %v2598
        %v2600 = vmul.f32 %v2597, %v2599
        %v2601 = vadd.f32 %v2597, %v2600
        %vm2602 = vweird.f32 %v2568
        %vm2603 = vweird.f32 %v2597
        %vm2604 = vmor %vm2602, %vm2603
        %v2605 = vsel %vm2604, %v2597, %v2601
        %v2606 = vand.u32 2147483647, %v2568
        %vm2607 = vcmp.eq.f32.partialorder %v2606, 8.507059e+37
        %v2608 = vand.u32 %v2568, 2147483648
        %v2609 = vor.u32 1.1754944e-38, %v2608
        %v2610 = vsel %vm2607, %v2609, %v2605
        %v2611 = vmul.f32 1.0, %v2610
        %v2612 = vrcp.pop %v2594
        %v2613 = vmul.f32 %v2594, %v2612
        %v2614 = vsub.f32 1.0, %v2613
        %v2615 = vmul.f32 %v2612, %v2614
        %v2616 = vadd.f32 %v2612, %v2615
        %vm2617 = vweird.f32 %v2594
        %vm2618 = vweird.f32 %v2612
        %vm2619 = vmor %vm2617, %vm2618
        %v2620 = vsel %vm2619, %v2612, %v2616
        %v2621 = vand.u32 2147483647, %v2594
        %vm2622 = vcmp.eq.f32.partialorder %v2621, 8.507059e+37
        %v2623 = vand.u32 %v2594, 2147483648
        %v2624 = vor.u32 1.1754944e-38, %v2623
        %v2625 = vsel %vm2622, %v2624, %v2620
        %v2626 = vmul.f32 1.0, %v2625
        %v2627 = vperm.slane %v2611, 0
        %v2628 = vperm.slane %v2626, 0
        %v2629 = vmul.f32 %v2516, %v2627
        %v2630 = vmul.f32 %v2542, %v2628
        %2631 = vrot.lane.b32.xlu0 %v1177, 112
        %v2632 = vpop.permute.xlu0 %2631
        %2633 = vrot.lane.b32.xlu0 %v1178, 112
        %v2634 = vpop.permute.xlu0 %2633
        %2635 = vrot.lane.b32.xlu0 %v1179, 112
        %v2636 = vpop.permute.xlu0 %2635
        %2637 = vrot.lane.b32.xlu0 %v1180, 112
        %v2638 = vpop.permute.xlu0 %2637
        %2639 = vrot.lane.b32.xlu0 %v1181, 112
        %v2640 = vpop.permute.xlu0 %2639
        %2641 = vrot.lane.b32.xlu0 %v1182, 112
        %v2642 = vpop.permute.xlu0 %2641
        %2643 = vrot.lane.b32.xlu0 %v1183, 112
        %v2644 = vpop.permute.xlu0 %2643
        %2645 = vrot.lane.b32.xlu0 %v1184, 112
        %v2646 = vpop.permute.xlu0 %2645
        %2647 = vrot.lane.b32.xlu0 %v1185, 112
        %v2648 = vpop.permute.xlu0 %2647
        %2649 = vrot.lane.b32.xlu0 %v1186, 112
        %v2650 = vpop.permute.xlu0 %2649
        %2651 = vrot.lane.b32.xlu0 %v1187, 112
        %v2652 = vpop.permute.xlu0 %2651
        %2653 = vrot.lane.b32.xlu0 %v1188, 112
        %v2654 = vpop.permute.xlu0 %2653
        %2655 = vrot.lane.b32.xlu0 %v1189, 112
        %v2656 = vpop.permute.xlu0 %2655
        %2657 = vrot.lane.b32.xlu0 %v1190, 112
        %v2658 = vpop.permute.xlu0 %2657
        %2659 = vrot.lane.b32.xlu0 %v1191, 112
        %v2660 = vpop.permute.xlu0 %2659
        %2661 = vrot.lane.b32.xlu0 %v1192, 112
        %v2662 = vpop.permute.xlu0 %2661
        %v2664 = vunpack.c.l.b16 %v852
        %v2665 = vunpack.c.h.b16 %v852
        %v2666 = vpack.c.b16 %v2664, %v2664
        %v2667 = vpack.c.b16 %v2665, %v2665
        %v2669 = vsel %vm1198, %v2632, 0
        %v2672 = vsel %vm1198, %v2634, 0
        %v2675 = vsel %vm1198, %v2636, 0
        %v2678 = vsel %vm1198, %v2638, 0
        %v2681 = vsel %vm1198, %v2640, 0
        %v2684 = vsel %vm1198, %v2642, 0
        %v2687 = vsel %vm1198, %v2644, 0
        %v2690 = vsel %vm1198, %v2646, 0
        %v2693 = vsel %vm1198, %v2648, 0
        %v2696 = vsel %vm1198, %v2650, 0
        %v2699 = vsel %vm1198, %v2652, 0
        %v2702 = vsel %vm1198, %v2654, 0
        %v2705 = vsel %vm1198, %v2656, 0
        %v2708 = vsel %vm1198, %v2658, 0
        %v2711 = vsel %vm1198, %v2660, 0
        %v2714 = vsel %vm1198, %v2662, 0
        %v2717 = vsel %vm1247, %v2666, 0
        %v2720 = vsel %vm1247, %v2667, 0
        %2722 = vmatpush.bf16.msra.mxu0 0
        %2723 = vmatpush.bf16.msra.mxu0 0
        %2724 = vmatpush.bf16.msra.mxu0 0
        %2725 = vmatpush.bf16.msra.mxu0 0
        %2726 = vmatpush.bf16.msra.mxu0 0
        %2727 = vmatpush.bf16.msra.mxu0 0
        %2728 = vmatpush.bf16.msra.mxu0 0
        %2729 = vmatpush.bf16.msra.mxu0 %v2717
        %2730 = vmatmul.bf16.gmra.mxu0 %v2669
        %v2731 = vpop.f32.mrf.mxu0
        %v2732 = vadd.f32 0.0, %v2731
        %v2733 = vpop.f32.mrf.mxu0
        %v2734 = vadd.f32 0.0, %v2733
        %2735 = vmatmul.bf16.gmra.mxu0 %v2672
        %v2736 = vpop.f32.mrf.mxu0
        %v2737 = vadd.f32 0.0, %v2736
        %v2738 = vpop.f32.mrf.mxu0
        %v2739 = vadd.f32 0.0, %v2738
        %2740 = vmatmul.bf16.gmra.mxu0 %v2675
        %v2741 = vpop.f32.mrf.mxu0
        %v2742 = vadd.f32 0.0, %v2741
        %v2743 = vpop.f32.mrf.mxu0
        %v2744 = vadd.f32 0.0, %v2743
        %2745 = vmatmul.bf16.gmra.mxu0 %v2678
        %v2746 = vpop.f32.mrf.mxu0
        %v2747 = vadd.f32 0.0, %v2746
        %v2748 = vpop.f32.mrf.mxu0
        %v2749 = vadd.f32 0.0, %v2748
        %2750 = vmatmul.bf16.gmra.mxu0 %v2681
        %v2751 = vpop.f32.mrf.mxu0
        %v2752 = vadd.f32 0.0, %v2751
        %v2753 = vpop.f32.mrf.mxu0
        %v2754 = vadd.f32 0.0, %v2753
        %2755 = vmatmul.bf16.gmra.mxu0 %v2684
        %v2756 = vpop.f32.mrf.mxu0
        %v2757 = vadd.f32 0.0, %v2756
        %v2758 = vpop.f32.mrf.mxu0
        %v2759 = vadd.f32 0.0, %v2758
        %2760 = vmatmul.bf16.gmra.mxu0 %v2687
        %v2761 = vpop.f32.mrf.mxu0
        %v2762 = vadd.f32 0.0, %v2761
        %v2763 = vpop.f32.mrf.mxu0
        %v2764 = vadd.f32 0.0, %v2763
        %2765 = vmatmul.bf16.gmra.mxu0 %v2690
        %v2766 = vpop.f32.mrf.mxu0
        %v2767 = vadd.f32 0.0, %v2766
        %v2768 = vpop.f32.mrf.mxu0
        %v2769 = vadd.f32 0.0, %v2768
        %2770 = vmatmul.bf16.gmra.mxu0 %v2693
        %v2771 = vpop.f32.mrf.mxu0
        %v2772 = vadd.f32 0.0, %v2771
        %v2773 = vpop.f32.mrf.mxu0
        %v2774 = vadd.f32 0.0, %v2773
        %2775 = vmatmul.bf16.gmra.mxu0 %v2696
        %v2776 = vpop.f32.mrf.mxu0
        %v2777 = vadd.f32 0.0, %v2776
        %v2778 = vpop.f32.mrf.mxu0
        %v2779 = vadd.f32 0.0, %v2778
        %2780 = vmatmul.bf16.gmra.mxu0 %v2699
        %v2781 = vpop.f32.mrf.mxu0
        %v2782 = vadd.f32 0.0, %v2781
        %v2783 = vpop.f32.mrf.mxu0
        %v2784 = vadd.f32 0.0, %v2783
        %2785 = vmatmul.bf16.gmra.mxu0 %v2702
        %v2786 = vpop.f32.mrf.mxu0
        %v2787 = vadd.f32 0.0, %v2786
        %v2788 = vpop.f32.mrf.mxu0
        %v2789 = vadd.f32 0.0, %v2788
        %2790 = vmatmul.bf16.gmra.mxu0 %v2705
        %v2791 = vpop.f32.mrf.mxu0
        %v2792 = vadd.f32 0.0, %v2791
        %v2793 = vpop.f32.mrf.mxu0
        %v2794 = vadd.f32 0.0, %v2793
        %2795 = vmatmul.bf16.gmra.mxu0 %v2708
        %v2796 = vpop.f32.mrf.mxu0
        %v2797 = vadd.f32 0.0, %v2796
        %v2798 = vpop.f32.mrf.mxu0
        %v2799 = vadd.f32 0.0, %v2798
        %2800 = vmatmul.bf16.gmra.mxu0 %v2711
        %v2801 = vpop.f32.mrf.mxu0
        %v2802 = vadd.f32 0.0, %v2801
        %v2803 = vpop.f32.mrf.mxu0
        %v2804 = vadd.f32 0.0, %v2803
        %2805 = vmatmul.bf16.gmra.mxu0 %v2714
        %v2806 = vpop.f32.mrf.mxu0
        %v2807 = vadd.f32 0.0, %v2806
        %v2808 = vpop.f32.mrf.mxu0
        %v2809 = vadd.f32 0.0, %v2808
        %2810 = vdwg.mxu0
        %2811 = vmatpush.bf16.msra.mxu0 0
        %2812 = vmatpush.bf16.msra.mxu0 0
        %2813 = vmatpush.bf16.msra.mxu0 0
        %2814 = vmatpush.bf16.msra.mxu0 0
        %2815 = vmatpush.bf16.msra.mxu0 0
        %2816 = vmatpush.bf16.msra.mxu0 0
        %2817 = vmatpush.bf16.msra.mxu0 0
        %2818 = vmatpush.bf16.msra.mxu0 %v2720
        %2819 = vmatmul.bf16.gmra.mxu0 %v2669
        %v2820 = vpop.f32.mrf.mxu0
        %v2821 = vadd.f32 0.0, %v2820
        %v2822 = vpop.f32.mrf.mxu0
        %v2823 = vadd.f32 0.0, %v2822
        %2824 = vmatmul.bf16.gmra.mxu0 %v2672
        %v2825 = vpop.f32.mrf.mxu0
        %v2826 = vadd.f32 0.0, %v2825
        %v2827 = vpop.f32.mrf.mxu0
        %v2828 = vadd.f32 0.0, %v2827
        %2829 = vmatmul.bf16.gmra.mxu0 %v2675
        %v2830 = vpop.f32.mrf.mxu0
        %v2831 = vadd.f32 0.0, %v2830
        %v2832 = vpop.f32.mrf.mxu0
        %v2833 = vadd.f32 0.0, %v2832
        %2834 = vmatmul.bf16.gmra.mxu0 %v2678
        %v2835 = vpop.f32.mrf.mxu0
        %v2836 = vadd.f32 0.0, %v2835
        %v2837 = vpop.f32.mrf.mxu0
        %v2838 = vadd.f32 0.0, %v2837
        %2839 = vmatmul.bf16.gmra.mxu0 %v2681
        %v2840 = vpop.f32.mrf.mxu0
        %v2841 = vadd.f32 0.0, %v2840
        %v2842 = vpop.f32.mrf.mxu0
        %v2843 = vadd.f32 0.0, %v2842
        %2844 = vmatmul.bf16.gmra.mxu0 %v2684
        %v2845 = vpop.f32.mrf.mxu0
        %v2846 = vadd.f32 0.0, %v2845
        %v2847 = vpop.f32.mrf.mxu0
        %v2848 = vadd.f32 0.0, %v2847
        %2849 = vmatmul.bf16.gmra.mxu0 %v2687
        %v2850 = vpop.f32.mrf.mxu0
        %v2851 = vadd.f32 0.0, %v2850
        %v2852 = vpop.f32.mrf.mxu0
        %v2853 = vadd.f32 0.0, %v2852
        %2854 = vmatmul.bf16.gmra.mxu0 %v2690
        %v2855 = vpop.f32.mrf.mxu0
        %v2856 = vadd.f32 0.0, %v2855
        %v2857 = vpop.f32.mrf.mxu0
        %v2858 = vadd.f32 0.0, %v2857
        %2859 = vmatmul.bf16.gmra.mxu0 %v2693
        %v2860 = vpop.f32.mrf.mxu0
        %v2861 = vadd.f32 0.0, %v2860
        %v2862 = vpop.f32.mrf.mxu0
        %v2863 = vadd.f32 0.0, %v2862
        %2864 = vmatmul.bf16.gmra.mxu0 %v2696
        %v2865 = vpop.f32.mrf.mxu0
        %v2866 = vadd.f32 0.0, %v2865
        %v2867 = vpop.f32.mrf.mxu0
        %v2868 = vadd.f32 0.0, %v2867
        %2869 = vmatmul.bf16.gmra.mxu0 %v2699
        %v2870 = vpop.f32.mrf.mxu0
        %v2871 = vadd.f32 0.0, %v2870
        %v2872 = vpop.f32.mrf.mxu0
        %v2873 = vadd.f32 0.0, %v2872
        %2874 = vmatmul.bf16.gmra.mxu0 %v2702
        %v2875 = vpop.f32.mrf.mxu0
        %v2876 = vadd.f32 0.0, %v2875
        %v2877 = vpop.f32.mrf.mxu0
        %v2878 = vadd.f32 0.0, %v2877
        %2879 = vmatmul.bf16.gmra.mxu0 %v2705
        %v2880 = vpop.f32.mrf.mxu0
        %v2881 = vadd.f32 0.0, %v2880
        %v2882 = vpop.f32.mrf.mxu0
        %v2883 = vadd.f32 0.0, %v2882
        %2884 = vmatmul.bf16.gmra.mxu0 %v2708
        %v2885 = vpop.f32.mrf.mxu0
        %v2886 = vadd.f32 0.0, %v2885
        %v2887 = vpop.f32.mrf.mxu0
        %v2888 = vadd.f32 0.0, %v2887
        %2889 = vmatmul.bf16.gmra.mxu0 %v2711
        %v2890 = vpop.f32.mrf.mxu0
        %v2891 = vadd.f32 0.0, %v2890
        %v2892 = vpop.f32.mrf.mxu0
        %v2893 = vadd.f32 0.0, %v2892
        %2894 = vmatmul.bf16.gmra.mxu0 %v2714
        %v2895 = vpop.f32.mrf.mxu0
        %v2896 = vadd.f32 0.0, %v2895
        %v2897 = vpop.f32.mrf.mxu0
        %v2898 = vadd.f32 0.0, %v2897
        %2899 = vdwg.mxu0
        %v2900 = vmax.f32 %v2732, %v2821
        %2901 = vmax.xlane.f32.xlu0 %v2900
        %v2902 = vpop.xlane.xlu0 %2901
        %v2903 = vmax.f32 %v2734, %v2823
        %2904 = vmax.xlane.f32.xlu0 %v2903
        %v2905 = vpop.xlane.xlu0 %2904
        %v2906 = vmax.f32 %v2737, %v2826
        %2907 = vmax.xlane.f32.xlu0 %v2906
        %v2908 = vpop.xlane.xlu0 %2907
        %v2909 = vmax.f32 %v2739, %v2828
        %2910 = vmax.xlane.f32.xlu0 %v2909
        %v2911 = vpop.xlane.xlu0 %2910
        %v2912 = vmax.f32 %v2742, %v2831
        %2913 = vmax.xlane.f32.xlu0 %v2912
        %v2914 = vpop.xlane.xlu0 %2913
        %v2915 = vmax.f32 %v2744, %v2833
        %2916 = vmax.xlane.f32.xlu0 %v2915
        %v2917 = vpop.xlane.xlu0 %2916
        %v2918 = vmax.f32 %v2747, %v2836
        %2919 = vmax.xlane.f32.xlu0 %v2918
        %v2920 = vpop.xlane.xlu0 %2919
        %v2921 = vmax.f32 %v2749, %v2838
        %2922 = vmax.xlane.f32.xlu0 %v2921
        %v2923 = vpop.xlane.xlu0 %2922
        %v2924 = vmax.f32 %v2752, %v2841
        %2925 = vmax.xlane.f32.xlu0 %v2924
        %v2926 = vpop.xlane.xlu0 %2925
        %v2927 = vmax.f32 %v2754, %v2843
        %2928 = vmax.xlane.f32.xlu0 %v2927
        %v2929 = vpop.xlane.xlu0 %2928
        %v2930 = vmax.f32 %v2757, %v2846
        %2931 = vmax.xlane.f32.xlu0 %v2930
        %v2932 = vpop.xlane.xlu0 %2931
        %v2933 = vmax.f32 %v2759, %v2848
        %2934 = vmax.xlane.f32.xlu0 %v2933
        %v2935 = vpop.xlane.xlu0 %2934
        %v2936 = vmax.f32 %v2762, %v2851
        %2937 = vmax.xlane.f32.xlu0 %v2936
        %v2938 = vpop.xlane.xlu0 %2937
        %v2939 = vmax.f32 %v2764, %v2853
        %2940 = vmax.xlane.f32.xlu0 %v2939
        %v2941 = vpop.xlane.xlu0 %2940
        %v2942 = vmax.f32 %v2767, %v2856
        %2943 = vmax.xlane.f32.xlu0 %v2942
        %v2944 = vpop.xlane.xlu0 %2943
        %v2945 = vmax.f32 %v2769, %v2858
        %2946 = vmax.xlane.f32.xlu0 %v2945
        %v2947 = vpop.xlane.xlu0 %2946
        %v2948 = vmax.f32 %v2772, %v2861
        %2949 = vmax.xlane.f32.xlu0 %v2948
        %v2950 = vpop.xlane.xlu0 %2949
        %v2951 = vmax.f32 %v2774, %v2863
        %2952 = vmax.xlane.f32.xlu0 %v2951
        %v2953 = vpop.xlane.xlu0 %2952
        %v2954 = vmax.f32 %v2777, %v2866
        %2955 = vmax.xlane.f32.xlu0 %v2954
        %v2956 = vpop.xlane.xlu0 %2955
        %v2957 = vmax.f32 %v2779, %v2868
        %2958 = vmax.xlane.f32.xlu0 %v2957
        %v2959 = vpop.xlane.xlu0 %2958
        %v2960 = vmax.f32 %v2782, %v2871
        %2961 = vmax.xlane.f32.xlu0 %v2960
        %v2962 = vpop.xlane.xlu0 %2961
        %v2963 = vmax.f32 %v2784, %v2873
        %2964 = vmax.xlane.f32.xlu0 %v2963
        %v2965 = vpop.xlane.xlu0 %2964
        %v2966 = vmax.f32 %v2787, %v2876
        %2967 = vmax.xlane.f32.xlu0 %v2966
        %v2968 = vpop.xlane.xlu0 %2967
        %v2969 = vmax.f32 %v2789, %v2878
        %2970 = vmax.xlane.f32.xlu0 %v2969
        %v2971 = vpop.xlane.xlu0 %2970
        %v2972 = vmax.f32 %v2792, %v2881
        %2973 = vmax.xlane.f32.xlu0 %v2972
        %v2974 = vpop.xlane.xlu0 %2973
        %v2975 = vmax.f32 %v2794, %v2883
        %2976 = vmax.xlane.f32.xlu0 %v2975
        %v2977 = vpop.xlane.xlu0 %2976
        %v2978 = vmax.f32 %v2797, %v2886
        %2979 = vmax.xlane.f32.xlu0 %v2978
        %v2980 = vpop.xlane.xlu0 %2979
        %v2981 = vmax.f32 %v2799, %v2888
        %2982 = vmax.xlane.f32.xlu0 %v2981
        %v2983 = vpop.xlane.xlu0 %2982
        %v2984 = vmax.f32 %v2802, %v2891
        %2985 = vmax.xlane.f32.xlu0 %v2984
        %v2986 = vpop.xlane.xlu0 %2985
        %v2987 = vmax.f32 %v2804, %v2893
        %2988 = vmax.xlane.f32.xlu0 %v2987
        %v2989 = vpop.xlane.xlu0 %2988
        %v2990 = vmax.f32 %v2807, %v2896
        %2991 = vmax.xlane.f32.xlu0 %v2990
        %v2992 = vpop.xlane.xlu0 %2991
        %v2993 = vmax.f32 %v2809, %v2898
        %2994 = vmax.xlane.f32.xlu0 %v2993
        %v2995 = vpop.xlane.xlu0 %2994
        %v2996 = vsub.f32 %v2732, %v2902
        %v2997 = vsub.f32 %v2821, %v2902
        %v2998 = vsub.f32 %v2734, %v2905
        %v2999 = vsub.f32 %v2823, %v2905
        %v3000 = vsub.f32 %v2737, %v2908
        %v3001 = vsub.f32 %v2826, %v2908
        %v3002 = vsub.f32 %v2739, %v2911
        %v3003 = vsub.f32 %v2828, %v2911
        %v3004 = vsub.f32 %v2742, %v2914
        %v3005 = vsub.f32 %v2831, %v2914
        %v3006 = vsub.f32 %v2744, %v2917
        %v3007 = vsub.f32 %v2833, %v2917
        %v3008 = vsub.f32 %v2747, %v2920
        %v3009 = vsub.f32 %v2836, %v2920
        %v3010 = vsub.f32 %v2749, %v2923
        %v3011 = vsub.f32 %v2838, %v2923
        %v3012 = vsub.f32 %v2752, %v2926
        %v3013 = vsub.f32 %v2841, %v2926
        %v3014 = vsub.f32 %v2754, %v2929
        %v3015 = vsub.f32 %v2843, %v2929
        %v3016 = vsub.f32 %v2757, %v2932
        %v3017 = vsub.f32 %v2846, %v2932
        %v3018 = vsub.f32 %v2759, %v2935
        %v3019 = vsub.f32 %v2848, %v2935
        %v3020 = vsub.f32 %v2762, %v2938
        %v3021 = vsub.f32 %v2851, %v2938
        %v3022 = vsub.f32 %v2764, %v2941
        %v3023 = vsub.f32 %v2853, %v2941
        %v3024 = vsub.f32 %v2767, %v2944
        %v3025 = vsub.f32 %v2856, %v2944
        %v3026 = vsub.f32 %v2769, %v2947
        %v3027 = vsub.f32 %v2858, %v2947
        %v3028 = vsub.f32 %v2772, %v2950
        %v3029 = vsub.f32 %v2861, %v2950
        %v3030 = vsub.f32 %v2774, %v2953
        %v3031 = vsub.f32 %v2863, %v2953
        %v3032 = vsub.f32 %v2777, %v2956
        %v3033 = vsub.f32 %v2866, %v2956
        %v3034 = vsub.f32 %v2779, %v2959
        %v3035 = vsub.f32 %v2868, %v2959
        %v3036 = vsub.f32 %v2782, %v2962
        %v3037 = vsub.f32 %v2871, %v2962
        %v3038 = vsub.f32 %v2784, %v2965
        %v3039 = vsub.f32 %v2873, %v2965
        %v3040 = vsub.f32 %v2787, %v2968
        %v3041 = vsub.f32 %v2876, %v2968
        %v3042 = vsub.f32 %v2789, %v2971
        %v3043 = vsub.f32 %v2878, %v2971
        %v3044 = vsub.f32 %v2792, %v2974
        %v3045 = vsub.f32 %v2881, %v2974
        %v3046 = vsub.f32 %v2794, %v2977
        %v3047 = vsub.f32 %v2883, %v2977
        %v3048 = vsub.f32 %v2797, %v2980
        %v3049 = vsub.f32 %v2886, %v2980
        %v3050 = vsub.f32 %v2799, %v2983
        %v3051 = vsub.f32 %v2888, %v2983
        %v3052 = vsub.f32 %v2802, %v2986
        %v3053 = vsub.f32 %v2891, %v2986
        %v3054 = vsub.f32 %v2804, %v2989
        %v3055 = vsub.f32 %v2893, %v2989
        %v3056 = vsub.f32 %v2807, %v2992
        %v3057 = vsub.f32 %v2896, %v2992
        %v3058 = vsub.f32 %v2809, %v2995
        %v3059 = vsub.f32 %v2898, %v2995
        %v3060 = vmul.f32 %v2996, 1.442695
        %v3061 = vpow.pop %v3060
        %v3062 = vmul.f32 %v2997, 1.442695
        %v3063 = vpow.pop %v3062
        %v3064 = vmul.f32 %v2998, 1.442695
        %v3065 = vpow.pop %v3064
        %v3066 = vmul.f32 %v2999, 1.442695
        %v3067 = vpow.pop %v3066
        %v3068 = vmul.f32 %v3000, 1.442695
        %v3069 = vpow.pop %v3068
        %v3070 = vmul.f32 %v3001, 1.442695
        %v3071 = vpow.pop %v3070
        %v3072 = vmul.f32 %v3002, 1.442695
        %v3073 = vpow.pop %v3072
        %v3074 = vmul.f32 %v3003, 1.442695
        %v3075 = vpow.pop %v3074
        %v3076 = vmul.f32 %v3004, 1.442695
        %v3077 = vpow.pop %v3076
        %v3078 = vmul.f32 %v3005, 1.442695
        %v3079 = vpow.pop %v3078
        %v3080 = vmul.f32 %v3006, 1.442695
        %v3081 = vpow.pop %v3080
        %v3082 = vmul.f32 %v3007, 1.442695
        %v3083 = vpow.pop %v3082
        %v3084 = vmul.f32 %v3008, 1.442695
        %v3085 = vpow.pop %v3084
        %v3086 = vmul.f32 %v3009, 1.442695
        %v3087 = vpow.pop %v3086
        %v3088 = vmul.f32 %v3010, 1.442695
        %v3089 = vpow.pop %v3088
        %v3090 = vmul.f32 %v3011, 1.442695
        %v3091 = vpow.pop %v3090
        %v3092 = vmul.f32 %v3012, 1.442695
        %v3093 = vpow.pop %v3092
        %v3094 = vmul.f32 %v3013, 1.442695
        %v3095 = vpow.pop %v3094
        %v3096 = vmul.f32 %v3014, 1.442695
        %v3097 = vpow.pop %v3096
        %v3098 = vmul.f32 %v3015, 1.442695
        %v3099 = vpow.pop %v3098
        %v3100 = vmul.f32 %v3016, 1.442695
        %v3101 = vpow.pop %v3100
        %v3102 = vmul.f32 %v3017, 1.442695
        %v3103 = vpow.pop %v3102
        %v3104 = vmul.f32 %v3018, 1.442695
        %v3105 = vpow.pop %v3104
        %v3106 = vmul.f32 %v3019, 1.442695
        %v3107 = vpow.pop %v3106
        %v3108 = vmul.f32 %v3020, 1.442695
        %v3109 = vpow.pop %v3108
        %v3110 = vmul.f32 %v3021, 1.442695
        %v3111 = vpow.pop %v3110
        %v3112 = vmul.f32 %v3022, 1.442695
        %v3113 = vpow.pop %v3112
        %v3114 = vmul.f32 %v3023, 1.442695
        %v3115 = vpow.pop %v3114
        %v3116 = vmul.f32 %v3024, 1.442695
        %v3117 = vpow.pop %v3116
        %v3118 = vmul.f32 %v3025, 1.442695
        %v3119 = vpow.pop %v3118
        %v3120 = vmul.f32 %v3026, 1.442695
        %v3121 = vpow.pop %v3120
        %v3122 = vmul.f32 %v3027, 1.442695
        %v3123 = vpow.pop %v3122
        %v3124 = vmul.f32 %v3028, 1.442695
        %v3125 = vpow.pop %v3124
        %v3126 = vmul.f32 %v3029, 1.442695
        %v3127 = vpow.pop %v3126
        %v3128 = vmul.f32 %v3030, 1.442695
        %v3129 = vpow.pop %v3128
        %v3130 = vmul.f32 %v3031, 1.442695
        %v3131 = vpow.pop %v3130
        %v3132 = vmul.f32 %v3032, 1.442695
        %v3133 = vpow.pop %v3132
        %v3134 = vmul.f32 %v3033, 1.442695
        %v3135 = vpow.pop %v3134
        %v3136 = vmul.f32 %v3034, 1.442695
        %v3137 = vpow.pop %v3136
        %v3138 = vmul.f32 %v3035, 1.442695
        %v3139 = vpow.pop %v3138
        %v3140 = vmul.f32 %v3036, 1.442695
        %v3141 = vpow.pop %v3140
        %v3142 = vmul.f32 %v3037, 1.442695
        %v3143 = vpow.pop %v3142
        %v3144 = vmul.f32 %v3038, 1.442695
        %v3145 = vpow.pop %v3144
        %v3146 = vmul.f32 %v3039, 1.442695
        %v3147 = vpow.pop %v3146
        %v3148 = vmul.f32 %v3040, 1.442695
        %v3149 = vpow.pop %v3148
        %v3150 = vmul.f32 %v3041, 1.442695
        %v3151 = vpow.pop %v3150
        %v3152 = vmul.f32 %v3042, 1.442695
        %v3153 = vpow.pop %v3152
        %v3154 = vmul.f32 %v3043, 1.442695
        %v3155 = vpow.pop %v3154
        %v3156 = vmul.f32 %v3044, 1.442695
        %v3157 = vpow.pop %v3156
        %v3158 = vmul.f32 %v3045, 1.442695
        %v3159 = vpow.pop %v3158
        %v3160 = vmul.f32 %v3046, 1.442695
        %v3161 = vpow.pop %v3160
        %v3162 = vmul.f32 %v3047, 1.442695
        %v3163 = vpow.pop %v3162
        %v3164 = vmul.f32 %v3048, 1.442695
        %v3165 = vpow.pop %v3164
        %v3166 = vmul.f32 %v3049, 1.442695
        %v3167 = vpow.pop %v3166
        %v3168 = vmul.f32 %v3050, 1.442695
        %v3169 = vpow.pop %v3168
        %v3170 = vmul.f32 %v3051, 1.442695
        %v3171 = vpow.pop %v3170
        %v3172 = vmul.f32 %v3052, 1.442695
        %v3173 = vpow.pop %v3172
        %v3174 = vmul.f32 %v3053, 1.442695
        %v3175 = vpow.pop %v3174
        %v3176 = vmul.f32 %v3054, 1.442695
        %v3177 = vpow.pop %v3176
        %v3178 = vmul.f32 %v3055, 1.442695
        %v3179 = vpow.pop %v3178
        %v3180 = vmul.f32 %v3056, 1.442695
        %v3181 = vpow.pop %v3180
        %v3182 = vmul.f32 %v3057, 1.442695
        %v3183 = vpow.pop %v3182
        %v3184 = vmul.f32 %v3058, 1.442695
        %v3185 = vpow.pop %v3184
        %v3186 = vmul.f32 %v3059, 1.442695
        %v3187 = vpow.pop %v3186
        %v3188 = vpack.c.bf16 %v3065, %v3061
        %v3189 = vpack.c.bf16 %v3067, %v3063
        %v3190 = vpack.c.bf16 %v3073, %v3069
        %v3191 = vpack.c.bf16 %v3075, %v3071
        %v3192 = vpack.c.bf16 %v3081, %v3077
        %v3193 = vpack.c.bf16 %v3083, %v3079
        %v3194 = vpack.c.bf16 %v3089, %v3085
        %v3195 = vpack.c.bf16 %v3091, %v3087
        %v3196 = vpack.c.bf16 %v3097, %v3093
        %v3197 = vpack.c.bf16 %v3099, %v3095
        %v3198 = vpack.c.bf16 %v3105, %v3101
        %v3199 = vpack.c.bf16 %v3107, %v3103
        %v3200 = vpack.c.bf16 %v3113, %v3109
        %v3201 = vpack.c.bf16 %v3115, %v3111
        %v3202 = vpack.c.bf16 %v3121, %v3117
        %v3203 = vpack.c.bf16 %v3123, %v3119
        %v3204 = vpack.c.bf16 %v3129, %v3125
        %v3205 = vpack.c.bf16 %v3131, %v3127
        %v3206 = vpack.c.bf16 %v3137, %v3133
        %v3207 = vpack.c.bf16 %v3139, %v3135
        %v3208 = vpack.c.bf16 %v3145, %v3141
        %v3209 = vpack.c.bf16 %v3147, %v3143
        %v3210 = vpack.c.bf16 %v3153, %v3149
        %v3211 = vpack.c.bf16 %v3155, %v3151
        %v3212 = vpack.c.bf16 %v3161, %v3157
        %v3213 = vpack.c.bf16 %v3163, %v3159
        %v3214 = vpack.c.bf16 %v3169, %v3165
        %v3215 = vpack.c.bf16 %v3171, %v3167
        %v3216 = vpack.c.bf16 %v3177, %v3173
        %v3217 = vpack.c.bf16 %v3179, %v3175
        %v3218 = vpack.c.bf16 %v3185, %v3181
        %v3219 = vpack.c.bf16 %v3187, %v3183
        %v3221 = vunpack.c.l.b16 %v856
        %v3222 = vunpack.c.h.b16 %v856
        %v3223 = vpack.c.b16 %v3221, %v3221
        %v3224 = vpack.c.b16 %v3222, %v3222
        %3227 = vmatpush.bf16.xpose.msra.mxu0 %v3202
        %3228 = vmatpush.bf16.xpose.msra.mxu0 %v3200
        %3229 = vmatpush.bf16.xpose.msra.mxu0 %v3198
        %3230 = vmatpush.bf16.xpose.msra.mxu0 %v3196
        %3231 = vmatpush.bf16.xpose.msra.mxu0 %v3194
        %3232 = vmatpush.bf16.xpose.msra.mxu0 %v3192
        %3233 = vmatpush.bf16.xpose.msra.mxu0 %v3190
        %3234 = vmatpush.bf16.xpose.msra.mxu0 %v3188
        %3235 = vmatmul.bf16.gmra.mxu0 %v3223
        %v3236 = vpop.f32.mrf.mxu0
        %v3237 = vadd.f32 0.0, %v3236
        %v3238 = vpop.f32.mrf.mxu0
        %3239 = vdwg.mxu0
        %3240 = vmatpush.bf16.xpose.msra.mxu0 %v3203
        %3241 = vmatpush.bf16.xpose.msra.mxu0 %v3201
        %3242 = vmatpush.bf16.xpose.msra.mxu0 %v3199
        %3243 = vmatpush.bf16.xpose.msra.mxu0 %v3197
        %3244 = vmatpush.bf16.xpose.msra.mxu0 %v3195
        %3245 = vmatpush.bf16.xpose.msra.mxu0 %v3193
        %3246 = vmatpush.bf16.xpose.msra.mxu0 %v3191
        %3247 = vmatpush.bf16.xpose.msra.mxu0 %v3189
        %3248 = vmatmul.bf16.gmra.mxu0 %v3224
        %v3249 = vpop.f32.mrf.mxu0
        %v3250 = vadd.f32 %v3237, %v3249
        %v3251 = vpop.f32.mrf.mxu0
        %3252 = vdwg.mxu0
        %3253 = vmatpush.bf16.xpose.msra.mxu0 %v3218
        %3254 = vmatpush.bf16.xpose.msra.mxu0 %v3216
        %3255 = vmatpush.bf16.xpose.msra.mxu0 %v3214
        %3256 = vmatpush.bf16.xpose.msra.mxu0 %v3212
        %3257 = vmatpush.bf16.xpose.msra.mxu0 %v3210
        %3258 = vmatpush.bf16.xpose.msra.mxu0 %v3208
        %3259 = vmatpush.bf16.xpose.msra.mxu0 %v3206
        %3260 = vmatpush.bf16.xpose.msra.mxu0 %v3204
        %3261 = vmatmul.bf16.gmra.mxu0 %v3223
        %v3262 = vpop.f32.mrf.mxu0
        %v3263 = vadd.f32 0.0, %v3262
        %v3264 = vpop.f32.mrf.mxu0
        %3265 = vdwg.mxu0
        %3266 = vmatpush.bf16.xpose.msra.mxu0 %v3219
        %3267 = vmatpush.bf16.xpose.msra.mxu0 %v3217
        %3268 = vmatpush.bf16.xpose.msra.mxu0 %v3215
        %3269 = vmatpush.bf16.xpose.msra.mxu0 %v3213
        %3270 = vmatpush.bf16.xpose.msra.mxu0 %v3211
        %3271 = vmatpush.bf16.xpose.msra.mxu0 %v3209
        %3272 = vmatpush.bf16.xpose.msra.mxu0 %v3207
        %3273 = vmatpush.bf16.xpose.msra.mxu0 %v3205
        %3274 = vmatmul.bf16.gmra.mxu0 %v3224
        %v3275 = vpop.f32.mrf.mxu0
        %v3276 = vadd.f32 %v3263, %v3275
        %v3277 = vpop.f32.mrf.mxu0
        %3278 = vdwg.mxu0
        %3279 = vmatpush.bf16.xpose.msra.mxu0 %v3202
        %3280 = vmatpush.bf16.xpose.msra.mxu0 %v3200
        %3281 = vmatpush.bf16.xpose.msra.mxu0 %v3198
        %3282 = vmatpush.bf16.xpose.msra.mxu0 %v3196
        %3283 = vmatpush.bf16.xpose.msra.mxu0 %v3194
        %3284 = vmatpush.bf16.xpose.msra.mxu0 %v3192
        %3285 = vmatpush.bf16.xpose.msra.mxu0 %v3190
        %3286 = vmatpush.bf16.xpose.msra.mxu0 %v3188
        %3287 = vmatmul.bf16.gmra.mxu0 1065369472
        %v3288 = vpop.f32.mrf.mxu0
        %v3289 = vadd.f32 0.0, %v3288
        %v3290 = vpop.f32.mrf.mxu0
        %3291 = vdwg.mxu0
        %3292 = vmatpush.bf16.xpose.msra.mxu0 %v3203
        %3293 = vmatpush.bf16.xpose.msra.mxu0 %v3201
        %3294 = vmatpush.bf16.xpose.msra.mxu0 %v3199
        %3295 = vmatpush.bf16.xpose.msra.mxu0 %v3197
        %3296 = vmatpush.bf16.xpose.msra.mxu0 %v3195
        %3297 = vmatpush.bf16.xpose.msra.mxu0 %v3193
        %3298 = vmatpush.bf16.xpose.msra.mxu0 %v3191
        %3299 = vmatpush.bf16.xpose.msra.mxu0 %v3189
        %3300 = vmatmul.bf16.gmra.mxu0 1065369472
        %v3301 = vpop.f32.mrf.mxu0
        %v3302 = vadd.f32 %v3289, %v3301
        %v3303 = vpop.f32.mrf.mxu0
        %3304 = vdwg.mxu0
        %3305 = vmatpush.bf16.xpose.msra.mxu0 %v3218
        %3306 = vmatpush.bf16.xpose.msra.mxu0 %v3216
        %3307 = vmatpush.bf16.xpose.msra.mxu0 %v3214
        %3308 = vmatpush.bf16.xpose.msra.mxu0 %v3212
        %3309 = vmatpush.bf16.xpose.msra.mxu0 %v3210
        %3310 = vmatpush.bf16.xpose.msra.mxu0 %v3208
        %3311 = vmatpush.bf16.xpose.msra.mxu0 %v3206
        %3312 = vmatpush.bf16.xpose.msra.mxu0 %v3204
        %3313 = vmatmul.bf16.gmra.mxu0 1065369472
        %v3314 = vpop.f32.mrf.mxu0
        %v3315 = vadd.f32 0.0, %v3314
        %v3316 = vpop.f32.mrf.mxu0
        %3317 = vdwg.mxu0
        %3318 = vmatpush.bf16.xpose.msra.mxu0 %v3219
        %3319 = vmatpush.bf16.xpose.msra.mxu0 %v3217
        %3320 = vmatpush.bf16.xpose.msra.mxu0 %v3215
        %3321 = vmatpush.bf16.xpose.msra.mxu0 %v3213
        %3322 = vmatpush.bf16.xpose.msra.mxu0 %v3211
        %3323 = vmatpush.bf16.xpose.msra.mxu0 %v3209
        %3324 = vmatpush.bf16.xpose.msra.mxu0 %v3207
        %3325 = vmatpush.bf16.xpose.msra.mxu0 %v3205
        %3326 = vmatmul.bf16.gmra.mxu0 1065369472
        %v3327 = vpop.f32.mrf.mxu0
        %v3328 = vadd.f32 %v3315, %v3327
        %v3329 = vpop.f32.mrf.mxu0
        %3330 = vdwg.mxu0
        %v3331 = vrcp.pop %v3302
        %v3332 = vmul.f32 %v3302, %v3331
        %v3333 = vsub.f32 1.0, %v3332
        %v3334 = vmul.f32 %v3331, %v3333
        %v3335 = vadd.f32 %v3331, %v3334
        %vm3336 = vweird.f32 %v3302
        %vm3337 = vweird.f32 %v3331
        %vm3338 = vmor %vm3336, %vm3337
        %v3339 = vsel %vm3338, %v3331, %v3335
        %v3340 = vand.u32 2147483647, %v3302
        %vm3341 = vcmp.eq.f32.partialorder %v3340, 8.507059e+37
        %v3342 = vand.u32 %v3302, 2147483648
        %v3343 = vor.u32 1.1754944e-38, %v3342
        %v3344 = vsel %vm3341, %v3343, %v3339
        %v3345 = vmul.f32 1.0, %v3344
        %v3346 = vrcp.pop %v3328
        %v3347 = vmul.f32 %v3328, %v3346
        %v3348 = vsub.f32 1.0, %v3347
        %v3349 = vmul.f32 %v3346, %v3348
        %v3350 = vadd.f32 %v3346, %v3349
        %vm3351 = vweird.f32 %v3328
        %vm3352 = vweird.f32 %v3346
        %vm3353 = vmor %vm3351, %vm3352
        %v3354 = vsel %vm3353, %v3346, %v3350
        %v3355 = vand.u32 2147483647, %v3328
        %vm3356 = vcmp.eq.f32.partialorder %v3355, 8.507059e+37
        %v3357 = vand.u32 %v3328, 2147483648
        %v3358 = vor.u32 1.1754944e-38, %v3357
        %v3359 = vsel %vm3356, %v3358, %v3354
        %v3360 = vmul.f32 1.0, %v3359
        %v3361 = vperm.slane %v3345, 0
        %v3362 = vperm.slane %v3360, 0
        %v3363 = vmul.f32 %v3250, %v3361
        %v3364 = vmul.f32 %v3276, %v3362
        %3365 = vrot.lane.b32.xlu0 %v1177, 104
        %v3366 = vpop.permute.xlu0 %3365
        %3367 = vrot.lane.b32.xlu0 %v1178, 104
        %v3368 = vpop.permute.xlu0 %3367
        %3369 = vrot.lane.b32.xlu0 %v1179, 104
        %v3370 = vpop.permute.xlu0 %3369
        %3371 = vrot.lane.b32.xlu0 %v1180, 104
        %v3372 = vpop.permute.xlu0 %3371
        %3373 = vrot.lane.b32.xlu0 %v1181, 104
        %v3374 = vpop.permute.xlu0 %3373
        %3375 = vrot.lane.b32.xlu0 %v1182, 104
        %v3376 = vpop.permute.xlu0 %3375
        %3377 = vrot.lane.b32.xlu0 %v1183, 104
        %v3378 = vpop.permute.xlu0 %3377
        %3379 = vrot.lane.b32.xlu0 %v1184, 104
        %v3380 = vpop.permute.xlu0 %3379
        %3381 = vrot.lane.b32.xlu0 %v1185, 104
        %v3382 = vpop.permute.xlu0 %3381
        %3383 = vrot.lane.b32.xlu0 %v1186, 104
        %v3384 = vpop.permute.xlu0 %3383
        %3385 = vrot.lane.b32.xlu0 %v1187, 104
        %v3386 = vpop.permute.xlu0 %3385
        %3387 = vrot.lane.b32.xlu0 %v1188, 104
        %v3388 = vpop.permute.xlu0 %3387
        %3389 = vrot.lane.b32.xlu0 %v1189, 104
        %v3390 = vpop.permute.xlu0 %3389
        %3391 = vrot.lane.b32.xlu0 %v1190, 104
        %v3392 = vpop.permute.xlu0 %3391
        %3393 = vrot.lane.b32.xlu0 %v1191, 104
        %v3394 = vpop.permute.xlu0 %3393
        %3395 = vrot.lane.b32.xlu0 %v1192, 104
        %v3396 = vpop.permute.xlu0 %3395
        %v3398 = vunpack.c.l.b16 %v853
        %v3399 = vunpack.c.h.b16 %v853
        %v3400 = vpack.c.b16 %v3398, %v3398
        %v3401 = vpack.c.b16 %v3399, %v3399
        %v3403 = vsel %vm1198, %v3366, 0
        %v3406 = vsel %vm1198, %v3368, 0
        %v3409 = vsel %vm1198, %v3370, 0
        %v3412 = vsel %vm1198, %v3372, 0
        %v3415 = vsel %vm1198, %v3374, 0
        %v3418 = vsel %vm1198, %v3376, 0
        %v3421 = vsel %vm1198, %v3378, 0
        %v3424 = vsel %vm1198, %v3380, 0
        %v3427 = vsel %vm1198, %v3382, 0
        %v3430 = vsel %vm1198, %v3384, 0
        %v3433 = vsel %vm1198, %v3386, 0
        %v3436 = vsel %vm1198, %v3388, 0
        %v3439 = vsel %vm1198, %v3390, 0
        %v3442 = vsel %vm1198, %v3392, 0
        %v3445 = vsel %vm1198, %v3394, 0
        %v3448 = vsel %vm1198, %v3396, 0
        %v3451 = vsel %vm1247, %v3400, 0
        %v3454 = vsel %vm1247, %v3401, 0
        %3456 = vmatpush.bf16.msra.mxu0 0
        %3457 = vmatpush.bf16.msra.mxu0 0
        %3458 = vmatpush.bf16.msra.mxu0 0
        %3459 = vmatpush.bf16.msra.mxu0 0
        %3460 = vmatpush.bf16.msra.mxu0 0
        %3461 = vmatpush.bf16.msra.mxu0 0
        %3462 = vmatpush.bf16.msra.mxu0 0
        %3463 = vmatpush.bf16.msra.mxu0 %v3451
        %3464 = vmatmul.bf16.gmra.mxu0 %v3403
        %v3465 = vpop.f32.mrf.mxu0
        %v3466 = vadd.f32 0.0, %v3465
        %v3467 = vpop.f32.mrf.mxu0
        %v3468 = vadd.f32 0.0, %v3467
        %3469 = vmatmul.bf16.gmra.mxu0 %v3406
        %v3470 = vpop.f32.mrf.mxu0
        %v3471 = vadd.f32 0.0, %v3470
        %v3472 = vpop.f32.mrf.mxu0
        %v3473 = vadd.f32 0.0, %v3472
        %3474 = vmatmul.bf16.gmra.mxu0 %v3409
        %v3475 = vpop.f32.mrf.mxu0
        %v3476 = vadd.f32 0.0, %v3475
        %v3477 = vpop.f32.mrf.mxu0
        %v3478 = vadd.f32 0.0, %v3477
        %3479 = vmatmul.bf16.gmra.mxu0 %v3412
        %v3480 = vpop.f32.mrf.mxu0
        %v3481 = vadd.f32 0.0, %v3480
        %v3482 = vpop.f32.mrf.mxu0
        %v3483 = vadd.f32 0.0, %v3482
        %3484 = vmatmul.bf16.gmra.mxu0 %v3415
        %v3485 = vpop.f32.mrf.mxu0
        %v3486 = vadd.f32 0.0, %v3485
        %v3487 = vpop.f32.mrf.mxu0
        %v3488 = vadd.f32 0.0, %v3487
        %3489 = vmatmul.bf16.gmra.mxu0 %v3418
        %v3490 = vpop.f32.mrf.mxu0
        %v3491 = vadd.f32 0.0, %v3490
        %v3492 = vpop.f32.mrf.mxu0
        %v3493 = vadd.f32 0.0, %v3492
        %3494 = vmatmul.bf16.gmra.mxu0 %v3421
        %v3495 = vpop.f32.mrf.mxu0
        %v3496 = vadd.f32 0.0, %v3495
        %v3497 = vpop.f32.mrf.mxu0
        %v3498 = vadd.f32 0.0, %v3497
        %3499 = vmatmul.bf16.gmra.mxu0 %v3424
        %v3500 = vpop.f32.mrf.mxu0
        %v3501 = vadd.f32 0.0, %v3500
        %v3502 = vpop.f32.mrf.mxu0
        %v3503 = vadd.f32 0.0, %v3502
        %3504 = vmatmul.bf16.gmra.mxu0 %v3427
        %v3505 = vpop.f32.mrf.mxu0
        %v3506 = vadd.f32 0.0, %v3505
        %v3507 = vpop.f32.mrf.mxu0
        %v3508 = vadd.f32 0.0, %v3507
        %3509 = vmatmul.bf16.gmra.mxu0 %v3430
        %v3510 = vpop.f32.mrf.mxu0
        %v3511 = vadd.f32 0.0, %v3510
        %v3512 = vpop.f32.mrf.mxu0
        %v3513 = vadd.f32 0.0, %v3512
        %3514 = vmatmul.bf16.gmra.mxu0 %v3433
        %v3515 = vpop.f32.mrf.mxu0
        %v3516 = vadd.f32 0.0, %v3515
        %v3517 = vpop.f32.mrf.mxu0
        %v3518 = vadd.f32 0.0, %v3517
        %3519 = vmatmul.bf16.gmra.mxu0 %v3436
        %v3520 = vpop.f32.mrf.mxu0
        %v3521 = vadd.f32 0.0, %v3520
        %v3522 = vpop.f32.mrf.mxu0
        %v3523 = vadd.f32 0.0, %v3522
        %3524 = vmatmul.bf16.gmra.mxu0 %v3439
        %v3525 = vpop.f32.mrf.mxu0
        %v3526 = vadd.f32 0.0, %v3525
        %v3527 = vpop.f32.mrf.mxu0
        %v3528 = vadd.f32 0.0, %v3527
        %3529 = vmatmul.bf16.gmra.mxu0 %v3442
        %v3530 = vpop.f32.mrf.mxu0
        %v3531 = vadd.f32 0.0, %v3530
        %v3532 = vpop.f32.mrf.mxu0
        %v3533 = vadd.f32 0.0, %v3532
        %3534 = vmatmul.bf16.gmra.mxu0 %v3445
        %v3535 = vpop.f32.mrf.mxu0
        %v3536 = vadd.f32 0.0, %v3535
        %v3537 = vpop.f32.mrf.mxu0
        %v3538 = vadd.f32 0.0, %v3537
        %3539 = vmatmul.bf16.gmra.mxu0 %v3448
        %v3540 = vpop.f32.mrf.mxu0
        %v3541 = vadd.f32 0.0, %v3540
        %v3542 = vpop.f32.mrf.mxu0
        %v3543 = vadd.f32 0.0, %v3542
        %3544 = vdwg.mxu0
        %3545 = vmatpush.bf16.msra.mxu0 0
        %3546 = vmatpush.bf16.msra.mxu0 0
        %3547 = vmatpush.bf16.msra.mxu0 0
        %3548 = vmatpush.bf16.msra.mxu0 0
        %3549 = vmatpush.bf16.msra.mxu0 0
        %3550 = vmatpush.bf16.msra.mxu0 0
        %3551 = vmatpush.bf16.msra.mxu0 0
        %3552 = vmatpush.bf16.msra.mxu0 %v3454
        %3553 = vmatmul.bf16.gmra.mxu0 %v3403
        %v3554 = vpop.f32.mrf.mxu0
        %v3555 = vadd.f32 0.0, %v3554
        %v3556 = vpop.f32.mrf.mxu0
        %v3557 = vadd.f32 0.0, %v3556
        %3558 = vmatmul.bf16.gmra.mxu0 %v3406
        %v3559 = vpop.f32.mrf.mxu0
        %v3560 = vadd.f32 0.0, %v3559
        %v3561 = vpop.f32.mrf.mxu0
        %v3562 = vadd.f32 0.0, %v3561
        %3563 = vmatmul.bf16.gmra.mxu0 %v3409
        %v3564 = vpop.f32.mrf.mxu0
        %v3565 = vadd.f32 0.0, %v3564
        %v3566 = vpop.f32.mrf.mxu0
        %v3567 = vadd.f32 0.0, %v3566
        %3568 = vmatmul.bf16.gmra.mxu0 %v3412
        %v3569 = vpop.f32.mrf.mxu0
        %v3570 = vadd.f32 0.0, %v3569
        %v3571 = vpop.f32.mrf.mxu0
        %v3572 = vadd.f32 0.0, %v3571
        %3573 = vmatmul.bf16.gmra.mxu0 %v3415
        %v3574 = vpop.f32.mrf.mxu0
        %v3575 = vadd.f32 0.0, %v3574
        %v3576 = vpop.f32.mrf.mxu0
        %v3577 = vadd.f32 0.0, %v3576
        %3578 = vmatmul.bf16.gmra.mxu0 %v3418
        %v3579 = vpop.f32.mrf.mxu0
        %v3580 = vadd.f32 0.0, %v3579
        %v3581 = vpop.f32.mrf.mxu0
        %v3582 = vadd.f32 0.0, %v3581
        %3583 = vmatmul.bf16.gmra.mxu0 %v3421
        %v3584 = vpop.f32.mrf.mxu0
        %v3585 = vadd.f32 0.0, %v3584
        %v3586 = vpop.f32.mrf.mxu0
        %v3587 = vadd.f32 0.0, %v3586
        %3588 = vmatmul.bf16.gmra.mxu0 %v3424
        %v3589 = vpop.f32.mrf.mxu0
        %v3590 = vadd.f32 0.0, %v3589
        %v3591 = vpop.f32.mrf.mxu0
        %v3592 = vadd.f32 0.0, %v3591
        %3593 = vmatmul.bf16.gmra.mxu0 %v3427
        %v3594 = vpop.f32.mrf.mxu0
        %v3595 = vadd.f32 0.0, %v3594
        %v3596 = vpop.f32.mrf.mxu0
        %v3597 = vadd.f32 0.0, %v3596
        %3598 = vmatmul.bf16.gmra.mxu0 %v3430
        %v3599 = vpop.f32.mrf.mxu0
        %v3600 = vadd.f32 0.0, %v3599
        %v3601 = vpop.f32.mrf.mxu0
        %v3602 = vadd.f32 0.0, %v3601
        %3603 = vmatmul.bf16.gmra.mxu0 %v3433
        %v3604 = vpop.f32.mrf.mxu0
        %v3605 = vadd.f32 0.0, %v3604
        %v3606 = vpop.f32.mrf.mxu0
        %v3607 = vadd.f32 0.0, %v3606
        %3608 = vmatmul.bf16.gmra.mxu0 %v3436
        %v3609 = vpop.f32.mrf.mxu0
        %v3610 = vadd.f32 0.0, %v3609
        %v3611 = vpop.f32.mrf.mxu0
        %v3612 = vadd.f32 0.0, %v3611
        %3613 = vmatmul.bf16.gmra.mxu0 %v3439
        %v3614 = vpop.f32.mrf.mxu0
        %v3615 = vadd.f32 0.0, %v3614
        %v3616 = vpop.f32.mrf.mxu0
        %v3617 = vadd.f32 0.0, %v3616
        %3618 = vmatmul.bf16.gmra.mxu0 %v3442
        %v3619 = vpop.f32.mrf.mxu0
        %v3620 = vadd.f32 0.0, %v3619
        %v3621 = vpop.f32.mrf.mxu0
        %v3622 = vadd.f32 0.0, %v3621
        %3623 = vmatmul.bf16.gmra.mxu0 %v3445
        %v3624 = vpop.f32.mrf.mxu0
        %v3625 = vadd.f32 0.0, %v3624
        %v3626 = vpop.f32.mrf.mxu0
        %v3627 = vadd.f32 0.0, %v3626
        %3628 = vmatmul.bf16.gmra.mxu0 %v3448
        %v3629 = vpop.f32.mrf.mxu0
        %v3630 = vadd.f32 0.0, %v3629
        %v3631 = vpop.f32.mrf.mxu0
        %v3632 = vadd.f32 0.0, %v3631
        %3633 = vdwg.mxu0
        %v3634 = vmax.f32 %v3466, %v3555
        %3635 = vmax.xlane.f32.xlu0 %v3634
        %v3636 = vpop.xlane.xlu0 %3635
        %v3637 = vmax.f32 %v3468, %v3557
        %3638 = vmax.xlane.f32.xlu0 %v3637
        %v3639 = vpop.xlane.xlu0 %3638
        %v3640 = vmax.f32 %v3471, %v3560
        %3641 = vmax.xlane.f32.xlu0 %v3640
        %v3642 = vpop.xlane.xlu0 %3641
        %v3643 = vmax.f32 %v3473, %v3562
        %3644 = vmax.xlane.f32.xlu0 %v3643
        %v3645 = vpop.xlane.xlu0 %3644
        %v3646 = vmax.f32 %v3476, %v3565
        %3647 = vmax.xlane.f32.xlu0 %v3646
        %v3648 = vpop.xlane.xlu0 %3647
        %v3649 = vmax.f32 %v3478, %v3567
        %3650 = vmax.xlane.f32.xlu0 %v3649
        %v3651 = vpop.xlane.xlu0 %3650
        %v3652 = vmax.f32 %v3481, %v3570
        %3653 = vmax.xlane.f32.xlu0 %v3652
        %v3654 = vpop.xlane.xlu0 %3653
        %v3655 = vmax.f32 %v3483, %v3572
        %3656 = vmax.xlane.f32.xlu0 %v3655
        %v3657 = vpop.xlane.xlu0 %3656
        %v3658 = vmax.f32 %v3486, %v3575
        %3659 = vmax.xlane.f32.xlu0 %v3658
        %v3660 = vpop.xlane.xlu0 %3659
        %v3661 = vmax.f32 %v3488, %v3577
        %3662 = vmax.xlane.f32.xlu0 %v3661
        %v3663 = vpop.xlane.xlu0 %3662
        %v3664 = vmax.f32 %v3491, %v3580
        %3665 = vmax.xlane.f32.xlu0 %v3664
        %v3666 = vpop.xlane.xlu0 %3665
        %v3667 = vmax.f32 %v3493, %v3582
        %3668 = vmax.xlane.f32.xlu0 %v3667
        %v3669 = vpop.xlane.xlu0 %3668
        %v3670 = vmax.f32 %v3496, %v3585
        %3671 = vmax.xlane.f32.xlu0 %v3670
        %v3672 = vpop.xlane.xlu0 %3671
        %v3673 = vmax.f32 %v3498, %v3587
        %3674 = vmax.xlane.f32.xlu0 %v3673
        %v3675 = vpop.xlane.xlu0 %3674
        %v3676 = vmax.f32 %v3501, %v3590
        %3677 = vmax.xlane.f32.xlu0 %v3676
        %v3678 = vpop.xlane.xlu0 %3677
        %v3679 = vmax.f32 %v3503, %v3592
        %3680 = vmax.xlane.f32.xlu0 %v3679
        %v3681 = vpop.xlane.xlu0 %3680
        %v3682 = vmax.f32 %v3506, %v3595
        %3683 = vmax.xlane.f32.xlu0 %v3682
        %v3684 = vpop.xlane.xlu0 %3683
        %v3685 = vmax.f32 %v3508, %v3597
        %3686 = vmax.xlane.f32.xlu0 %v3685
        %v3687 = vpop.xlane.xlu0 %3686
        %v3688 = vmax.f32 %v3511, %v3600
        %3689 = vmax.xlane.f32.xlu0 %v3688
        %v3690 = vpop.xlane.xlu0 %3689
        %v3691 = vmax.f32 %v3513, %v3602
        %3692 = vmax.xlane.f32.xlu0 %v3691
        %v3693 = vpop.xlane.xlu0 %3692
        %v3694 = vmax.f32 %v3516, %v3605
        %3695 = vmax.xlane.f32.xlu0 %v3694
        %v3696 = vpop.xlane.xlu0 %3695
        %v3697 = vmax.f32 %v3518, %v3607
        %3698 = vmax.xlane.f32.xlu0 %v3697
        %v3699 = vpop.xlane.xlu0 %3698
        %v3700 = vmax.f32 %v3521, %v3610
        %3701 = vmax.xlane.f32.xlu0 %v3700
        %v3702 = vpop.xlane.xlu0 %3701
        %v3703 = vmax.f32 %v3523, %v3612
        %3704 = vmax.xlane.f32.xlu0 %v3703
        %v3705 = vpop.xlane.xlu0 %3704
        %v3706 = vmax.f32 %v3526, %v3615
        %3707 = vmax.xlane.f32.xlu0 %v3706
        %v3708 = vpop.xlane.xlu0 %3707
        %v3709 = vmax.f32 %v3528, %v3617
        %3710 = vmax.xlane.f32.xlu0 %v3709
        %v3711 = vpop.xlane.xlu0 %3710
        %v3712 = vmax.f32 %v3531, %v3620
        %3713 = vmax.xlane.f32.xlu0 %v3712
        %v3714 = vpop.xlane.xlu0 %3713
        %v3715 = vmax.f32 %v3533, %v3622
        %3716 = vmax.xlane.f32.xlu0 %v3715
        %v3717 = vpop.xlane.xlu0 %3716
        %v3718 = vmax.f32 %v3536, %v3625
        %3719 = vmax.xlane.f32.xlu0 %v3718
        %v3720 = vpop.xlane.xlu0 %3719
        %v3721 = vmax.f32 %v3538, %v3627
        %3722 = vmax.xlane.f32.xlu0 %v3721
        %v3723 = vpop.xlane.xlu0 %3722
        %v3724 = vmax.f32 %v3541, %v3630
        %3725 = vmax.xlane.f32.xlu0 %v3724
        %v3726 = vpop.xlane.xlu0 %3725
        %v3727 = vmax.f32 %v3543, %v3632
        %3728 = vmax.xlane.f32.xlu0 %v3727
        %v3729 = vpop.xlane.xlu0 %3728
        %v3730 = vsub.f32 %v3466, %v3636
        %v3731 = vsub.f32 %v3555, %v3636
        %v3732 = vsub.f32 %v3468, %v3639
        %v3733 = vsub.f32 %v3557, %v3639
        %v3734 = vsub.f32 %v3471, %v3642
        %v3735 = vsub.f32 %v3560, %v3642
        %v3736 = vsub.f32 %v3473, %v3645
        %v3737 = vsub.f32 %v3562, %v3645
        %v3738 = vsub.f32 %v3476, %v3648
        %v3739 = vsub.f32 %v3565, %v3648
        %v3740 = vsub.f32 %v3478, %v3651
        %v3741 = vsub.f32 %v3567, %v3651
        %v3742 = vsub.f32 %v3481, %v3654
        %v3743 = vsub.f32 %v3570, %v3654
        %v3744 = vsub.f32 %v3483, %v3657
        %v3745 = vsub.f32 %v3572, %v3657
        %v3746 = vsub.f32 %v3486, %v3660
        %v3747 = vsub.f32 %v3575, %v3660
        %v3748 = vsub.f32 %v3488, %v3663
        %v3749 = vsub.f32 %v3577, %v3663
        %v3750 = vsub.f32 %v3491, %v3666
        %v3751 = vsub.f32 %v3580, %v3666
        %v3752 = vsub.f32 %v3493, %v3669
        %v3753 = vsub.f32 %v3582, %v3669
        %v3754 = vsub.f32 %v3496, %v3672
        %v3755 = vsub.f32 %v3585, %v3672
        %v3756 = vsub.f32 %v3498, %v3675
        %v3757 = vsub.f32 %v3587, %v3675
        %v3758 = vsub.f32 %v3501, %v3678
        %v3759 = vsub.f32 %v3590, %v3678
        %v3760 = vsub.f32 %v3503, %v3681
        %v3761 = vsub.f32 %v3592, %v3681
        %v3762 = vsub.f32 %v3506, %v3684
        %v3763 = vsub.f32 %v3595, %v3684
        %v3764 = vsub.f32 %v3508, %v3687
        %v3765 = vsub.f32 %v3597, %v3687
        %v3766 = vsub.f32 %v3511, %v3690
        %v3767 = vsub.f32 %v3600, %v3690
        %v3768 = vsub.f32 %v3513, %v3693
        %v3769 = vsub.f32 %v3602, %v3693
        %v3770 = vsub.f32 %v3516, %v3696
        %v3771 = vsub.f32 %v3605, %v3696
        %v3772 = vsub.f32 %v3518, %v3699
        %v3773 = vsub.f32 %v3607, %v3699
        %v3774 = vsub.f32 %v3521, %v3702
        %v3775 = vsub.f32 %v3610, %v3702
        %v3776 = vsub.f32 %v3523, %v3705
        %v3777 = vsub.f32 %v3612, %v3705
        %v3778 = vsub.f32 %v3526, %v3708
        %v3779 = vsub.f32 %v3615, %v3708
        %v3780 = vsub.f32 %v3528, %v3711
        %v3781 = vsub.f32 %v3617, %v3711
        %v3782 = vsub.f32 %v3531, %v3714
        %v3783 = vsub.f32 %v3620, %v3714
        %v3784 = vsub.f32 %v3533, %v3717
        %v3785 = vsub.f32 %v3622, %v3717
        %v3786 = vsub.f32 %v3536, %v3720
        %v3787 = vsub.f32 %v3625, %v3720
        %v3788 = vsub.f32 %v3538, %v3723
        %v3789 = vsub.f32 %v3627, %v3723
        %v3790 = vsub.f32 %v3541, %v3726
        %v3791 = vsub.f32 %v3630, %v3726
        %v3792 = vsub.f32 %v3543, %v3729
        %v3793 = vsub.f32 %v3632, %v3729
        %v3794 = vmul.f32 %v3730, 1.442695
        %v3795 = vpow.pop %v3794
        %v3796 = vmul.f32 %v3731, 1.442695
        %v3797 = vpow.pop %v3796
        %v3798 = vmul.f32 %v3732, 1.442695
        %v3799 = vpow.pop %v3798
        %v3800 = vmul.f32 %v3733, 1.442695
        %v3801 = vpow.pop %v3800
        %v3802 = vmul.f32 %v3734, 1.442695
        %v3803 = vpow.pop %v3802
        %v3804 = vmul.f32 %v3735, 1.442695
        %v3805 = vpow.pop %v3804
        %v3806 = vmul.f32 %v3736, 1.442695
        %v3807 = vpow.pop %v3806
        %v3808 = vmul.f32 %v3737, 1.442695
        %v3809 = vpow.pop %v3808
        %v3810 = vmul.f32 %v3738, 1.442695
        %v3811 = vpow.pop %v3810
        %v3812 = vmul.f32 %v3739, 1.442695
        %v3813 = vpow.pop %v3812
        %v3814 = vmul.f32 %v3740, 1.442695
        %v3815 = vpow.pop %v3814
        %v3816 = vmul.f32 %v3741, 1.442695
        %v3817 = vpow.pop %v3816
        %v3818 = vmul.f32 %v3742, 1.442695
        %v3819 = vpow.pop %v3818
        %v3820 = vmul.f32 %v3743, 1.442695
        %v3821 = vpow.pop %v3820
        %v3822 = vmul.f32 %v3744, 1.442695
        %v3823 = vpow.pop %v3822
        %v3824 = vmul.f32 %v3745, 1.442695
        %v3825 = vpow.pop %v3824
        %v3826 = vmul.f32 %v3746, 1.442695
        %v3827 = vpow.pop %v3826
        %v3828 = vmul.f32 %v3747, 1.442695
        %v3829 = vpow.pop %v3828
        %v3830 = vmul.f32 %v3748, 1.442695
        %v3831 = vpow.pop %v3830
        %v3832 = vmul.f32 %v3749, 1.442695
        %v3833 = vpow.pop %v3832
        %v3834 = vmul.f32 %v3750, 1.442695
        %v3835 = vpow.pop %v3834
        %v3836 = vmul.f32 %v3751, 1.442695
        %v3837 = vpow.pop %v3836
        %v3838 = vmul.f32 %v3752, 1.442695
        %v3839 = vpow.pop %v3838
        %v3840 = vmul.f32 %v3753, 1.442695
        %v3841 = vpow.pop %v3840
        %v3842 = vmul.f32 %v3754, 1.442695
        %v3843 = vpow.pop %v3842
        %v3844 = vmul.f32 %v3755, 1.442695
        %v3845 = vpow.pop %v3844
        %v3846 = vmul.f32 %v3756, 1.442695
        %v3847 = vpow.pop %v3846
        %v3848 = vmul.f32 %v3757, 1.442695
        %v3849 = vpow.pop %v3848
        %v3850 = vmul.f32 %v3758, 1.442695
        %v3851 = vpow.pop %v3850
        %v3852 = vmul.f32 %v3759, 1.442695
        %v3853 = vpow.pop %v3852
        %v3854 = vmul.f32 %v3760, 1.442695
        %v3855 = vpow.pop %v3854
        %v3856 = vmul.f32 %v3761, 1.442695
        %v3857 = vpow.pop %v3856
        %v3858 = vmul.f32 %v3762, 1.442695
        %v3859 = vpow.pop %v3858
        %v3860 = vmul.f32 %v3763, 1.442695
        %v3861 = vpow.pop %v3860
        %v3862 = vmul.f32 %v3764, 1.442695
        %v3863 = vpow.pop %v3862
        %v3864 = vmul.f32 %v3765, 1.442695
        %v3865 = vpow.pop %v3864
        %v3866 = vmul.f32 %v3766, 1.442695
        %v3867 = vpow.pop %v3866
        %v3868 = vmul.f32 %v3767, 1.442695
        %v3869 = vpow.pop %v3868
        %v3870 = vmul.f32 %v3768, 1.442695
        %v3871 = vpow.pop %v3870
        %v3872 = vmul.f32 %v3769, 1.442695
        %v3873 = vpow.pop %v3872
        %v3874 = vmul.f32 %v3770, 1.442695
        %v3875 = vpow.pop %v3874
        %v3876 = vmul.f32 %v3771, 1.442695
        %v3877 = vpow.pop %v3876
        %v3878 = vmul.f32 %v3772, 1.442695
        %v3879 = vpow.pop %v3878
        %v3880 = vmul.f32 %v3773, 1.442695
        %v3881 = vpow.pop %v3880
        %v3882 = vmul.f32 %v3774, 1.442695
        %v3883 = vpow.pop %v3882
        %v3884 = vmul.f32 %v3775, 1.442695
        %v3885 = vpow.pop %v3884
        %v3886 = vmul.f32 %v3776, 1.442695
        %v3887 = vpow.pop %v3886
        %v3888 = vmul.f32 %v3777, 1.442695
        %v3889 = vpow.pop %v3888
        %v3890 = vmul.f32 %v3778, 1.442695
        %v3891 = vpow.pop %v3890
        %v3892 = vmul.f32 %v3779, 1.442695
        %v3893 = vpow.pop %v3892
        %v3894 = vmul.f32 %v3780, 1.442695
        %v3895 = vpow.pop %v3894
        %v3896 = vmul.f32 %v3781, 1.442695
        %v3897 = vpow.pop %v3896
        %v3898 = vmul.f32 %v3782, 1.442695
        %v3899 = vpow.pop %v3898
        %v3900 = vmul.f32 %v3783, 1.442695
        %v3901 = vpow.pop %v3900
        %v3902 = vmul.f32 %v3784, 1.442695
        %v3903 = vpow.pop %v3902
        %v3904 = vmul.f32 %v3785, 1.442695
        %v3905 = vpow.pop %v3904
        %v3906 = vmul.f32 %v3786, 1.442695
        %v3907 = vpow.pop %v3906
        %v3908 = vmul.f32 %v3787, 1.442695
        %v3909 = vpow.pop %v3908
        %v3910 = vmul.f32 %v3788, 1.442695
        %v3911 = vpow.pop %v3910
        %v3912 = vmul.f32 %v3789, 1.442695
        %v3913 = vpow.pop %v3912
        %v3914 = vmul.f32 %v3790, 1.442695
        %v3915 = vpow.pop %v3914
        %v3916 = vmul.f32 %v3791, 1.442695
        %v3917 = vpow.pop %v3916
        %v3918 = vmul.f32 %v3792, 1.442695
        %v3919 = vpow.pop %v3918
        %v3920 = vmul.f32 %v3793, 1.442695
        %v3921 = vpow.pop %v3920
        %v3922 = vpack.c.bf16 %v3799, %v3795
        %v3923 = vpack.c.bf16 %v3801, %v3797
        %v3924 = vpack.c.bf16 %v3807, %v3803
        %v3925 = vpack.c.bf16 %v3809, %v3805
        %v3926 = vpack.c.bf16 %v3815, %v3811
        %v3927 = vpack.c.bf16 %v3817, %v3813
        %v3928 = vpack.c.bf16 %v3823, %v3819
        %v3929 = vpack.c.bf16 %v3825, %v3821
        %v3930 = vpack.c.bf16 %v3831, %v3827
        %v3931 = vpack.c.bf16 %v3833, %v3829
        %v3932 = vpack.c.bf16 %v3839, %v3835
        %v3933 = vpack.c.bf16 %v3841, %v3837
        %v3934 = vpack.c.bf16 %v3847, %v3843
        %v3935 = vpack.c.bf16 %v3849, %v3845
        %v3936 = vpack.c.bf16 %v3855, %v3851
        %v3937 = vpack.c.bf16 %v3857, %v3853
        %v3938 = vpack.c.bf16 %v3863, %v3859
        %v3939 = vpack.c.bf16 %v3865, %v3861
        %v3940 = vpack.c.bf16 %v3871, %v3867
        %v3941 = vpack.c.bf16 %v3873, %v3869
        %v3942 = vpack.c.bf16 %v3879, %v3875
        %v3943 = vpack.c.bf16 %v3881, %v3877
        %v3944 = vpack.c.bf16 %v3887, %v3883
        %v3945 = vpack.c.bf16 %v3889, %v3885
        %v3946 = vpack.c.bf16 %v3895, %v3891
        %v3947 = vpack.c.bf16 %v3897, %v3893
        %v3948 = vpack.c.bf16 %v3903, %v3899
        %v3949 = vpack.c.bf16 %v3905, %v3901
        %v3950 = vpack.c.bf16 %v3911, %v3907
        %v3951 = vpack.c.bf16 %v3913, %v3909
        %v3952 = vpack.c.bf16 %v3919, %v3915
        %v3953 = vpack.c.bf16 %v3921, %v3917
        %v3955 = vunpack.c.l.b16 %v857
        %v3956 = vunpack.c.h.b16 %v857
        %v3957 = vpack.c.b16 %v3955, %v3955
        %v3958 = vpack.c.b16 %v3956, %v3956
        %3961 = vmatpush.bf16.xpose.msra.mxu0 %v3936
        %3962 = vmatpush.bf16.xpose.msra.mxu0 %v3934
        %3963 = vmatpush.bf16.xpose.msra.mxu0 %v3932
        %3964 = vmatpush.bf16.xpose.msra.mxu0 %v3930
        %3965 = vmatpush.bf16.xpose.msra.mxu0 %v3928
        %3966 = vmatpush.bf16.xpose.msra.mxu0 %v3926
        %3967 = vmatpush.bf16.xpose.msra.mxu0 %v3924
        %3968 = vmatpush.bf16.xpose.msra.mxu0 %v3922
        %3969 = vmatmul.bf16.gmra.mxu0 %v3957
        %v3970 = vpop.f32.mrf.mxu0
        %v3971 = vadd.f32 0.0, %v3970
        %v3972 = vpop.f32.mrf.mxu0
        %3973 = vdwg.mxu0
        %3974 = vmatpush.bf16.xpose.msra.mxu0 %v3937
        %3975 = vmatpush.bf16.xpose.msra.mxu0 %v3935
        %3976 = vmatpush.bf16.xpose.msra.mxu0 %v3933
        %3977 = vmatpush.bf16.xpose.msra.mxu0 %v3931
        %3978 = vmatpush.bf16.xpose.msra.mxu0 %v3929
        %3979 = vmatpush.bf16.xpose.msra.mxu0 %v3927
        %3980 = vmatpush.bf16.xpose.msra.mxu0 %v3925
        %3981 = vmatpush.bf16.xpose.msra.mxu0 %v3923
        %3982 = vmatmul.bf16.gmra.mxu0 %v3958
        %v3983 = vpop.f32.mrf.mxu0
        %v3984 = vadd.f32 %v3971, %v3983
        %v3985 = vpop.f32.mrf.mxu0
        %3986 = vdwg.mxu0
        %3987 = vmatpush.bf16.xpose.msra.mxu0 %v3952
        %3988 = vmatpush.bf16.xpose.msra.mxu0 %v3950
        %3989 = vmatpush.bf16.xpose.msra.mxu0 %v3948
        %3990 = vmatpush.bf16.xpose.msra.mxu0 %v3946
        %3991 = vmatpush.bf16.xpose.msra.mxu0 %v3944
        %3992 = vmatpush.bf16.xpose.msra.mxu0 %v3942
        %3993 = vmatpush.bf16.xpose.msra.mxu0 %v3940
        %3994 = vmatpush.bf16.xpose.msra.mxu0 %v3938
        %3995 = vmatmul.bf16.gmra.mxu0 %v3957
        %v3996 = vpop.f32.mrf.mxu0
        %v3997 = vadd.f32 0.0, %v3996
        %v3998 = vpop.f32.mrf.mxu0
        %3999 = vdwg.mxu0
        %4000 = vmatpush.bf16.xpose.msra.mxu0 %v3953
        %4001 = vmatpush.bf16.xpose.msra.mxu0 %v3951
        %4002 = vmatpush.bf16.xpose.msra.mxu0 %v3949
        %4003 = vmatpush.bf16.xpose.msra.mxu0 %v3947
        %4004 = vmatpush.bf16.xpose.msra.mxu0 %v3945
        %4005 = vmatpush.bf16.xpose.msra.mxu0 %v3943
        %4006 = vmatpush.bf16.xpose.msra.mxu0 %v3941
        %4007 = vmatpush.bf16.xpose.msra.mxu0 %v3939
        %4008 = vmatmul.bf16.gmra.mxu0 %v3958
        %v4009 = vpop.f32.mrf.mxu0
        %v4010 = vadd.f32 %v3997, %v4009
        %v4011 = vpop.f32.mrf.mxu0
        %4012 = vdwg.mxu0
        %4013 = vmatpush.bf16.xpose.msra.mxu0 %v3936
        %4014 = vmatpush.bf16.xpose.msra.mxu0 %v3934
        %4015 = vmatpush.bf16.xpose.msra.mxu0 %v3932
        %4016 = vmatpush.bf16.xpose.msra.mxu0 %v3930
        %4017 = vmatpush.bf16.xpose.msra.mxu0 %v3928
        %4018 = vmatpush.bf16.xpose.msra.mxu0 %v3926
        %4019 = vmatpush.bf16.xpose.msra.mxu0 %v3924
        %4020 = vmatpush.bf16.xpose.msra.mxu0 %v3922
        %4021 = vmatmul.bf16.gmra.mxu0 1065369472
        %v4022 = vpop.f32.mrf.mxu0
        %v4023 = vadd.f32 0.0, %v4022
        %v4024 = vpop.f32.mrf.mxu0
        %4025 = vdwg.mxu0
        %4026 = vmatpush.bf16.xpose.msra.mxu0 %v3937
        %4027 = vmatpush.bf16.xpose.msra.mxu0 %v3935
        %4028 = vmatpush.bf16.xpose.msra.mxu0 %v3933
        %4029 = vmatpush.bf16.xpose.msra.mxu0 %v3931
        %4030 = vmatpush.bf16.xpose.msra.mxu0 %v3929
        %4031 = vmatpush.bf16.xpose.msra.mxu0 %v3927
        %4032 = vmatpush.bf16.xpose.msra.mxu0 %v3925
        %4033 = vmatpush.bf16.xpose.msra.mxu0 %v3923
        %4034 = vmatmul.bf16.gmra.mxu0 1065369472
        %v4035 = vpop.f32.mrf.mxu0
        %v4036 = vadd.f32 %v4023, %v4035
        %v4037 = vpop.f32.mrf.mxu0
        %4038 = vdwg.mxu0
        %4039 = vmatpush.bf16.xpose.msra.mxu0 %v3952
        %4040 = vmatpush.bf16.xpose.msra.mxu0 %v3950
        %4041 = vmatpush.bf16.xpose.msra.mxu0 %v3948
        %4042 = vmatpush.bf16.xpose.msra.mxu0 %v3946
        %4043 = vmatpush.bf16.xpose.msra.mxu0 %v3944
        %4044 = vmatpush.bf16.xpose.msra.mxu0 %v3942
        %4045 = vmatpush.bf16.xpose.msra.mxu0 %v3940
        %4046 = vmatpush.bf16.xpose.msra.mxu0 %v3938
        %4047 = vmatmul.bf16.gmra.mxu0 1065369472
        %v4048 = vpop.f32.mrf.mxu0
        %v4049 = vadd.f32 0.0, %v4048
        %v4050 = vpop.f32.mrf.mxu0
        %4051 = vdwg.mxu0
        %4052 = vmatpush.bf16.xpose.msra.mxu0 %v3953
        %4053 = vmatpush.bf16.xpose.msra.mxu0 %v3951
        %4054 = vmatpush.bf16.xpose.msra.mxu0 %v3949
        %4055 = vmatpush.bf16.xpose.msra.mxu0 %v3947
        %4056 = vmatpush.bf16.xpose.msra.mxu0 %v3945
        %4057 = vmatpush.bf16.xpose.msra.mxu0 %v3943
        %4058 = vmatpush.bf16.xpose.msra.mxu0 %v3941
        %4059 = vmatpush.bf16.xpose.msra.mxu0 %v3939
        %4060 = vmatmul.bf16.gmra.mxu0 1065369472
        %v4061 = vpop.f32.mrf.mxu0
        %v4062 = vadd.f32 %v4049, %v4061
        %v4063 = vpop.f32.mrf.mxu0
        %4064 = vdwg.mxu0
        %v4065 = vrcp.pop %v4036
        %v4066 = vmul.f32 %v4036, %v4065
        %v4067 = vsub.f32 1.0, %v4066
        %v4068 = vmul.f32 %v4065, %v4067
        %v4069 = vadd.f32 %v4065, %v4068
        %vm4070 = vweird.f32 %v4036
        %vm4071 = vweird.f32 %v4065
        %vm4072 = vmor %vm4070, %vm4071
        %v4073 = vsel %vm4072, %v4065, %v4069
        %v4074 = vand.u32 2147483647, %v4036
        %vm4075 = vcmp.eq.f32.partialorder %v4074, 8.507059e+37
        %v4076 = vand.u32 %v4036, 2147483648
        %v4077 = vor.u32 1.1754944e-38, %v4076
        %v4078 = vsel %vm4075, %v4077, %v4073
        %v4079 = vmul.f32 1.0, %v4078
        %v4080 = vrcp.pop %v4062
        %v4081 = vmul.f32 %v4062, %v4080
        %v4082 = vsub.f32 1.0, %v4081
        %v4083 = vmul.f32 %v4080, %v4082
        %v4084 = vadd.f32 %v4080, %v4083
        %vm4085 = vweird.f32 %v4062
        %vm4086 = vweird.f32 %v4080
        %vm4087 = vmor %vm4085, %vm4086
        %v4088 = vsel %vm4087, %v4080, %v4084
        %v4089 = vand.u32 2147483647, %v4062
        %vm4090 = vcmp.eq.f32.partialorder %v4089, 8.507059e+37
        %v4091 = vand.u32 %v4062, 2147483648
        %v4092 = vor.u32 1.1754944e-38, %v4091
        %v4093 = vsel %vm4090, %v4092, %v4088
        %v4094 = vmul.f32 1.0, %v4093
        %v4095 = vperm.slane %v4079, 0
        %v4096 = vperm.slane %v4094, 0
        %v4097 = vmul.f32 %v3984, %v4095
        %v4098 = vmul.f32 %v4010, %v4096
        %v4099 = vld [vmem:[%s6] sm:$0xf]
        %v4100 = vld [vmem:[%s6 + $0x4] sm:$0xf]
        %v4101 = vld [vmem:[%s6 + $0x8] sm:$0xf]
        %v4102 = vld [vmem:[%s6 + $0xc] sm:$0xf]
        %v4103 = vpack.c.bf16 %v2629, %v1895
        %v4104 = vpack.c.bf16 %v2630, %v1896
        %v4105 = vpack.c.bf16 %v4097, %v3363
        %v4106 = vpack.c.bf16 %v4098, %v3364
        %v4111 = vunpack.c.l.b16 %v4099
        %v4112 = vunpack.c.l.b16 %v4100
        %v4113 = vunpack.c.l.b16 %v4101
        %v4114 = vunpack.c.l.b16 %v4102
        %v4115 = vpack.c.b16 %v4112, %v4111
        %v4116 = vpack.c.b16 %v4114, %v4113
        %v4118 = vsel %vm920, %v4115, 0
        %v4121 = vsel %vm920, %v4116, 0
        %4123 = vmatpush.bf16.msra.mxu0 0
        %4124 = vmatpush.bf16.msra.mxu0 0
        %4125 = vmatpush.bf16.msra.mxu0 0
        %4126 = vmatpush.bf16.msra.mxu0 0
        %4127 = vmatpush.bf16.msra.mxu0 0
        %4128 = vmatpush.bf16.msra.mxu0 0
        %4129 = vmatpush.bf16.msra.mxu0 %v4105
        %4130 = vmatpush.bf16.msra.mxu0 %v4103
        %4131 = vmatmul.bf16.gmra.mxu0 %v4118
        %v4132 = vpop.f32.mrf.mxu0
        %v4133 = vadd.f32 0.0, %v4132
        %v4134 = vpop.f32.mrf.mxu0
        %v4135 = vadd.f32 0.0, %v4134
        %4136 = vmatmul.bf16.gmra.mxu0 %v4121
        %v4137 = vpop.f32.mrf.mxu0
        %v4138 = vadd.f32 0.0, %v4137
        %v4139 = vpop.f32.mrf.mxu0
        %v4140 = vadd.f32 0.0, %v4139
        %4141 = vdwg.mxu0
        %4142 = vmatpush.bf16.msra.mxu0 0
        %4143 = vmatpush.bf16.msra.mxu0 0
        %4144 = vmatpush.bf16.msra.mxu0 0
        %4145 = vmatpush.bf16.msra.mxu0 0
        %4146 = vmatpush.bf16.msra.mxu0 0
        %4147 = vmatpush.bf16.msra.mxu0 0
        %4148 = vmatpush.bf16.msra.mxu0 %v4106
        %4149 = vmatpush.bf16.msra.mxu0 %v4104
        %4150 = vmatmul.bf16.gmra.mxu0 %v4118
        %v4151 = vpop.f32.mrf.mxu0
        %v4152 = vadd.f32 0.0, %v4151
        %v4153 = vpop.f32.mrf.mxu0
        %v4154 = vadd.f32 0.0, %v4153
        %4155 = vmatmul.bf16.gmra.mxu0 %v4121
        %v4156 = vpop.f32.mrf.mxu0
        %v4157 = vadd.f32 0.0, %v4156
        %v4158 = vpop.f32.mrf.mxu0
        %v4159 = vadd.f32 0.0, %v4158
        %4160 = vdwg.mxu0
        %v4161 = vld [vmem:[%s7] sm:$0xff]
        %v4162 = vld [vmem:[%s7 + $0x8] sm:$0xff]
        %v4163 = vld [vmem:[%s7 + $0x10] sm:$0xff]
        %v4164 = vld [vmem:[%s7 + $0x18] sm:$0xff]
        %v4165 = vld [vmem:[%s8] sm:$0xff]
        %v4166 = vld [vmem:[%s8 + $0x8] sm:$0xff]
        %v4167 = vld [vmem:[%s8 + $0x10] sm:$0xff]
        %v4168 = vld [vmem:[%s8 + $0x18] sm:$0xff]
        %v4169 = vadd.f32 %v4133, %v4135
        %v4170 = vadd.f32 %v4169, %v4138
        %v4171 = vadd.f32 %v4170, %v4140
        %v4172 = vrot.slane %v4171, 4
        %v4173 = vadd.f32 %v4171, %v4172
        %v4174 = vrot.slane %v4173, 2
        %v4175 = vadd.f32 %v4173, %v4174
        %v4176 = vrot.slane %v4175, 1
        %v4177 = vadd.f32 %v4175, %v4176
        %v4178 = vadd.f32 %v4152, %v4154
        %v4179 = vadd.f32 %v4178, %v4157
        %v4180 = vadd.f32 %v4179, %v4159
        %v4181 = vrot.slane %v4180, 4
        %v4182 = vadd.f32 %v4180, %v4181
        %v4183 = vrot.slane %v4182, 2
        %v4184 = vadd.f32 %v4182, %v4183
        %v4185 = vrot.slane %v4184, 1
        %v4186 = vadd.f32 %v4184, %v4185
        %v4187 = vrcp.pop 32.0
        %v4188 = vmul.f32 32.0, %v4187
        %v4189 = vsub.f32 1.0, %v4188
        %v4190 = vmul.f32 %v4187, %v4189
        %v4191 = vadd.f32 %v4187, %v4190
        %vm4192 = vweird.f32 %v4187
        %v4193 = vsel %vm4192, %v4187, %v4191
        %v4194 = vmul.f32 %v4177, %v4193
        %v4195 = vmul.f32 %v4186, %v4193
        %v4196 = vsub.f32 %v4133, %v4194
        %v4197 = vsub.f32 %v4152, %v4195
        %v4198 = vsub.f32 %v4135, %v4194
        %v4199 = vsub.f32 %v4154, %v4195
        %v4200 = vsub.f32 %v4138, %v4194
        %v4201 = vsub.f32 %v4157, %v4195
        %v4202 = vsub.f32 %v4140, %v4194
        %v4203 = vsub.f32 %v4159, %v4195
        %v4204 = vmul.f32 %v4196, %v4196
        %v4205 = vmul.f32 %v4197, %v4197
        %v4206 = vmul.f32 %v4198, %v4198
        %v4207 = vmul.f32 %v4199, %v4199
        %v4208 = vmul.f32 %v4200, %v4200
        %v4209 = vmul.f32 %v4201, %v4201
        %v4210 = vmul.f32 %v4202, %v4202
        %v4211 = vmul.f32 %v4203, %v4203
        %v4212 = vadd.f32 %v4204, %v4206
        %v4213 = vadd.f32 %v4212, %v4208
        %v4214 = vadd.f32 %v4213, %v4210
        %v4215 = vrot.slane %v4214, 4
        %v4216 = vadd.f32 %v4214, %v4215
        %v4217 = vrot.slane %v4216, 2
        %v4218 = vadd.f32 %v4216, %v4217
        %v4219 = vrot.slane %v4218, 1
        %v4220 = vadd.f32 %v4218, %v4219
        %v4221 = vadd.f32 %v4205, %v4207
        %v4222 = vadd.f32 %v4221, %v4209
        %v4223 = vadd.f32 %v4222, %v4211
        %v4224 = vrot.slane %v4223, 4
        %v4225 = vadd.f32 %v4223, %v4224
        %v4226 = vrot.slane %v4225, 2
        %v4227 = vadd.f32 %v4225, %v4226
        %v4228 = vrot.slane %v4227, 1
        %v4229 = vadd.f32 %v4227, %v4228
        %v4230 = vmul.f32 %v4220, 0.032258064
        %v4231 = vmul.f32 %v4229, 0.032258064
        %v4232 = vrsqrt.pop %v4230
        %v4233 = vmul.f32 %v4232, %v4230
        %v4234 = vmul.f32 %v4233, %v4232
        %v4235 = vmul.f32 0.5, %v4234
        %v4236 = vsub.f32 1.5, %v4235
        %v4237 = vmul.f32 %v4232, %v4236
        %v4238 = vmul.f32 %v4230, %v4237
        %vm4239 = vcmp.eq.f32.partialorder %v4230, inf
        %v4240 = vsel %vm4239, %v4230, %v4238
        %vm4241 = vcmp.eq.f32.partialorder %v4230, 0.0
        %v4242 = vand.u32 %v4230, 2147483648
        %v4243 = vsel %vm4241, %v4242, %v4240
        %v4244 = vrsqrt.pop %v4231
        %v4245 = vmul.f32 %v4244, %v4231
        %v4246 = vmul.f32 %v4245, %v4244
        %v4247 = vmul.f32 0.5, %v4246
        %v4248 = vsub.f32 1.5, %v4247
        %v4249 = vmul.f32 %v4244, %v4248
        %v4250 = vmul.f32 %v4231, %v4249
        %vm4251 = vcmp.eq.f32.partialorder %v4231, inf
        %v4252 = vsel %vm4251, %v4231, %v4250
        %vm4253 = vcmp.eq.f32.partialorder %v4231, 0.0
        %v4254 = vand.u32 %v4231, 2147483648
        %v4255 = vsel %vm4253, %v4254, %v4252
        %v4256 = vadd.f32 %v4243, 1e-06
        %v4257 = vadd.f32 %v4255, 1e-06
        %v4258 = vrcp.pop %v4256
        %v4259 = vmul.f32 %v4256, %v4258
        %v4260 = vsub.f32 1.0, %v4259
        %v4261 = vmul.f32 %v4258, %v4260
        %v4262 = vadd.f32 %v4258, %v4261
        %vm4263 = vweird.f32 %v4256
        %vm4264 = vweird.f32 %v4258
        %vm4265 = vmor %vm4263, %vm4264
        %v4266 = vsel %vm4265, %v4258, %v4262
        %v4267 = vand.u32 2147483647, %v4256
        %vm4268 = vcmp.eq.f32.partialorder %v4267, 8.507059e+37
        %v4269 = vand.u32 %v4256, 2147483648
        %v4270 = vor.u32 1.1754944e-38, %v4269
        %v4271 = vsel %vm4268, %v4270, %v4266
        %v4272 = vmul.f32 1.0, %v4271
        %v4273 = vrcp.pop %v4257
        %v4274 = vmul.f32 %v4257, %v4273
        %v4275 = vsub.f32 1.0, %v4274
        %v4276 = vmul.f32 %v4273, %v4275
        %v4277 = vadd.f32 %v4273, %v4276
        %vm4278 = vweird.f32 %v4257
        %vm4279 = vweird.f32 %v4273
        %vm4280 = vmor %vm4278, %vm4279
        %v4281 = vsel %vm4280, %v4273, %v4277
        %v4282 = vand.u32 2147483647, %v4257
        %vm4283 = vcmp.eq.f32.partialorder %v4282, 8.507059e+37
        %v4284 = vand.u32 %v4257, 2147483648
        %v4285 = vor.u32 1.1754944e-38, %v4284
        %v4286 = vsel %vm4283, %v4285, %v4281
        %v4287 = vmul.f32 1.0, %v4286
        %v4288 = vmul.f32 %v4196, %v4272
        %v4289 = vmul.f32 %v4197, %v4287
        %v4290 = vmul.f32 %v4198, %v4272
        %v4291 = vmul.f32 %v4199, %v4287
        %v4292 = vmul.f32 %v4200, %v4272
        %v4293 = vmul.f32 %v4201, %v4287
        %v4294 = vmul.f32 %v4202, %v4272
        %v4295 = vmul.f32 %v4203, %v4287
        %4297 = vset.pattern.permute.xlu0 0
        %4298 = vperm.xlu0 %4297, %v4161
        %v4299 = vpop.permute.xlu0 %4298
        %4302 = vset.pattern.permute.xlu0 0
        %4303 = vperm.xlu0 %4302, %v4162
        %v4304 = vpop.permute.xlu0 %4303
        %4307 = vset.pattern.permute.xlu0 0
        %4308 = vperm.xlu0 %4307, %v4163
        %v4309 = vpop.permute.xlu0 %4308
        %4312 = vset.pattern.permute.xlu0 0
        %4313 = vperm.xlu0 %4312, %v4164
        %v4314 = vpop.permute.xlu0 %4313
        %v4316 = vmul.f32 %v4299, %v4288
        %v4317 = vmul.f32 %v4299, %v4289
        %v4318 = vmul.f32 %v4304, %v4290
        %v4319 = vmul.f32 %v4304, %v4291
        %v4320 = vmul.f32 %v4309, %v4292
        %v4321 = vmul.f32 %v4309, %v4293
        %v4322 = vmul.f32 %v4314, %v4294
        %v4323 = vmul.f32 %v4314, %v4295
        %4325 = vset.pattern.permute.xlu0 0
        %4326 = vperm.xlu0 %4325, %v4165
        %v4327 = vpop.permute.xlu0 %4326
        %4330 = vset.pattern.permute.xlu0 0
        %4331 = vperm.xlu0 %4330, %v4166
        %v4332 = vpop.permute.xlu0 %4331
        %4335 = vset.pattern.permute.xlu0 0
        %4336 = vperm.xlu0 %4335, %v4167
        %v4337 = vpop.permute.xlu0 %4336
        %4340 = vset.pattern.permute.xlu0 0
        %4341 = vperm.xlu0 %4340, %v4168
        %v4342 = vpop.permute.xlu0 %4341
        %v4344 = vadd.f32 %v4316, %v4327
        %v4345 = vadd.f32 %v4317, %v4327
        %v4346 = vadd.f32 %v4318, %v4332
        %v4347 = vadd.f32 %v4319, %v4332
        %v4348 = vadd.f32 %v4320, %v4337
        %v4349 = vadd.f32 %v4321, %v4337
        %v4350 = vadd.f32 %v4322, %v4342
        %v4351 = vadd.f32 %v4323, %v4342
        %v4352 = vld [vmem:[%s9] sm:$0xf]
        %v4353 = vld [vmem:[%s9 + $0x4] sm:$0xf]
        %v4354 = vld [vmem:[%s9 + $0x8] sm:$0xf]
        %v4355 = vld [vmem:[%s9 + $0xc] sm:$0xf]
        %v4356 = vld [vmem:[%s9 + $0x10] sm:$0xf]
        %v4357 = vld [vmem:[%s9 + $0x14] sm:$0xf]
        %v4358 = vld [vmem:[%s9 + $0x18] sm:$0xf]
        %v4359 = vld [vmem:[%s9 + $0x1c] sm:$0xf]
        %v4360 = vpack.c.bf16 %v4346, %v4344
        %v4361 = vpack.c.bf16 %v4347, %v4345
        %v4362 = vpack.c.bf16 %v4350, %v4348
        %v4363 = vpack.c.bf16 %v4351, %v4349
        %v4372 = vunpack.c.l.b16 %v4352
        %v4373 = vunpack.c.l.b16 %v4353
        %v4374 = vunpack.c.l.b16 %v4354
        %v4375 = vunpack.c.l.b16 %v4355
        %v4376 = vunpack.c.l.b16 %v4356
        %v4377 = vunpack.c.l.b16 %v4357
        %v4378 = vunpack.c.l.b16 %v4358
        %v4379 = vunpack.c.l.b16 %v4359
        %v4380 = vpack.c.b16 %v4373, %v4372
        %v4381 = vpack.c.b16 %v4375, %v4374
        %v4382 = vpack.c.b16 %v4377, %v4376
        %v4383 = vpack.c.b16 %v4379, %v4378
        %v4385 = vsel %vm920, %v4380, 0
        %v4388 = vsel %vm920, %v4381, 0
        %v4391 = vsel %vm920, %v4382, 0
        %v4394 = vsel %vm920, %v4383, 0
        %4396 = vmatpush.bf16.msra.mxu0 0
        %4397 = vmatpush.bf16.msra.mxu0 0
        %4398 = vmatpush.bf16.msra.mxu0 0
        %4399 = vmatpush.bf16.msra.mxu0 0
        %4400 = vmatpush.bf16.msra.mxu0 0
        %4401 = vmatpush.bf16.msra.mxu0 0
        %4402 = vmatpush.bf16.msra.mxu0 %v4362
        %4403 = vmatpush.bf16.msra.mxu0 %v4360
        %4404 = vmatmul.bf16.gmra.mxu0 %v4385
        %v4405 = vpop.f32.mrf.mxu0
        %v4406 = vadd.f32 0.0, %v4405
        %v4407 = vpop.f32.mrf.mxu0
        %v4408 = vadd.f32 0.0, %v4407
        %4409 = vmatmul.bf16.gmra.mxu0 %v4388
        %v4410 = vpop.f32.mrf.mxu0
        %v4411 = vadd.f32 0.0, %v4410
        %v4412 = vpop.f32.mrf.mxu0
        %v4413 = vadd.f32 0.0, %v4412
        %4414 = vmatmul.bf16.gmra.mxu0 %v4391
        %v4415 = vpop.f32.mrf.mxu0
        %v4416 = vadd.f32 0.0, %v4415
        %v4417 = vpop.f32.mrf.mxu0
        %v4418 = vadd.f32 0.0, %v4417
        %4419 = vmatmul.bf16.gmra.mxu0 %v4394
        %v4420 = vpop.f32.mrf.mxu0
        %v4421 = vadd.f32 0.0, %v4420
        %v4422 = vpop.f32.mrf.mxu0
        %v4423 = vadd.f32 0.0, %v4422
        %4424 = vdwg.mxu0
        %4425 = vmatpush.bf16.msra.mxu0 0
        %4426 = vmatpush.bf16.msra.mxu0 0
        %4427 = vmatpush.bf16.msra.mxu0 0
        %4428 = vmatpush.bf16.msra.mxu0 0
        %4429 = vmatpush.bf16.msra.mxu0 0
        %4430 = vmatpush.bf16.msra.mxu0 0
        %4431 = vmatpush.bf16.msra.mxu0 %v4363
        %4432 = vmatpush.bf16.msra.mxu0 %v4361
        %4433 = vmatmul.bf16.gmra.mxu0 %v4385
        %v4434 = vpop.f32.mrf.mxu0
        %v4435 = vadd.f32 0.0, %v4434
        %v4436 = vpop.f32.mrf.mxu0
        %v4437 = vadd.f32 0.0, %v4436
        %4438 = vmatmul.bf16.gmra.mxu0 %v4388
        %v4439 = vpop.f32.mrf.mxu0
        %v4440 = vadd.f32 0.0, %v4439
        %v4441 = vpop.f32.mrf.mxu0
        %v4442 = vadd.f32 0.0, %v4441
        %4443 = vmatmul.bf16.gmra.mxu0 %v4391
        %v4444 = vpop.f32.mrf.mxu0
        %v4445 = vadd.f32 0.0, %v4444
        %v4446 = vpop.f32.mrf.mxu0
        %v4447 = vadd.f32 0.0, %v4446
        %4448 = vmatmul.bf16.gmra.mxu0 %v4394
        %v4449 = vpop.f32.mrf.mxu0
        %v4450 = vadd.f32 0.0, %v4449
        %v4451 = vpop.f32.mrf.mxu0
        %v4452 = vadd.f32 0.0, %v4451
        %4453 = vdwg.mxu0
        %v4454 = vadd.f32 %v959, %v4406
        %v4455 = vadd.f32 %v998, %v4435
        %v4456 = vadd.f32 %v961, %v4408
        %v4457 = vadd.f32 %v1000, %v4437
        %v4458 = vadd.f32 %v964, %v4411
        %v4459 = vadd.f32 %v1003, %v4440
        %v4460 = vadd.f32 %v966, %v4413
        %v4461 = vadd.f32 %v1005, %v4442
        %v4462 = vadd.f32 %v969, %v4416
        %v4463 = vadd.f32 %v1008, %v4445
        %v4464 = vadd.f32 %v971, %v4418
        %v4465 = vadd.f32 %v1010, %v4447
        %v4466 = vadd.f32 %v974, %v4421
        %v4467 = vadd.f32 %v1013, %v4450
        %v4468 = vadd.f32 %v976, %v4423
        %v4469 = vadd.f32 %v1015, %v4452
        %v4470 = vmax.f32 %v4454, 0.0
        %v4471 = vmax.f32 %v4455, 0.0
        %v4472 = vmax.f32 %v4456, 0.0
        %v4473 = vmax.f32 %v4457, 0.0
        %v4474 = vmax.f32 %v4458, 0.0
        %v4475 = vmax.f32 %v4459, 0.0
        %v4476 = vmax.f32 %v4460, 0.0
        %v4477 = vmax.f32 %v4461, 0.0
        %v4478 = vmax.f32 %v4462, 0.0
        %v4479 = vmax.f32 %v4463, 0.0
        %v4480 = vmax.f32 %v4464, 0.0
        %v4481 = vmax.f32 %v4465, 0.0
        %v4482 = vmax.f32 %v4466, 0.0
        %v4483 = vmax.f32 %v4467, 0.0
        %v4484 = vmax.f32 %v4468, 0.0
        %v4485 = vmax.f32 %v4469, 0.0
        %v4486 = vld [vmem:[%s10] sm:$0xf]
        %v4487 = vld [vmem:[%s10 + $0x4] sm:$0xf]
        %v4488 = vld [vmem:[%s10 + $0x8] sm:$0xf]
        %v4489 = vld [vmem:[%s10 + $0xc] sm:$0xf]
        %v4490 = vpack.c.bf16 %v4472, %v4470
        %v4491 = vpack.c.bf16 %v4473, %v4471
        %v4492 = vpack.c.bf16 %v4476, %v4474
        %v4493 = vpack.c.bf16 %v4477, %v4475
        %v4494 = vpack.c.bf16 %v4480, %v4478
        %v4495 = vpack.c.bf16 %v4481, %v4479
        %v4496 = vpack.c.bf16 %v4484, %v4482
        %v4497 = vpack.c.bf16 %v4485, %v4483
        %v4502 = vunpack.c.l.b16 %v4486
        %v4503 = vunpack.c.l.b16 %v4487
        %v4504 = vunpack.c.l.b16 %v4488
        %v4505 = vunpack.c.l.b16 %v4489
        %v4506 = vpack.c.b16 %v4503, %v4502
        %v4507 = vpack.c.b16 %v4505, %v4504
        %vm4508 = vcmask 523264
        %v4510 = vsel %vm4508, %v4506, 0
        %v4513 = vsel %vm4508, %v4507, 0
        %4515 = vmatpush.bf16.msra.mxu0 0
        %4516 = vmatpush.bf16.msra.mxu0 0
        %4517 = vmatpush.bf16.msra.mxu0 0
        %4518 = vmatpush.bf16.msra.mxu0 0
        %4519 = vmatpush.bf16.msra.mxu0 %v4496
        %4520 = vmatpush.bf16.msra.mxu0 %v4494
        %4521 = vmatpush.bf16.msra.mxu0 %v4492
        %4522 = vmatpush.bf16.msra.mxu0 %v4490
        %4523 = vmatmul.bf16.gmra.mxu0 %v4510
        %v4524 = vpop.f32.mrf.mxu0
        %v4525 = vadd.f32 0.0, %v4524
        %v4526 = vpop.f32.mrf.mxu0
        %v4527 = vadd.f32 0.0, %v4526
        %4528 = vmatmul.bf16.gmra.mxu0 %v4513
        %v4529 = vpop.f32.mrf.mxu0
        %v4530 = vadd.f32 0.0, %v4529
        %v4531 = vpop.f32.mrf.mxu0
        %v4532 = vadd.f32 0.0, %v4531
        %4533 = vdwg.mxu0
        %4534 = vmatpush.bf16.msra.mxu0 0
        %4535 = vmatpush.bf16.msra.mxu0 0
        %4536 = vmatpush.bf16.msra.mxu0 0
        %4537 = vmatpush.bf16.msra.mxu0 0
        %4538 = vmatpush.bf16.msra.mxu0 %v4497
        %4539 = vmatpush.bf16.msra.mxu0 %v4495
        %4540 = vmatpush.bf16.msra.mxu0 %v4493
        %4541 = vmatpush.bf16.msra.mxu0 %v4491
        %4542 = vmatmul.bf16.gmra.mxu0 %v4510
        %v4543 = vpop.f32.mrf.mxu0
        %v4544 = vadd.f32 0.0, %v4543
        %v4545 = vpop.f32.mrf.mxu0
        %v4546 = vadd.f32 0.0, %v4545
        %4547 = vmatmul.bf16.gmra.mxu0 %v4513
        %v4548 = vpop.f32.mrf.mxu0
        %v4549 = vadd.f32 0.0, %v4548
        %v4550 = vpop.f32.mrf.mxu0
        %v4551 = vadd.f32 0.0, %v4550
        %4552 = vdwg.mxu0
        %v4553 = vld [vmem:[%s11] sm:$0xff]
        %v4554 = vld [vmem:[%s11 + $0x8] sm:$0xff]
        %v4555 = vld [vmem:[%s11 + $0x10] sm:$0xff]
        %v4556 = vld [vmem:[%s11 + $0x18] sm:$0xff]
        %v4557 = vld [vmem:[%s12] sm:$0xff]
        %v4558 = vld [vmem:[%s12 + $0x8] sm:$0xff]
        %v4559 = vld [vmem:[%s12 + $0x10] sm:$0xff]
        %v4560 = vld [vmem:[%s12 + $0x18] sm:$0xff]
        %v4561 = vadd.f32 %v4525, %v4527
        %v4562 = vadd.f32 %v4561, %v4530
        %v4563 = vadd.f32 %v4562, %v4532
        %v4564 = vrot.slane %v4563, 4
        %v4565 = vadd.f32 %v4563, %v4564
        %v4566 = vrot.slane %v4565, 2
        %v4567 = vadd.f32 %v4565, %v4566
        %v4568 = vrot.slane %v4567, 1
        %v4569 = vadd.f32 %v4567, %v4568
        %v4570 = vadd.f32 %v4544, %v4546
        %v4571 = vadd.f32 %v4570, %v4549
        %v4572 = vadd.f32 %v4571, %v4551
        %v4573 = vrot.slane %v4572, 4
        %v4574 = vadd.f32 %v4572, %v4573
        %v4575 = vrot.slane %v4574, 2
        %v4576 = vadd.f32 %v4574, %v4575
        %v4577 = vrot.slane %v4576, 1
        %v4578 = vadd.f32 %v4576, %v4577
        %v4579 = vmul.f32 %v4569, %v4193
        %v4580 = vmul.f32 %v4578, %v4193
        %v4581 = vsub.f32 %v4525, %v4579
        %v4582 = vsub.f32 %v4544, %v4580
        %v4583 = vsub.f32 %v4527, %v4579
        %v4584 = vsub.f32 %v4546, %v4580
        %v4585 = vsub.f32 %v4530, %v4579
        %v4586 = vsub.f32 %v4549, %v4580
        %v4587 = vsub.f32 %v4532, %v4579
        %v4588 = vsub.f32 %v4551, %v4580
        %v4589 = vmul.f32 %v4581, %v4581
        %v4590 = vmul.f32 %v4582, %v4582
        %v4591 = vmul.f32 %v4583, %v4583
        %v4592 = vmul.f32 %v4584, %v4584
        %v4593 = vmul.f32 %v4585, %v4585
        %v4594 = vmul.f32 %v4586, %v4586
        %v4595 = vmul.f32 %v4587, %v4587
        %v4596 = vmul.f32 %v4588, %v4588
        %v4597 = vadd.f32 %v4589, %v4591
        %v4598 = vadd.f32 %v4597, %v4593
        %v4599 = vadd.f32 %v4598, %v4595
        %v4600 = vrot.slane %v4599, 4
        %v4601 = vadd.f32 %v4599, %v4600
        %v4602 = vrot.slane %v4601, 2
        %v4603 = vadd.f32 %v4601, %v4602
        %v4604 = vrot.slane %v4603, 1
        %v4605 = vadd.f32 %v4603, %v4604
        %v4606 = vadd.f32 %v4590, %v4592
        %v4607 = vadd.f32 %v4606, %v4594
        %v4608 = vadd.f32 %v4607, %v4596
        %v4609 = vrot.slane %v4608, 4
        %v4610 = vadd.f32 %v4608, %v4609
        %v4611 = vrot.slane %v4610, 2
        %v4612 = vadd.f32 %v4610, %v4611
        %v4613 = vrot.slane %v4612, 1
        %v4614 = vadd.f32 %v4612, %v4613
        %v4615 = vmul.f32 %v4605, 0.032258064
        %v4616 = vmul.f32 %v4614, 0.032258064
        %v4617 = vrsqrt.pop %v4615
        %v4618 = vmul.f32 %v4617, %v4615
        %v4619 = vmul.f32 %v4618, %v4617
        %v4620 = vmul.f32 0.5, %v4619
        %v4621 = vsub.f32 1.5, %v4620
        %v4622 = vmul.f32 %v4617, %v4621
        %v4623 = vmul.f32 %v4615, %v4622
        %vm4624 = vcmp.eq.f32.partialorder %v4615, inf
        %v4625 = vsel %vm4624, %v4615, %v4623
        %vm4626 = vcmp.eq.f32.partialorder %v4615, 0.0
        %v4627 = vand.u32 %v4615, 2147483648
        %v4628 = vsel %vm4626, %v4627, %v4625
        %v4629 = vrsqrt.pop %v4616
        %v4630 = vmul.f32 %v4629, %v4616
        %v4631 = vmul.f32 %v4630, %v4629
        %v4632 = vmul.f32 0.5, %v4631
        %v4633 = vsub.f32 1.5, %v4632
        %v4634 = vmul.f32 %v4629, %v4633
        %v4635 = vmul.f32 %v4616, %v4634
        %vm4636 = vcmp.eq.f32.partialorder %v4616, inf
        %v4637 = vsel %vm4636, %v4616, %v4635
        %vm4638 = vcmp.eq.f32.partialorder %v4616, 0.0
        %v4639 = vand.u32 %v4616, 2147483648
        %v4640 = vsel %vm4638, %v4639, %v4637
        %v4641 = vadd.f32 %v4628, 1e-06
        %v4642 = vadd.f32 %v4640, 1e-06
        %v4643 = vrcp.pop %v4641
        %v4644 = vmul.f32 %v4641, %v4643
        %v4645 = vsub.f32 1.0, %v4644
        %v4646 = vmul.f32 %v4643, %v4645
        %v4647 = vadd.f32 %v4643, %v4646
        %vm4648 = vweird.f32 %v4641
        %vm4649 = vweird.f32 %v4643
        %vm4650 = vmor %vm4648, %vm4649
        %v4651 = vsel %vm4650, %v4643, %v4647
        %v4652 = vand.u32 2147483647, %v4641
        %vm4653 = vcmp.eq.f32.partialorder %v4652, 8.507059e+37
        %v4654 = vand.u32 %v4641, 2147483648
        %v4655 = vor.u32 1.1754944e-38, %v4654
        %v4656 = vsel %vm4653, %v4655, %v4651
        %v4657 = vmul.f32 1.0, %v4656
        %v4658 = vrcp.pop %v4642
        %v4659 = vmul.f32 %v4642, %v4658
        %v4660 = vsub.f32 1.0, %v4659
        %v4661 = vmul.f32 %v4658, %v4660
        %v4662 = vadd.f32 %v4658, %v4661
        %vm4663 = vweird.f32 %v4642
        %vm4664 = vweird.f32 %v4658
        %vm4665 = vmor %vm4663, %vm4664
        %v4666 = vsel %vm4665, %v4658, %v4662
        %v4667 = vand.u32 2147483647, %v4642
        %vm4668 = vcmp.eq.f32.partialorder %v4667, 8.507059e+37
        %v4669 = vand.u32 %v4642, 2147483648
        %v4670 = vor.u32 1.1754944e-38, %v4669
        %v4671 = vsel %vm4668, %v4670, %v4666
        %v4672 = vmul.f32 1.0, %v4671
        %v4673 = vmul.f32 %v4581, %v4657
        %v4674 = vmul.f32 %v4582, %v4672
        %v4675 = vmul.f32 %v4583, %v4657
        %v4676 = vmul.f32 %v4584, %v4672
        %v4677 = vmul.f32 %v4585, %v4657
        %v4678 = vmul.f32 %v4586, %v4672
        %v4679 = vmul.f32 %v4587, %v4657
        %v4680 = vmul.f32 %v4588, %v4672
        %4682 = vset.pattern.permute.xlu0 0
        %4683 = vperm.xlu0 %4682, %v4553
        %v4684 = vpop.permute.xlu0 %4683
        %4687 = vset.pattern.permute.xlu0 0
        %4688 = vperm.xlu0 %4687, %v4554
        %v4689 = vpop.permute.xlu0 %4688
        %4692 = vset.pattern.permute.xlu0 0
        %4693 = vperm.xlu0 %4692, %v4555
        %v4694 = vpop.permute.xlu0 %4693
        %4697 = vset.pattern.permute.xlu0 0
        %4698 = vperm.xlu0 %4697, %v4556
        %v4699 = vpop.permute.xlu0 %4698
        %v4701 = vmul.f32 %v4684, %v4673
        %v4702 = vmul.f32 %v4684, %v4674
        %v4703 = vmul.f32 %v4689, %v4675
        %v4704 = vmul.f32 %v4689, %v4676
        %v4705 = vmul.f32 %v4694, %v4677
        %v4706 = vmul.f32 %v4694, %v4678
        %v4707 = vmul.f32 %v4699, %v4679
        %v4708 = vmul.f32 %v4699, %v4680
        %4710 = vset.pattern.permute.xlu0 0
        %4711 = vperm.xlu0 %4710, %v4557
        %v4712 = vpop.permute.xlu0 %4711
        %4715 = vset.pattern.permute.xlu0 0
        %4716 = vperm.xlu0 %4715, %v4558
        %v4717 = vpop.permute.xlu0 %4716
        %4720 = vset.pattern.permute.xlu0 0
        %4721 = vperm.xlu0 %4720, %v4559
        %v4722 = vpop.permute.xlu0 %4721
        %4725 = vset.pattern.permute.xlu0 0
        %4726 = vperm.xlu0 %4725, %v4560
        %v4727 = vpop.permute.xlu0 %4726
        %v4729 = vadd.f32 %v4701, %v4712
        %v4730 = vadd.f32 %v4702, %v4712
        %v4731 = vadd.f32 %v4703, %v4717
        %v4732 = vadd.f32 %v4704, %v4717
        %v4733 = vadd.f32 %v4705, %v4722
        %v4734 = vadd.f32 %v4706, %v4722
        %v4735 = vadd.f32 %v4707, %v4727
        %v4736 = vadd.f32 %v4708, %v4727
        %v4737 = vunpack.c.l.bf16 %v846
        %v4738 = vunpack.c.h.bf16 %v846
        %v4739 = vunpack.c.l.bf16 %v847
        %v4740 = vunpack.c.h.bf16 %v847
        %v4741 = vunpack.c.l.bf16 %v848
        %v4742 = vunpack.c.h.bf16 %v848
        %v4743 = vunpack.c.l.bf16 %v849
        %v4744 = vunpack.c.h.bf16 %v849
        %v4745 = vadd.f32 %v4737, %v4729
        %v4746 = vadd.f32 %v4738, %v4730
        %v4747 = vadd.f32 %v4739, %v4731
        %v4748 = vadd.f32 %v4740, %v4732
        %v4749 = vadd.f32 %v4741, %v4733
        %v4750 = vadd.f32 %v4742, %v4734
        %v4751 = vadd.f32 %v4743, %v4735
        %v4752 = vadd.f32 %v4744, %v4736
        %4753 = vst [vmem:[%s535] sm:$0xff] %v4745
        %4754 = vst [vmem:[%s535 + $0x8] sm:$0xff] %v4746
        %4755 = vst [vmem:[%s535 + $0x10] sm:$0xff] %v4747
        %4756 = vst [vmem:[%s535 + $0x18] sm:$0xff] %v4748
        %4757 = vst [vmem:[%s535 + $0x20] sm:$0xff] %v4749
        %4758 = vst [vmem:[%s535 + $0x28] sm:$0xff] %v4750
        %4759 = vst [vmem:[%s535 + $0x30] sm:$0xff] %v4751
        %4760 = vst [vmem:[%s535 + $0x38] sm:$0xff] %v4752
        %s4761 = sand.u32 %s345, 1
        %s4762 = scalar_lea.sflag [#allocation6], %s4761
        %s4763 = sand.u32 %s345, 1
        %s4764 = smul.addr %s4763, 64
        %s4765 = scalar_lea.vmem [#allocation9], %s4764
        // Predicated region
        $region85: #{tpu_custom_call.1} parent=71 // pred_check
          %p4766 = pneg %p355
        $region86: #{tpu_custom_call.1} parent=71 // pred_check_branch
          %4768 = sbr.rel (%p4766) target = $region88
        $region87: #{tpu_custom_call.1} parent=71 // pred_region
          %s4769 = smul.u32 2, %s38
          %4771 = vsyncadd %s4762, 0
          %s4772 = smul.addr %s37, 16
          %s4773 = sadd.s32 %s4769, %s4772
          %s4774 = smul.addr %s4773, 8
          %s4775 = scalar_lea.hbm %s13, %s4774
          %s4776 = sshll.u32 %s4765, 4
          %s4777 = int_to_ptr.vmem [resolvable:$true] %s4776
          %s4778 = sshll.u32 %s4775, 4
          %s4779 = int_to_ptr.hbm [resolvable:$true] %s4778
          %4784 = dma.vmem_to_hbm [thread:$0]  %s4777, 1024, %s4779, %s4762, 256, 512, 16
        $region88: #{tpu_custom_call.1} parent=71 // pred_fallthru
          _
      $region72: #{tpu_custom_call.1} parent=5 // pred_fallthru
        _
      %p4785 = scmp.le.s32.totalorder 2, %s28
      // Predicated region
      $region89: #{tpu_custom_call.1} parent=5 // pred_check
        %p4786 = pneg %p4785
      $region90: #{tpu_custom_call.1} parent=5 // pred_check_branch
        %4788 = sbr.rel (%p4786) target = $region92
      $region91: #{tpu_custom_call.1} parent=5 // pred_region
        %s4789 = ssub.s32 %s28, 2
        // Predicated region
        $region93: #{tpu_custom_call.1} parent=91 // pred_check
          %p4790 = pneg %p361
        $region94: #{tpu_custom_call.1} parent=91 // pred_check_branch
          %4792 = sbr.rel (%p4790) target = $region96
        $region95: #{tpu_custom_call.1} parent=91 // pred_region
          %s4793 = sand.u32 %s346, 1
          %s4794 = scalar_lea.sflag [#allocation6], %s4793
          %s4795 = sand.u32 %s346, 1
          %s4796 = smul.addr %s4795, 64
          %s4797 = scalar_lea.vmem [#allocation9], %s4796
          %4799 = dma.done %s4794, 1024
        $region96: #{tpu_custom_call.1} parent=91 // pred_fallthru
          _
      $region92: #{tpu_custom_call.1} parent=5 // pred_fallthru
        _
    $region6: #{tpu_custom_call.1} parent=1 // loop_footer
      %s32 = sadd.s32 1, %s28
    $region7: #{tpu_custom_call.1} parent=1 // loop_footer_branch
      %27 = sbr.rel target = $region3
    $region8: #{tpu_custom_call.1} parent=1 // loop_exit
      _
    %4800 = vsyncpa [#allocation5], 1
    %s4801 = scalar_lea.sflag [#allocation5], 1
    %4802 = vsyncpa %s4801, 1
    %4803 = vsyncpa [#allocation8], 1
    %s4804 = scalar_lea.sflag [#allocation8], 1
    %4805 = vsyncpa %s4804, 1
    %4806 = vsyncpa [#allocation6], 1
    %s4807 = scalar_lea.sflag [#allocation6], 1
    %4808 = vsyncpa %s4807, 1

</llo_original>
